<compile_context>
chip_gen: v7x
topology: tpu7x:2x2x1
jax: 0.10.0
libtpu: 0.0.40
codegen_flags: <defaults>
</compile_context>

<pallas_src>
from functools import partial

import jax
import jax.numpy as jnp
from jax.experimental import pallas as pl
from jax.experimental.pallas import tpu as pltpu


def mha_kernel(xq_ref, xkv_ref, wq_ref, wkv_ref,
               cos_q_ref, sin_q_ref, cos_k_ref, sin_k_ref,
               wp_ref, bp_ref, o_ref,
               qrot_ref, m_ref, l_ref, acc_ref,
               *, num_heads, head_size, tile):
    H, hs = num_heads, head_size
    hs2 = hs // 2
    Hh = H * hs
    Hh2 = H * hs2

    q_idx = pl.program_id(1)
    k_idx = pl.program_id(2)
    n_kv = pl.num_programs(2)

    # ---- once per (batch, query tile): Q projection + slab-wide RoPE + init ---
    @pl.when(k_idx == 0)
    def _init():
        q = jnp.dot(xq_ref[0], wq_ref[...],                 # (tile, Hh) f32
                    preferred_element_type=jnp.float32)
        cos, sin = cos_q_ref[...], sin_q_ref[...]           # (tile, Hh2) f32
        q_r, q_i = q[:, :Hh2], q[:, Hh2:]
        # RoPE as two full-width VPU expressions; stored bf16 (feeds the MXU).
        qrot_ref[:, :Hh2] = (q_r * cos - q_i * sin).astype(qrot_ref.dtype)
        qrot_ref[:, Hh2:] = (q_r * sin + q_i * cos).astype(qrot_ref.dtype)
        m_ref[...] = jnp.full(m_ref.shape, -jnp.inf, dtype=m_ref.dtype)
        l_ref[...] = jnp.zeros(l_ref.shape, dtype=l_ref.dtype)
        acc_ref[...] = jnp.zeros(acc_ref.shape, dtype=acc_ref.dtype)

    # ---- one KV tile (skipped entirely above the causal diagonal) -------------
    @pl.when(k_idx <= q_idx)
    def _process():
        kv = jnp.dot(xkv_ref[0], wkv_ref[...],              # (tile, 2*Hh) f32
                     preferred_element_type=jnp.float32)
        cos, sin = cos_k_ref[...], sin_k_ref[...]
        k_r, k_i = kv[:, :Hh2], kv[:, Hh2:Hh]
        v = kv[:, Hh:].astype(jnp.bfloat16)                 # (tile, Hh) orig order
        k_rot_r = (k_r * cos - k_i * sin).astype(jnp.bfloat16)
        k_rot_i = (k_r * sin + k_i * cos).astype(jnp.bfloat16)

        row = q_idx * tile + jax.lax.broadcasted_iota(jnp.int32, (tile, tile), 0)
        col = k_idx * tile + jax.lax.broadcasted_iota(jnp.int32, (tile, tile), 1)
        causal = col <= row

        contract = (((1,), (1,)), ((), ()))
        for h in range(H):                                  # static unroll, H small
            lo, hi = h * hs2, (h + 1) * hs2
            # softmax scale hs**-0.5 already folded into Wq host-side
            s = jax.lax.dot_general(qrot_ref[:, lo:hi], k_rot_r[:, lo:hi],
                                    contract, preferred_element_type=jnp.float32)
            s += jax.lax.dot_general(qrot_ref[:, Hh2 + lo:Hh2 + hi],
                                     k_rot_i[:, lo:hi],
                                     contract, preferred_element_type=jnp.float32)
            s = jnp.where(causal, s, -jnp.inf)

            m_prev, l_prev = m_ref[h], l_ref[h]             # (tile, 1) f32
            m_new = jnp.maximum(m_prev, jnp.max(s, axis=-1, keepdims=True))
            alpha = jnp.exp(m_prev - m_new)
            p = jnp.exp(s - m_new)                          # f32 (v5e-safe)
            l_ref[h] = alpha * l_prev + jnp.sum(p, axis=-1, keepdims=True)
            m_ref[h] = m_new

            pv = jnp.dot(p.astype(jnp.bfloat16), v[:, h * hs:(h + 1) * hs],
                         preferred_element_type=jnp.float32)
            acc_ref[:, h * hs:(h + 1) * hs] = (
                alpha * acc_ref[:, h * hs:(h + 1) * hs] + pv)

    # ---- once per (batch, query tile): normalize + fused output projection ----
    @pl.when(k_idx == n_kv - 1)
    def _finalize():
        for h in range(H):
            inv_l = pl.reciprocal(l_ref[h], approx=True)    # EUP slot
            # reuse the bf16 q_rot scratch as the normalized head-output slab
            qrot_ref[:, h * hs:(h + 1) * hs] = (
                acc_ref[:, h * hs:(h + 1) * hs] * inv_l).astype(qrot_ref.dtype)
        out = jnp.dot(qrot_ref[...], wp_ref[...],
                      preferred_element_type=jnp.float32)   # (tile, E) f32
        o_ref[0] = (out + bp_ref[...]).astype(o_ref.dtype)


def _pick_tile(T, target):
    if T <= target:
        return T
    for t in range(target, 7, -1):
        if T % t == 0 and t % 8 == 0:
            return t
    return T


def multi_head_attention(x, Wq, Wk, Wv, cos, sin, Wp, bp, *, seq_tile=256):
    """x: (B,T,E); Wq/Wk/Wv: (H,hs,E) (per-head nn.Linear weights); Wp: (E,H*hs); bp: (E,)."""
    B, T, E = x.shape
    H, hs, _ = Wq.shape
    assert hs % 2 == 0, "rotary embedding needs an even head size"
    hs2 = hs // 2
    Hh, Hh2 = H * hs, H * hs2
    scale = hs ** -0.5

    tile = _pick_tile(T, seq_tile)
    n_seq = T // tile
    assert n_seq * tile == T

    # ---- host-side weight prep (permutes only Q/K internals; q.k^T invariant) --
    def rope_slab(W):   # (H, hs, E) -> (E, H*hs), cols = [all-heads real | all-heads imag]
        real = W[:, 0::2, :].reshape(Hh2, E)
        imag = W[:, 1::2, :].reshape(Hh2, E)
        return jnp.concatenate([real, imag], axis=0).T

    wq = (rope_slab(Wq) * scale).astype(jnp.bfloat16)        # fold scale into Wq
    wkv = jnp.concatenate([rope_slab(Wk), Wv.reshape(Hh, E).T],
                          axis=1).astype(jnp.bfloat16)       # (E, 2*H*hs)
    wp = Wp.T.astype(jnp.bfloat16)                           # (H*hs, E) contraction-major
    bias = bp.reshape(1, E).astype(jnp.float32)
    cos_t = jnp.tile(cos.astype(jnp.float32), (1, H))        # (T, H*hs/2)
    sin_t = jnp.tile(sin.astype(jnp.float32), (1, H))
    x_bf = x.astype(jnp.bfloat16)

    kernel = partial(mha_kernel, num_heads=H, head_size=hs, tile=tile)

    # ---- explicit VMEM budget (conservative: assume double-buffered weights) --
    bf16_b, f32_b = 2, 4
    vmem_est = (
        4 * tile * E * bf16_b                                   # x_q + x_kv blocks
        + 2 * (E * Hh + E * 2 * Hh + Hh * E) * bf16_b + 2 * E * f32_b   # weights + bias
        + 8 * tile * Hh2 * f32_b                                # cos/sin (q and kv rows)
        + 2 * tile * E * bf16_b                                 # output block
        + tile * Hh * (bf16_b + f32_b)                          # q_rot + acc scratch
        + 2 * H * tile * 128 * f32_b                            # m/l scratch (lane pad)
        + 6 * tile * max(tile, 2 * Hh) * f32_b                  # in-flight intermediates
    )
    vmem_limit = int(min(max(2 * vmem_est, 32 << 20), 64 << 20))  # stay inside v7x 64 MiB

    flops = (2 * B * T * E * Hh                    # Q projection
             + 2 * B * n_seq * T * E * 2 * Hh      # K/V projection (recomputed per q tile)
             + 4 * B * H * T * T * hs              # QK^T + PV (causal upper bound)
             + 2 * B * T * Hh * E)                 # output projection
    cost = pl.CostEstimate(
        flops=int(flops),
        transcendentals=int(B * H * T * T),
        bytes_accessed=int(B * T * E * bf16_b * (2 + n_seq)
                           + (3 * E * Hh + Hh * E) * bf16_b + 2 * T * Hh2 * f32_b))

    out_shape = jax.ShapeDtypeStruct((B, T, E), jnp.bfloat16)
    out_spec = pl.BlockSpec((1, tile, E), lambda b, q, k: (b, q, 0))
    scratch = [pltpu.VMEM((tile, Hh), jnp.bfloat16),    # q_rot / normalized head slab
               pltpu.VMEM((H, tile, 1), jnp.float32),   # running max
               pltpu.VMEM((H, tile, 1), jnp.float32),   # running sum
               pltpu.VMEM((tile, Hh), jnp.float32)]     # output accumulator

    def build_specs(single_buffer_consts):
        def const_spec(shape):
            kwargs = {}
            if single_buffer_consts and hasattr(pl, "Buffered"):
                kwargs["pipeline_mode"] = pl.Buffered(1)   # constant index -> 1 buffer
            return pl.BlockSpec(shape, lambda b, q, k: (0, 0), **kwargs)
        return [
            pl.BlockSpec((1, tile, E), lambda b, q, k: (b, q, 0)),   # x (query rows)
            pl.BlockSpec((1, tile, E), lambda b, q, k: (b, k, 0)),   # x (key/value rows)
            const_spec((E, Hh)),                                     # Wq slab
            const_spec((E, 2 * Hh)),                                 # [Wk | Wv] slab
            pl.BlockSpec((tile, Hh2), lambda b, q, k: (q, 0)),       # cos (query rows)
            pl.BlockSpec((tile, Hh2), lambda b, q, k: (q, 0)),       # sin (query rows)
            pl.BlockSpec((tile, Hh2), lambda b, q, k: (k, 0)),       # cos (kv rows)
            pl.BlockSpec((tile, Hh2), lambda b, q, k: (k, 0)),       # sin (kv rows)
            const_spec((Hh, E)),                                     # Wp^T
            const_spec((1, E)),                                      # bias
        ]

    def run(single_buffer_consts):
        return pl.pallas_call(
            kernel,
            out_shape=out_shape,
            grid_spec=pltpu.PrefetchScalarGridSpec(
                num_scalar_prefetch=0,
                grid=(B, n_seq, n_seq),
                in_specs=build_specs(single_buffer_consts),
                out_specs=out_spec,
                scratch_shapes=scratch,
            ),
            compiler_params=pltpu.CompilerParams(
                dimension_semantics=("parallel", "parallel", "arbitrary"),
                vmem_limit_bytes=vmem_limit),
            cost_estimate=cost,
        )(x_bf, x_bf, wq, wkv, cos_t, sin_t, cos_t, sin_t, wp, bias)

    try:
        return run(True)
    except Exception:
        # pl.Buffered(1) unsupported on this jax/libtpu -> default double-buffering.
        return run(False)


def reference_mha(x, Wq, Wk, Wv, cos, sin, Wp, bp):
    """Pure-JAX f32 reference mirroring the PyTorch module semantics (eval mode)."""
    B, T, E = x.shape
    H, hs, _ = Wq.shape
    q = jnp.einsum('bte,hse->bhts', x, Wq)
    k = jnp.einsum('bte,hse->bhts', x, Wk)
    v = jnp.einsum('bte,hse->bhts', x, Wv)

    def rope(t):
        t2 = t.reshape(*t.shape[:-1], hs // 2, 2)
        tr, ti = t2[..., 0], t2[..., 1]
        rr = tr * cos - ti * sin
        ri = tr * sin + ti * cos
        return jnp.stack([rr, ri], axis=-1).reshape(*t.shape)

    q = rope(q)
    k = rope(k)
    scores = jnp.einsum('bhts,bhus->bhtu', q, k) * (hs ** -0.5)
    mask = jnp.tril(jnp.ones((T, T), dtype=bool))
    scores = jnp.where(mask, scores, -jnp.inf)
    p = jax.nn.softmax(scores, axis=-1)
    head_out = jnp.einsum('bhtu,bhus->bhts', p, v)
    concat = head_out.transpose(0, 2, 1, 3).reshape(B, T, H * hs)
    return concat @ Wp.T + bp


def _make_inputs(key, B, T, E, H, hs):
    kx, kq, kk, kv, kp, kb = jax.random.split(key, 6)
    x = jax.random.normal(kx, (B, T, E), dtype=jnp.float32)
    Wq = jax.random.normal(kq, (H, hs, E), dtype=jnp.float32) * 0.1
    Wk = jax.random.normal(kk, (H, hs, E), dtype=jnp.float32) * 0.1
    Wv = jax.random.normal(kv, (H, hs, E), dtype=jnp.float32) * 0.1
    Wp = jax.random.normal(kp, (E, H * hs), dtype=jnp.float32) * 0.1
    bp = jax.random.normal(kb, (E,), dtype=jnp.float32) * 0.1
    # Standard RoPE precomputation (cos/sin form of freqs_cis).
    theta = 10000.0
    freqs = 1.0 / (theta ** (jnp.arange(0, hs, 2, dtype=jnp.float32) / hs))
    angles = jnp.outer(jnp.arange(T, dtype=jnp.float32), freqs)        # (T, hs//2)
    return x, Wq, Wk, Wv, jnp.cos(angles), jnp.sin(angles), Wp, bp


if __name__ == "__main__":
    # Small shapes consistent with the module: batch=2, context=8, emb=32, 4 heads of 8.
    args = _make_inputs(jax.random.PRNGKey(0), B=2, T=8, E=32, H=4, hs=8)
    out = jax.block_until_ready(multi_head_attention(*args))
    ref = reference_mha(*args)
    assert out.shape == ref.shape and out.dtype == jnp.bfloat16
    assert jnp.allclose(out.astype(jnp.float32), ref, atol=4e-2, rtol=4e-2), (
        f"max abs diff {jnp.max(jnp.abs(out.astype(jnp.float32) - ref))}")

    # Longer sequence exercising the flash tiling: grid=(2,4,4), online softmax
    # across KV tiles, causal tile skipping.
    args2 = _make_inputs(jax.random.PRNGKey(0), B=2, T=64, E=32, H=4, hs=8)
    out2 = jax.block_until_ready(multi_head_attention(*args2, seq_tile=16))
    ref2 = reference_mha(*args2)
    assert jnp.allclose(out2.astype(jnp.float32), ref2, atol=4e-2, rtol=4e-2), (
        f"max abs diff {jnp.max(jnp.abs(out2.astype(jnp.float32) - ref2))}")

    print("KERNEL_OK")
</pallas_src>

<mosaic_0001>
module attributes {stable_mosaic.version = 11 : i64} {
  func.func @mha_kernel(%arg0: i32, %arg1: i32, %arg2: i32, %arg3: memref<1x8x32xbf16, #tpu.memory_space<vmem>>, %arg4: memref<1x8x32xbf16, #tpu.memory_space<vmem>>, %arg5: memref<32x32xbf16, #tpu.memory_space<vmem>>, %arg6: memref<32x64xbf16, #tpu.memory_space<vmem>>, %arg7: memref<8x16xf32, #tpu.memory_space<vmem>>, %arg8: memref<8x16xf32, #tpu.memory_space<vmem>>, %arg9: memref<8x16xf32, #tpu.memory_space<vmem>>, %arg10: memref<8x16xf32, #tpu.memory_space<vmem>>, %arg11: memref<32x32xbf16, #tpu.memory_space<vmem>>, %arg12: memref<1x32xf32, #tpu.memory_space<vmem>>, %arg13: memref<1x8x32xbf16, #tpu.memory_space<vmem>>, %arg14: memref<8x32xbf16, #tpu.memory_space<vmem>>, %arg15: memref<4x8x1xf32, #tpu.memory_space<vmem>>, %arg16: memref<4x8x1xf32, #tpu.memory_space<vmem>>, %arg17: memref<8x32xf32, #tpu.memory_space<vmem>>) attributes {dimension_semantics = [#tpu.dimension_semantics<parallel>, #tpu.dimension_semantics<parallel>, #tpu.dimension_semantics<arbitrary>], iteration_bounds = array<i64: 2, 1, 1>, scalar_prefetch = 0 : i64, scratch_operands = 4 : i64, tpu.core_type = #tpu.core_type<tc>, window_params = [{transform_indices = @transform_0, window_bounds = array<i64: 1, 8, 32>}, {transform_indices = @transform_1, window_bounds = array<i64: 1, 8, 32>}, {pipeline_mode = #tpu.pipeline_mode<synchronous>, transform_indices = @transform_2, window_bounds = array<i64: 32, 32>}, {pipeline_mode = #tpu.pipeline_mode<synchronous>, transform_indices = @transform_3, window_bounds = array<i64: 32, 64>}, {transform_indices = @transform_4, window_bounds = array<i64: 8, 16>}, {transform_indices = @transform_5, window_bounds = array<i64: 8, 16>}, {transform_indices = @transform_6, window_bounds = array<i64: 8, 16>}, {transform_indices = @transform_7, window_bounds = array<i64: 8, 16>}, {pipeline_mode = #tpu.pipeline_mode<synchronous>, transform_indices = @transform_8, window_bounds = array<i64: 32, 32>}, {pipeline_mode = #tpu.pipeline_mode<synchronous>, transform_indices = @transform_9, window_bounds = array<i64: 1, 32>}, {transform_indices = @transform_10, window_bounds = array<i64: 1, 8, 32>}]} {
    %c0_i32 = arith.constant 0 : i32
    %0 = arith.cmpi eq, %arg2, %c0_i32 : i32
    %1 = arith.extui %0 : i1 to i32
    %c0_i32_0 = arith.constant 0 : i32
    %2 = arith.cmpi ne, %1, %c0_i32_0 : i32
    scf.if %2 {
      %c0 = arith.constant 0 : index
      %c0_4 = arith.constant 0 : index
      %c0_5 = arith.constant 0 : index
      %9 = vector.load %arg3[%c0, %c0_4, %c0_5] : memref<1x8x32xbf16, #tpu.memory_space<vmem>>, vector<1x8x32xbf16>
      %10 = vector.shape_cast %9 : vector<1x8x32xbf16> to vector<8x32xbf16>
      %c0_6 = arith.constant 0 : index
      %c0_7 = arith.constant 0 : index
      %11 = vector.load %arg5[%c0_6, %c0_7] : memref<32x32xbf16, #tpu.memory_space<vmem>>, vector<32x32xbf16>
      %cst = arith.constant dense<0.000000e+00> : vector<8x32xf32>
      %12 = tpu.matmul %10, %11, %cst {dimension_numbers = #tpu.dot_dimension_numbers<[1], [0], [0], [1], [0, 0, 1, 1], [], []>} : vector<8x32xbf16>, vector<32x32xbf16>, vector<8x32xf32> -> vector<8x32xf32>
      %c0_8 = arith.constant 0 : index
      %c0_9 = arith.constant 0 : index
      %13 = vector.load %arg7[%c0_8, %c0_9] : memref<8x16xf32, #tpu.memory_space<vmem>>, vector<8x16xf32>
      %c0_10 = arith.constant 0 : index
      %c0_11 = arith.constant 0 : index
      %14 = vector.load %arg8[%c0_10, %c0_11] : memref<8x16xf32, #tpu.memory_space<vmem>>, vector<8x16xf32>
      %15 = vector.extract_strided_slice %12 {offsets = [0, 0], sizes = [8, 16], strides = [1, 1]} : vector<8x32xf32> to vector<8x16xf32>
      %16 = vector.extract_strided_slice %12 {offsets = [0, 16], sizes = [8, 16], strides = [1, 1]} : vector<8x32xf32> to vector<8x16xf32>
      %17 = arith.mulf %15, %13 : vector<8x16xf32>
      %18 = arith.mulf %16, %14 : vector<8x16xf32>
      %19 = arith.subf %17, %18 : vector<8x16xf32>
      %20 = arith.truncf %19 : vector<8x16xf32> to vector<8x16xbf16>
      %c0_12 = arith.constant 0 : index
      %c0_13 = arith.constant 0 : index
      %21 = vector.load %arg14[%c0_12, %c0_13] : memref<8x32xbf16, #tpu.memory_space<vmem>>, vector<8x16xbf16>
      tpu.vector_store %arg14[%c0_12, %c0_13], %20 {strides = array<i32>} : memref<8x32xbf16, #tpu.memory_space<vmem>>, vector<8x16xbf16>,
      %22 = arith.mulf %15, %14 : vector<8x16xf32>
      %23 = arith.mulf %16, %13 : vector<8x16xf32>
      %24 = arith.addf %22, %23 : vector<8x16xf32>
      %25 = arith.truncf %24 : vector<8x16xf32> to vector<8x16xbf16>
      %c0_14 = arith.constant 0 : index
      %c16 = arith.constant 16 : index
      %26 = vector.load %arg14[%c0_14, %c16] : memref<8x32xbf16, #tpu.memory_space<vmem>>, vector<8x16xbf16>
      tpu.vector_store %arg14[%c0_14, %c16], %25 {strides = array<i32>} : memref<8x32xbf16, #tpu.memory_space<vmem>>, vector<8x16xbf16>,
      %cst_15 = arith.constant 0xFF800000 : f32
      %27 = vector.broadcast %cst_15 : f32 to vector<4x8x1xf32>
      %c0_16 = arith.constant 0 : index
      %c0_17 = arith.constant 0 : index
      %c0_18 = arith.constant 0 : index
      %28 = vector.load %arg15[%c0_16, %c0_17, %c0_18] : memref<4x8x1xf32, #tpu.memory_space<vmem>>, vector<4x8x1xf32>
      tpu.vector_store %arg15[%c0_16, %c0_17, %c0_18], %27 {strides = array<i32>} : memref<4x8x1xf32, #tpu.memory_space<vmem>>, vector<4x8x1xf32>,
      %cst_19 = arith.constant 0.000000e+00 : f32
      %29 = vector.broadcast %cst_19 : f32 to vector<4x8x1xf32>
      %c0_20 = arith.constant 0 : index
      %c0_21 = arith.constant 0 : index
      %c0_22 = arith.constant 0 : index
      %30 = vector.load %arg16[%c0_20, %c0_21, %c0_22] : memref<4x8x1xf32, #tpu.memory_space<vmem>>, vector<4x8x1xf32>
      tpu.vector_store %arg16[%c0_20, %c0_21, %c0_22], %29 {strides = array<i32>} : memref<4x8x1xf32, #tpu.memory_space<vmem>>, vector<4x8x1xf32>,
      %cst_23 = arith.constant 0.000000e+00 : f32
      %31 = vector.broadcast %cst_23 : f32 to vector<8x32xf32>
      %c0_24 = arith.constant 0 : index
      %c0_25 = arith.constant 0 : index
      %32 = vector.load %arg17[%c0_24, %c0_25] : memref<8x32xf32, #tpu.memory_space<vmem>>, vector<8x32xf32>
      tpu.vector_store %arg17[%c0_24, %c0_25], %31 {strides = array<i32>} : memref<8x32xf32, #tpu.memory_space<vmem>>, vector<8x32xf32>,
    } else {
    }
    %3 = arith.cmpi sle, %arg2, %arg1 : i32
    %4 = arith.extui %3 : i1 to i32
    %c0_i32_1 = arith.constant 0 : i32
    %5 = arith.cmpi ne, %4, %c0_i32_1 : i32
    scf.if %5 {
      %c0 = arith.constant 0 : index
      %c0_4 = arith.constant 0 : index
      %c0_5 = arith.constant 0 : index
      %9 = vector.load %arg4[%c0, %c0_4, %c0_5] : memref<1x8x32xbf16, #tpu.memory_space<vmem>>, vector<1x8x32xbf16>
      %10 = vector.shape_cast %9 : vector<1x8x32xbf16> to vector<8x32xbf16>
      %c0_6 = arith.constant 0 : index
      %c0_7 = arith.constant 0 : index
      %11 = vector.load %arg6[%c0_6, %c0_7] : memref<32x64xbf16, #tpu.memory_space<vmem>>, vector<32x64xbf16>
      %cst = arith.constant dense<0.000000e+00> : vector<8x64xf32>
      %12 = tpu.matmul %10, %11, %cst {dimension_numbers = #tpu.dot_dimension_numbers<[1], [0], [0], [1], [0, 0, 1, 1], [], []>} : vector<8x32xbf16>, vector<32x64xbf16>, vector<8x64xf32> -> vector<8x64xf32>
      %c0_8 = arith.constant 0 : index
      %c0_9 = arith.constant 0 : index
      %13 = vector.load %arg9[%c0_8, %c0_9] : memref<8x16xf32, #tpu.memory_space<vmem>>, vector<8x16xf32>
      %c0_10 = arith.constant 0 : index
      %c0_11 = arith.constant 0 : index
      %14 = vector.load %arg10[%c0_10, %c0_11] : memref<8x16xf32, #tpu.memory_space<vmem>>, vector<8x16xf32>
      %15 = vector.extract_strided_slice %12 {offsets = [0, 0], sizes = [8, 16], strides = [1, 1]} : vector<8x64xf32> to vector<8x16xf32>
      %16 = vector.extract_strided_slice %12 {offsets = [0, 16], sizes = [8, 16], strides = [1, 1]} : vector<8x64xf32> to vector<8x16xf32>
      %17 = vector.extract_strided_slice %12 {offsets = [0, 32], sizes = [8, 32], strides = [1, 1]} : vector<8x64xf32> to vector<8x32xf32>
      %18 = arith.truncf %17 : vector<8x32xf32> to vector<8x32xbf16>
      %19 = arith.mulf %15, %13 : vector<8x16xf32>
      %20 = arith.mulf %16, %14 : vector<8x16xf32>
      %21 = arith.subf %19, %20 : vector<8x16xf32>
      %22 = arith.truncf %21 : vector<8x16xf32> to vector<8x16xbf16>
      %23 = arith.mulf %15, %14 : vector<8x16xf32>
      %24 = arith.mulf %16, %13 : vector<8x16xf32>
      %25 = arith.addf %23, %24 : vector<8x16xf32>
      %26 = arith.truncf %25 : vector<8x16xf32> to vector<8x16xbf16>
      %c8_i32 = arith.constant 8 : i32
      %27 = arith.muli %arg1, %c8_i32 : i32
      %28 = tpu.iota {dimensions = array<i32: 0>} : vector<8x8xi32>
      %29 = vector.broadcast %27 : i32 to vector<8x8xi32>
      %30 = arith.addi %29, %28 : vector<8x8xi32>
      %c8_i32_12 = arith.constant 8 : i32
      %31 = arith.muli %arg2, %c8_i32_12 : i32
      %32 = tpu.iota {dimensions = array<i32: 1>} : vector<8x8xi32>
      %33 = vector.broadcast %31 : i32 to vector<8x8xi32>
      %34 = arith.addi %33, %32 : vector<8x8xi32>
      %35 = arith.cmpi sle, %34, %30 : vector<8x8xi32>
      %c0_13 = arith.constant 0 : index
      %c0_14 = arith.constant 0 : index
      %36 = vector.load %arg14[%c0_13, %c0_14] : memref<8x32xbf16, #tpu.memory_space<vmem>>, vector<8x4xbf16>
      %37 = vector.extract_strided_slice %22 {offsets = [0, 0], sizes = [8, 4], strides = [1, 1]} : vector<8x16xbf16> to vector<8x4xbf16>
      %cst_15 = arith.constant dense<0.000000e+00> : vector<8x8xf32>
      %38 = tpu.matmul %36, %37, %cst_15 {dimension_numbers = #tpu.dot_dimension_numbers<[1], [1], [0], [0], [0, 0, 1, 0], [], []>} : vector<8x4xbf16>, vector<8x4xbf16>, vector<8x8xf32> -> vector<8x8xf32>
      %c0_16 = arith.constant 0 : index
      %c16 = arith.constant 16 : index
      %39 = vector.load %arg14[%c0_16, %c16] : memref<8x32xbf16, #tpu.memory_space<vmem>>, vector<8x4xbf16>
      %40 = vector.extract_strided_slice %26 {offsets = [0, 0], sizes = [8, 4], strides = [1, 1]} : vector<8x16xbf16> to vector<8x4xbf16>
      %cst_17 = arith.constant dense<0.000000e+00> : vector<8x8xf32>
      %41 = tpu.matmul %39, %40, %cst_17 {dimension_numbers = #tpu.dot_dimension_numbers<[1], [1], [0], [0], [0, 0, 1, 0], [], []>} : vector<8x4xbf16>, vector<8x4xbf16>, vector<8x8xf32> -> vector<8x8xf32>
      %42 = arith.addf %38, %41 : vector<8x8xf32>
      %cst_18 = arith.constant 0xFF800000 : f32
      %43 = vector.broadcast %cst_18 : f32 to vector<8x8xf32>
      %44 = arith.select %35, %42, %43 : vector<8x8xi1>, vector<8x8xf32>
      %c0_19 = arith.constant 0 : index
      %c0_20 = arith.constant 0 : index
      %c0_21 = arith.constant 0 : index
      %45 = vector.load %arg15[%c0_19, %c0_20, %c0_21] : memref<4x8x1xf32, #tpu.memory_space<vmem>>, vector<1x8x1xf32>
      %46 = vector.shape_cast %45 : vector<1x8x1xf32> to vector<8x1xf32>
      %c0_22 = arith.constant 0 : index
      %c0_23 = arith.constant 0 : index
      %c0_24 = arith.constant 0 : index
      %47 = vector.load %arg16[%c0_22, %c0_23, %c0_24] : memref<4x8x1xf32, #tpu.memory_space<vmem>>, vector<1x8x1xf32>
      %48 = vector.shape_cast %47 : vector<1x8x1xf32> to vector<8x1xf32>
      %cst_25 = arith.constant dense<0xFF800000> : vector<8xf32>
      %49 = vector.multi_reduction <maximumf>, %44, %cst_25 [1] : vector<8x8xf32> to vector<8xf32>
      %50 = vector.shape_cast %49 : vector<8xf32> to vector<8x1xf32>
      %51 = arith.maximumf %46, %50 : vector<8x1xf32>
      %52 = arith.subf %46, %51 : vector<8x1xf32>
      %53 = math.exp %52 : vector<8x1xf32>
      %54 = vector.broadcast %51 : vector<8x1xf32> to vector<8x8xf32>
      %55 = arith.subf %44, %54 : vector<8x8xf32>
      %56 = math.exp %55 : vector<8x8xf32>
      %57 = arith.mulf %53, %48 : vector<8x1xf32>
      %cst_26 = arith.constant dense<0.000000e+00> : vector<8xf32>
      %58 = vector.multi_reduction <add>, %56, %cst_26 [1] : vector<8x8xf32> to vector<8xf32>
      %59 = vector.shape_cast %58 : vector<8xf32> to vector<8x1xf32>
      %60 = arith.addf %57, %59 : vector<8x1xf32>
      %c0_27 = arith.constant 0 : index
      %c0_28 = arith.constant 0 : index
      %c0_29 = arith.constant 0 : index
      %61 = vector.load %arg16[%c0_27, %c0_28, %c0_29] : memref<4x8x1xf32, #tpu.memory_space<vmem>>, vector<1x8x1xf32>
      %62 = vector.shape_cast %61 : vector<1x8x1xf32> to vector<8x1xf32>
      %63 = vector.shape_cast %60 : vector<8x1xf32> to vector<1x8x1xf32>
      tpu.vector_store %arg16[%c0_27, %c0_28, %c0_29], %63 {strides = array<i32>} : memref<4x8x1xf32, #tpu.memory_space<vmem>>, vector<1x8x1xf32>,
      %c0_30 = arith.constant 0 : index
      %c0_31 = arith.constant 0 : index
      %c0_32 = arith.constant 0 : index
      %64 = vector.load %arg15[%c0_30, %c0_31, %c0_32] : memref<4x8x1xf32, #tpu.memory_space<vmem>>, vector<1x8x1xf32>
      %65 = vector.shape_cast %64 : vector<1x8x1xf32> to vector<8x1xf32>
      %66 = vector.shape_cast %51 : vector<8x1xf32> to vector<1x8x1xf32>
      tpu.vector_store %arg15[%c0_30, %c0_31, %c0_32], %66 {strides = array<i32>} : memref<4x8x1xf32, #tpu.memory_space<vmem>>, vector<1x8x1xf32>,
      %67 = arith.truncf %56 : vector<8x8xf32> to vector<8x8xbf16>
      %68 = vector.extract_strided_slice %18 {offsets = [0, 0], sizes = [8, 8], strides = [1, 1]} : vector<8x32xbf16> to vector<8x8xbf16>
      %cst_33 = arith.constant dense<0.000000e+00> : vector<8x8xf32>
      %69 = tpu.matmul %67, %68, %cst_33 {dimension_numbers = #tpu.dot_dimension_numbers<[1], [0], [0], [1], [0, 0, 1, 1], [], []>} : vector<8x8xbf16>, vector<8x8xbf16>, vector<8x8xf32> -> vector<8x8xf32>
      %c0_34 = arith.constant 0 : index
      %c0_35 = arith.constant 0 : index
      %70 = vector.load %arg17[%c0_34, %c0_35] : memref<8x32xf32, #tpu.memory_space<vmem>>, vector<8x8xf32>
      %71 = vector.broadcast %53 : vector<8x1xf32> to vector<8x8xf32>
      %72 = arith.mulf %71, %70 : vector<8x8xf32>
      %73 = arith.addf %72, %69 : vector<8x8xf32>
      %c0_36 = arith.constant 0 : index
      %c0_37 = arith.constant 0 : index
      %74 = vector.load %arg17[%c0_36, %c0_37] : memref<8x32xf32, #tpu.memory_space<vmem>>, vector<8x8xf32>
      tpu.vector_store %arg17[%c0_36, %c0_37], %73 {strides = array<i32>} : memref<8x32xf32, #tpu.memory_space<vmem>>, vector<8x8xf32>,
      %c0_38 = arith.constant 0 : index
      %c4 = arith.constant 4 : index
      %75 = vector.load %arg14[%c0_38, %c4] : memref<8x32xbf16, #tpu.memory_space<vmem>>, vector<8x4xbf16>
      %76 = vector.extract_strided_slice %22 {offsets = [0, 4], sizes = [8, 4], strides = [1, 1]} : vector<8x16xbf16> to vector<8x4xbf16>
      %cst_39 = arith.constant dense<0.000000e+00> : vector<8x8xf32>
      %77 = tpu.matmul %75, %76, %cst_39 {dimension_numbers = #tpu.dot_dimension_numbers<[1], [1], [0], [0], [0, 0, 1, 0], [], []>} : vector<8x4xbf16>, vector<8x4xbf16>, vector<8x8xf32> -> vector<8x8xf32>
      %c0_40 = arith.constant 0 : index
      %c20 = arith.constant 20 : index
      %78 = vector.load %arg14[%c0_40, %c20] : memref<8x32xbf16, #tpu.memory_space<vmem>>, vector<8x4xbf16>
      %79 = vector.extract_strided_slice %26 {offsets = [0, 4], sizes = [8, 4], strides = [1, 1]} : vector<8x16xbf16> to vector<8x4xbf16>
      %cst_41 = arith.constant dense<0.000000e+00> : vector<8x8xf32>
      %80 = tpu.matmul %78, %79, %cst_41 {dimension_numbers = #tpu.dot_dimension_numbers<[1], [1], [0], [0], [0, 0, 1, 0], [], []>} : vector<8x4xbf16>, vector<8x4xbf16>, vector<8x8xf32> -> vector<8x8xf32>
      %81 = arith.addf %77, %80 : vector<8x8xf32>
      %cst_42 = arith.constant 0xFF800000 : f32
      %82 = vector.broadcast %cst_42 : f32 to vector<8x8xf32>
      %83 = arith.select %35, %81, %82 : vector<8x8xi1>, vector<8x8xf32>
      %c1 = arith.constant 1 : index
      %c0_43 = arith.constant 0 : index
      %c0_44 = arith.constant 0 : index
      %84 = vector.load %arg15[%c1, %c0_43, %c0_44] : memref<4x8x1xf32, #tpu.memory_space<vmem>>, vector<1x8x1xf32>
      %85 = vector.shape_cast %84 : vector<1x8x1xf32> to vector<8x1xf32>
      %c1_45 = arith.constant 1 : index
      %c0_46 = arith.constant 0 : index
      %c0_47 = arith.constant 0 : index
      %86 = vector.load %arg16[%c1_45, %c0_46, %c0_47] : memref<4x8x1xf32, #tpu.memory_space<vmem>>, vector<1x8x1xf32>
      %87 = vector.shape_cast %86 : vector<1x8x1xf32> to vector<8x1xf32>
      %cst_48 = arith.constant dense<0xFF800000> : vector<8xf32>
      %88 = vector.multi_reduction <maximumf>, %83, %cst_48 [1] : vector<8x8xf32> to vector<8xf32>
      %89 = vector.shape_cast %88 : vector<8xf32> to vector<8x1xf32>
      %90 = arith.maximumf %85, %89 : vector<8x1xf32>
      %91 = arith.subf %85, %90 : vector<8x1xf32>
      %92 = math.exp %91 : vector<8x1xf32>
      %93 = vector.broadcast %90 : vector<8x1xf32> to vector<8x8xf32>
      %94 = arith.subf %83, %93 : vector<8x8xf32>
      %95 = math.exp %94 : vector<8x8xf32>
      %96 = arith.mulf %92, %87 : vector<8x1xf32>
      %cst_49 = arith.constant dense<0.000000e+00> : vector<8xf32>
      %97 = vector.multi_reduction <add>, %95, %cst_49 [1] : vector<8x8xf32> to vector<8xf32>
      %98 = vector.shape_cast %97 : vector<8xf32> to vector<8x1xf32>
      %99 = arith.addf %96, %98 : vector<8x1xf32>
      %c1_50 = arith.constant 1 : index
      %c0_51 = arith.constant 0 : index
      %c0_52 = arith.constant 0 : index
      %100 = vector.load %arg16[%c1_50, %c0_51, %c0_52] : memref<4x8x1xf32, #tpu.memory_space<vmem>>, vector<1x8x1xf32>
      %101 = vector.shape_cast %100 : vector<1x8x1xf32> to vector<8x1xf32>
      %102 = vector.shape_cast %99 : vector<8x1xf32> to vector<1x8x1xf32>
      tpu.vector_store %arg16[%c1_50, %c0_51, %c0_52], %102 {strides = array<i32>} : memref<4x8x1xf32, #tpu.memory_space<vmem>>, vector<1x8x1xf32>,
      %c1_53 = arith.constant 1 : index
      %c0_54 = arith.constant 0 : index
      %c0_55 = arith.constant 0 : index
      %103 = vector.load %arg15[%c1_53, %c0_54, %c0_55] : memref<4x8x1xf32, #tpu.memory_space<vmem>>, vector<1x8x1xf32>
      %104 = vector.shape_cast %103 : vector<1x8x1xf32> to vector<8x1xf32>
      %105 = vector.shape_cast %90 : vector<8x1xf32> to vector<1x8x1xf32>
      tpu.vector_store %arg15[%c1_53, %c0_54, %c0_55], %105 {strides = array<i32>} : memref<4x8x1xf32, #tpu.memory_space<vmem>>, vector<1x8x1xf32>,
      %106 = arith.truncf %95 : vector<8x8xf32> to vector<8x8xbf16>
      %107 = vector.extract_strided_slice %18 {offsets = [0, 8], sizes = [8, 8], strides = [1, 1]} : vector<8x32xbf16> to vector<8x8xbf16>
      %cst_56 = arith.constant dense<0.000000e+00> : vector<8x8xf32>
      %108 = tpu.matmul %106, %107, %cst_56 {dimension_numbers = #tpu.dot_dimension_numbers<[1], [0], [0], [1], [0, 0, 1, 1], [], []>} : vector<8x8xbf16>, vector<8x8xbf16>, vector<8x8xf32> -> vector<8x8xf32>
      %c0_57 = arith.constant 0 : index
      %c8 = arith.constant 8 : index
      %109 = vector.load %arg17[%c0_57, %c8] : memref<8x32xf32, #tpu.memory_space<vmem>>, vector<8x8xf32>
      %110 = vector.broadcast %92 : vector<8x1xf32> to vector<8x8xf32>
      %111 = arith.mulf %110, %109 : vector<8x8xf32>
      %112 = arith.addf %111, %108 : vector<8x8xf32>
      %c0_58 = arith.constant 0 : index
      %c8_59 = arith.constant 8 : index
      %113 = vector.load %arg17[%c0_58, %c8_59] : memref<8x32xf32, #tpu.memory_space<vmem>>, vector<8x8xf32>
      tpu.vector_store %arg17[%c0_58, %c8_59], %112 {strides = array<i32>} : memref<8x32xf32, #tpu.memory_space<vmem>>, vector<8x8xf32>,
      %c0_60 = arith.constant 0 : index
      %c8_61 = arith.constant 8 : index
      %114 = vector.load %arg14[%c0_60, %c8_61] : memref<8x32xbf16, #tpu.memory_space<vmem>>, vector<8x4xbf16>
      %115 = vector.extract_strided_slice %22 {offsets = [0, 8], sizes = [8, 4], strides = [1, 1]} : vector<8x16xbf16> to vector<8x4xbf16>
      %cst_62 = arith.constant dense<0.000000e+00> : vector<8x8xf32>
      %116 = tpu.matmul %114, %115, %cst_62 {dimension_numbers = #tpu.dot_dimension_numbers<[1], [1], [0], [0], [0, 0, 1, 0], [], []>} : vector<8x4xbf16>, vector<8x4xbf16>, vector<8x8xf32> -> vector<8x8xf32>
      %c0_63 = arith.constant 0 : index
      %c24 = arith.constant 24 : index
      %117 = vector.load %arg14[%c0_63, %c24] : memref<8x32xbf16, #tpu.memory_space<vmem>>, vector<8x4xbf16>
      %118 = vector.extract_strided_slice %26 {offsets = [0, 8], sizes = [8, 4], strides = [1, 1]} : vector<8x16xbf16> to vector<8x4xbf16>
      %cst_64 = arith.constant dense<0.000000e+00> : vector<8x8xf32>
      %119 = tpu.matmul %117, %118, %cst_64 {dimension_numbers = #tpu.dot_dimension_numbers<[1], [1], [0], [0], [0, 0, 1, 0], [], []>} : vector<8x4xbf16>, vector<8x4xbf16>, vector<8x8xf32> -> vector<8x8xf32>
      %120 = arith.addf %116, %119 : vector<8x8xf32>
      %cst_65 = arith.constant 0xFF800000 : f32
      %121 = vector.broadcast %cst_65 : f32 to vector<8x8xf32>
      %122 = arith.select %35, %120, %121 : vector<8x8xi1>, vector<8x8xf32>
      %c2 = arith.constant 2 : index
      %c0_66 = arith.constant 0 : index
      %c0_67 = arith.constant 0 : index
      %123 = vector.load %arg15[%c2, %c0_66, %c0_67] : memref<4x8x1xf32, #tpu.memory_space<vmem>>, vector<1x8x1xf32>
      %124 = vector.shape_cast %123 : vector<1x8x1xf32> to vector<8x1xf32>
      %c2_68 = arith.constant 2 : index
      %c0_69 = arith.constant 0 : index
      %c0_70 = arith.constant 0 : index
      %125 = vector.load %arg16[%c2_68, %c0_69, %c0_70] : memref<4x8x1xf32, #tpu.memory_space<vmem>>, vector<1x8x1xf32>
      %126 = vector.shape_cast %125 : vector<1x8x1xf32> to vector<8x1xf32>
      %cst_71 = arith.constant dense<0xFF800000> : vector<8xf32>
      %127 = vector.multi_reduction <maximumf>, %122, %cst_71 [1] : vector<8x8xf32> to vector<8xf32>
      %128 = vector.shape_cast %127 : vector<8xf32> to vector<8x1xf32>
      %129 = arith.maximumf %124, %128 : vector<8x1xf32>
      %130 = arith.subf %124, %129 : vector<8x1xf32>
      %131 = math.exp %130 : vector<8x1xf32>
      %132 = vector.broadcast %129 : vector<8x1xf32> to vector<8x8xf32>
      %133 = arith.subf %122, %132 : vector<8x8xf32>
      %134 = math.exp %133 : vector<8x8xf32>
      %135 = arith.mulf %131, %126 : vector<8x1xf32>
      %cst_72 = arith.constant dense<0.000000e+00> : vector<8xf32>
      %136 = vector.multi_reduction <add>, %134, %cst_72 [1] : vector<8x8xf32> to vector<8xf32>
      %137 = vector.shape_cast %136 : vector<8xf32> to vector<8x1xf32>
      %138 = arith.addf %135, %137 : vector<8x1xf32>
      %c2_73 = arith.constant 2 : index
      %c0_74 = arith.constant 0 : index
      %c0_75 = arith.constant 0 : index
      %139 = vector.load %arg16[%c2_73, %c0_74, %c0_75] : memref<4x8x1xf32, #tpu.memory_space<vmem>>, vector<1x8x1xf32>
      %140 = vector.shape_cast %139 : vector<1x8x1xf32> to vector<8x1xf32>
      %141 = vector.shape_cast %138 : vector<8x1xf32> to vector<1x8x1xf32>
      tpu.vector_store %arg16[%c2_73, %c0_74, %c0_75], %141 {strides = array<i32>} : memref<4x8x1xf32, #tpu.memory_space<vmem>>, vector<1x8x1xf32>,
      %c2_76 = arith.constant 2 : index
      %c0_77 = arith.constant 0 : index
      %c0_78 = arith.constant 0 : index
      %142 = vector.load %arg15[%c2_76, %c0_77, %c0_78] : memref<4x8x1xf32, #tpu.memory_space<vmem>>, vector<1x8x1xf32>
      %143 = vector.shape_cast %142 : vector<1x8x1xf32> to vector<8x1xf32>
      %144 = vector.shape_cast %129 : vector<8x1xf32> to vector<1x8x1xf32>
      tpu.vector_store %arg15[%c2_76, %c0_77, %c0_78], %144 {strides = array<i32>} : memref<4x8x1xf32, #tpu.memory_space<vmem>>, vector<1x8x1xf32>,
      %145 = arith.truncf %134 : vector<8x8xf32> to vector<8x8xbf16>
      %146 = vector.extract_strided_slice %18 {offsets = [0, 16], sizes = [8, 8], strides = [1, 1]} : vector<8x32xbf16> to vector<8x8xbf16>
      %cst_79 = arith.constant dense<0.000000e+00> : vector<8x8xf32>
      %147 = tpu.matmul %145, %146, %cst_79 {dimension_numbers = #tpu.dot_dimension_numbers<[1], [0], [0], [1], [0, 0, 1, 1], [], []>} : vector<8x8xbf16>, vector<8x8xbf16>, vector<8x8xf32> -> vector<8x8xf32>
      %c0_80 = arith.constant 0 : index
      %c16_81 = arith.constant 16 : index
      %148 = vector.load %arg17[%c0_80, %c16_81] : memref<8x32xf32, #tpu.memory_space<vmem>>, vector<8x8xf32>
      %149 = vector.broadcast %131 : vector<8x1xf32> to vector<8x8xf32>
      %150 = arith.mulf %149, %148 : vector<8x8xf32>
      %151 = arith.addf %150, %147 : vector<8x8xf32>
      %c0_82 = arith.constant 0 : index
      %c16_83 = arith.constant 16 : index
      %152 = vector.load %arg17[%c0_82, %c16_83] : memref<8x32xf32, #tpu.memory_space<vmem>>, vector<8x8xf32>
      tpu.vector_store %arg17[%c0_82, %c16_83], %151 {strides = array<i32>} : memref<8x32xf32, #tpu.memory_space<vmem>>, vector<8x8xf32>,
      %c0_84 = arith.constant 0 : index
      %c12 = arith.constant 12 : index
      %153 = vector.load %arg14[%c0_84, %c12] : memref<8x32xbf16, #tpu.memory_space<vmem>>, vector<8x4xbf16>
      %154 = vector.extract_strided_slice %22 {offsets = [0, 12], sizes = [8, 4], strides = [1, 1]} : vector<8x16xbf16> to vector<8x4xbf16>
      %cst_85 = arith.constant dense<0.000000e+00> : vector<8x8xf32>
      %155 = tpu.matmul %153, %154, %cst_85 {dimension_numbers = #tpu.dot_dimension_numbers<[1], [1], [0], [0], [0, 0, 1, 0], [], []>} : vector<8x4xbf16>, vector<8x4xbf16>, vector<8x8xf32> -> vector<8x8xf32>
      %c0_86 = arith.constant 0 : index
      %c28 = arith.constant 28 : index
      %156 = vector.load %arg14[%c0_86, %c28] : memref<8x32xbf16, #tpu.memory_space<vmem>>, vector<8x4xbf16>
      %157 = vector.extract_strided_slice %26 {offsets = [0, 12], sizes = [8, 4], strides = [1, 1]} : vector<8x16xbf16> to vector<8x4xbf16>
      %cst_87 = arith.constant dense<0.000000e+00> : vector<8x8xf32>
      %158 = tpu.matmul %156, %157, %cst_87 {dimension_numbers = #tpu.dot_dimension_numbers<[1], [1], [0], [0], [0, 0, 1, 0], [], []>} : vector<8x4xbf16>, vector<8x4xbf16>, vector<8x8xf32> -> vector<8x8xf32>
      %159 = arith.addf %155, %158 : vector<8x8xf32>
      %cst_88 = arith.constant 0xFF800000 : f32
      %160 = vector.broadcast %cst_88 : f32 to vector<8x8xf32>
      %161 = arith.select %35, %159, %160 : vector<8x8xi1>, vector<8x8xf32>
      %c3 = arith.constant 3 : index
      %c0_89 = arith.constant 0 : index
      %c0_90 = arith.constant 0 : index
      %162 = vector.load %arg15[%c3, %c0_89, %c0_90] : memref<4x8x1xf32, #tpu.memory_space<vmem>>, vector<1x8x1xf32>
      %163 = vector.shape_cast %162 : vector<1x8x1xf32> to vector<8x1xf32>
      %c3_91 = arith.constant 3 : index
      %c0_92 = arith.constant 0 : index
      %c0_93 = arith.constant 0 : index
      %164 = vector.load %arg16[%c3_91, %c0_92, %c0_93] : memref<4x8x1xf32, #tpu.memory_space<vmem>>, vector<1x8x1xf32>
      %165 = vector.shape_cast %164 : vector<1x8x1xf32> to vector<8x1xf32>
      %cst_94 = arith.constant dense<0xFF800000> : vector<8xf32>
      %166 = vector.multi_reduction <maximumf>, %161, %cst_94 [1] : vector<8x8xf32> to vector<8xf32>
      %167 = vector.shape_cast %166 : vector<8xf32> to vector<8x1xf32>
      %168 = arith.maximumf %163, %167 : vector<8x1xf32>
      %169 = arith.subf %163, %168 : vector<8x1xf32>
      %170 = math.exp %169 : vector<8x1xf32>
      %171 = vector.broadcast %168 : vector<8x1xf32> to vector<8x8xf32>
      %172 = arith.subf %161, %171 : vector<8x8xf32>
      %173 = math.exp %172 : vector<8x8xf32>
      %174 = arith.mulf %170, %165 : vector<8x1xf32>
      %cst_95 = arith.constant dense<0.000000e+00> : vector<8xf32>
      %175 = vector.multi_reduction <add>, %173, %cst_95 [1] : vector<8x8xf32> to vector<8xf32>
      %176 = vector.shape_cast %175 : vector<8xf32> to vector<8x1xf32>
      %177 = arith.addf %174, %176 : vector<8x1xf32>
      %c3_96 = arith.constant 3 : index
      %c0_97 = arith.constant 0 : index
      %c0_98 = arith.constant 0 : index
      %178 = vector.load %arg16[%c3_96, %c0_97, %c0_98] : memref<4x8x1xf32, #tpu.memory_space<vmem>>, vector<1x8x1xf32>
      %179 = vector.shape_cast %178 : vector<1x8x1xf32> to vector<8x1xf32>
      %180 = vector.shape_cast %177 : vector<8x1xf32> to vector<1x8x1xf32>
      tpu.vector_store %arg16[%c3_96, %c0_97, %c0_98], %180 {strides = array<i32>} : memref<4x8x1xf32, #tpu.memory_space<vmem>>, vector<1x8x1xf32>,
      %c3_99 = arith.constant 3 : index
      %c0_100 = arith.constant 0 : index
      %c0_101 = arith.constant 0 : index
      %181 = vector.load %arg15[%c3_99, %c0_100, %c0_101] : memref<4x8x1xf32, #tpu.memory_space<vmem>>, vector<1x8x1xf32>
      %182 = vector.shape_cast %181 : vector<1x8x1xf32> to vector<8x1xf32>
      %183 = vector.shape_cast %168 : vector<8x1xf32> to vector<1x8x1xf32>
      tpu.vector_store %arg15[%c3_99, %c0_100, %c0_101], %183 {strides = array<i32>} : memref<4x8x1xf32, #tpu.memory_space<vmem>>, vector<1x8x1xf32>,
      %184 = arith.truncf %173 : vector<8x8xf32> to vector<8x8xbf16>
      %185 = vector.extract_strided_slice %18 {offsets = [0, 24], sizes = [8, 8], strides = [1, 1]} : vector<8x32xbf16> to vector<8x8xbf16>
      %cst_102 = arith.constant dense<0.000000e+00> : vector<8x8xf32>
      %186 = tpu.matmul %184, %185, %cst_102 {dimension_numbers = #tpu.dot_dimension_numbers<[1], [0], [0], [1], [0, 0, 1, 1], [], []>} : vector<8x8xbf16>, vector<8x8xbf16>, vector<8x8xf32> -> vector<8x8xf32>
      %c0_103 = arith.constant 0 : index
      %c24_104 = arith.constant 24 : index
      %187 = vector.load %arg17[%c0_103, %c24_104] : memref<8x32xf32, #tpu.memory_space<vmem>>, vector<8x8xf32>
      %188 = vector.broadcast %170 : vector<8x1xf32> to vector<8x8xf32>
      %189 = arith.mulf %188, %187 : vector<8x8xf32>
      %190 = arith.addf %189, %186 : vector<8x8xf32>
      %c0_105 = arith.constant 0 : index
      %c24_106 = arith.constant 24 : index
      %191 = vector.load %arg17[%c0_105, %c24_106] : memref<8x32xf32, #tpu.memory_space<vmem>>, vector<8x8xf32>
      tpu.vector_store %arg17[%c0_105, %c24_106], %190 {strides = array<i32>} : memref<8x32xf32, #tpu.memory_space<vmem>>, vector<8x8xf32>,
    } else {
    }
    %c0_i32_2 = arith.constant 0 : i32
    %6 = arith.cmpi eq, %arg2, %c0_i32_2 : i32
    %7 = arith.extui %6 : i1 to i32
    %c0_i32_3 = arith.constant 0 : i32
    %8 = arith.cmpi ne, %7, %c0_i32_3 : i32
    scf.if %8 {
      %c0 = arith.constant 0 : index
      %c0_4 = arith.constant 0 : index
      %c0_5 = arith.constant 0 : index
      %9 = vector.load %arg16[%c0, %c0_4, %c0_5] : memref<4x8x1xf32, #tpu.memory_space<vmem>>, vector<1x8x1xf32>
      %10 = vector.shape_cast %9 : vector<1x8x1xf32> to vector<8x1xf32>
      %11 = tpu.reciprocal %10 {approx = true} : vector<8x1xf32> -> vector<8x1xf32>
      %c0_6 = arith.constant 0 : index
      %c0_7 = arith.constant 0 : index
      %12 = vector.load %arg17[%c0_6, %c0_7] : memref<8x32xf32, #tpu.memory_space<vmem>>, vector<8x8xf32>
      %13 = vector.broadcast %11 : vector<8x1xf32> to vector<8x8xf32>
      %14 = arith.mulf %12, %13 : vector<8x8xf32>
      %15 = arith.truncf %14 : vector<8x8xf32> to vector<8x8xbf16>
      %c0_8 = arith.constant 0 : index
      %c0_9 = arith.constant 0 : index
      %16 = vector.load %arg14[%c0_8, %c0_9] : memref<8x32xbf16, #tpu.memory_space<vmem>>, vector<8x8xbf16>
      tpu.vector_store %arg14[%c0_8, %c0_9], %15 {strides = array<i32>} : memref<8x32xbf16, #tpu.memory_space<vmem>>, vector<8x8xbf16>,
      %c1 = arith.constant 1 : index
      %c0_10 = arith.constant 0 : index
      %c0_11 = arith.constant 0 : index
      %17 = vector.load %arg16[%c1, %c0_10, %c0_11] : memref<4x8x1xf32, #tpu.memory_space<vmem>>, vector<1x8x1xf32>
      %18 = vector.shape_cast %17 : vector<1x8x1xf32> to vector<8x1xf32>
      %19 = tpu.reciprocal %18 {approx = true} : vector<8x1xf32> -> vector<8x1xf32>
      %c0_12 = arith.constant 0 : index
      %c8 = arith.constant 8 : index
      %20 = vector.load %arg17[%c0_12, %c8] : memref<8x32xf32, #tpu.memory_space<vmem>>, vector<8x8xf32>
      %21 = vector.broadcast %19 : vector<8x1xf32> to vector<8x8xf32>
      %22 = arith.mulf %20, %21 : vector<8x8xf32>
      %23 = arith.truncf %22 : vector<8x8xf32> to vector<8x8xbf16>
      %c0_13 = arith.constant 0 : index
      %c8_14 = arith.constant 8 : index
      %24 = vector.load %arg14[%c0_13, %c8_14] : memref<8x32xbf16, #tpu.memory_space<vmem>>, vector<8x8xbf16>
      tpu.vector_store %arg14[%c0_13, %c8_14], %23 {strides = array<i32>} : memref<8x32xbf16, #tpu.memory_space<vmem>>, vector<8x8xbf16>,
      %c2 = arith.constant 2 : index
      %c0_15 = arith.constant 0 : index
      %c0_16 = arith.constant 0 : index
      %25 = vector.load %arg16[%c2, %c0_15, %c0_16] : memref<4x8x1xf32, #tpu.memory_space<vmem>>, vector<1x8x1xf32>
      %26 = vector.shape_cast %25 : vector<1x8x1xf32> to vector<8x1xf32>
      %27 = tpu.reciprocal %26 {approx = true} : vector<8x1xf32> -> vector<8x1xf32>
      %c0_17 = arith.constant 0 : index
      %c16 = arith.constant 16 : index
      %28 = vector.load %arg17[%c0_17, %c16] : memref<8x32xf32, #tpu.memory_space<vmem>>, vector<8x8xf32>
      %29 = vector.broadcast %27 : vector<8x1xf32> to vector<8x8xf32>
      %30 = arith.mulf %28, %29 : vector<8x8xf32>
      %31 = arith.truncf %30 : vector<8x8xf32> to vector<8x8xbf16>
      %c0_18 = arith.constant 0 : index
      %c16_19 = arith.constant 16 : index
      %32 = vector.load %arg14[%c0_18, %c16_19] : memref<8x32xbf16, #tpu.memory_space<vmem>>, vector<8x8xbf16>
      tpu.vector_store %arg14[%c0_18, %c16_19], %31 {strides = array<i32>} : memref<8x32xbf16, #tpu.memory_space<vmem>>, vector<8x8xbf16>,
      %c3 = arith.constant 3 : index
      %c0_20 = arith.constant 0 : index
      %c0_21 = arith.constant 0 : index
      %33 = vector.load %arg16[%c3, %c0_20, %c0_21] : memref<4x8x1xf32, #tpu.memory_space<vmem>>, vector<1x8x1xf32>
      %34 = vector.shape_cast %33 : vector<1x8x1xf32> to vector<8x1xf32>
      %35 = tpu.reciprocal %34 {approx = true} : vector<8x1xf32> -> vector<8x1xf32>
      %c0_22 = arith.constant 0 : index
      %c24 = arith.constant 24 : index
      %36 = vector.load %arg17[%c0_22, %c24] : memref<8x32xf32, #tpu.memory_space<vmem>>, vector<8x8xf32>
      %37 = vector.broadcast %35 : vector<8x1xf32> to vector<8x8xf32>
      %38 = arith.mulf %36, %37 : vector<8x8xf32>
      %39 = arith.truncf %38 : vector<8x8xf32> to vector<8x8xbf16>
      %c0_23 = arith.constant 0 : index
      %c24_24 = arith.constant 24 : index
      %40 = vector.load %arg14[%c0_23, %c24_24] : memref<8x32xbf16, #tpu.memory_space<vmem>>, vector<8x8xbf16>
      tpu.vector_store %arg14[%c0_23, %c24_24], %39 {strides = array<i32>} : memref<8x32xbf16, #tpu.memory_space<vmem>>, vector<8x8xbf16>,
      %c0_25 = arith.constant 0 : index
      %c0_26 = arith.constant 0 : index
      %41 = vector.load %arg14[%c0_25, %c0_26] : memref<8x32xbf16, #tpu.memory_space<vmem>>, vector<8x32xbf16>
      %c0_27 = arith.constant 0 : index
      %c0_28 = arith.constant 0 : index
      %42 = vector.load %arg11[%c0_27, %c0_28] : memref<32x32xbf16, #tpu.memory_space<vmem>>, vector<32x32xbf16>
      %cst = arith.constant dense<0.000000e+00> : vector<8x32xf32>
      %43 = tpu.matmul %41, %42, %cst {dimension_numbers = #tpu.dot_dimension_numbers<[1], [0], [0], [1], [0, 0, 1, 1], [], []>} : vector<8x32xbf16>, vector<32x32xbf16>, vector<8x32xf32> -> vector<8x32xf32>
      %c0_29 = arith.constant 0 : index
      %c0_30 = arith.constant 0 : index
      %44 = vector.load %arg12[%c0_29, %c0_30] : memref<1x32xf32, #tpu.memory_space<vmem>>, vector<1x32xf32>
      %45 = vector.broadcast %44 : vector<1x32xf32> to vector<8x32xf32>
      %46 = arith.addf %43, %45 : vector<8x32xf32>
      %47 = arith.truncf %46 : vector<8x32xf32> to vector<8x32xbf16>
      %c0_31 = arith.constant 0 : index
      %c0_32 = arith.constant 0 : index
      %c0_33 = arith.constant 0 : index
      %48 = vector.load %arg13[%c0_31, %c0_32, %c0_33] : memref<1x8x32xbf16, #tpu.memory_space<vmem>>, vector<1x8x32xbf16>
      %49 = vector.shape_cast %48 : vector<1x8x32xbf16> to vector<8x32xbf16>
      %50 = vector.shape_cast %47 : vector<8x32xbf16> to vector<1x8x32xbf16>
      tpu.vector_store %arg13[%c0_31, %c0_32, %c0_33], %50 {strides = array<i32>} : memref<1x8x32xbf16, #tpu.memory_space<vmem>>, vector<1x8x32xbf16>,
    } else {
    }
    return
  }
  func.func @transform_0(%arg0: i32, %arg1: i32, %arg2: i32) -> (i32, i32, i32) {
    %c0_i32 = arith.constant 0 : i32
    %c0_i32_0 = arith.constant 0 : i32
    return %arg0, %arg1, %c0_i32 : i32, i32, i32
  }
  func.func @transform_1(%arg0: i32, %arg1: i32, %arg2: i32) -> (i32, i32, i32) {
    %c0_i32 = arith.constant 0 : i32
    %c0_i32_0 = arith.constant 0 : i32
    return %arg0, %arg2, %c0_i32 : i32, i32, i32
  }
  func.func @transform_2(%arg0: i32, %arg1: i32, %arg2: i32) -> (i32, i32) {
    %c0_i32 = arith.constant 0 : i32
    %c0_i32_0 = arith.constant 0 : i32
    %c0_i32_1 = arith.constant 0 : i32
    return %c0_i32, %c0_i32_0 : i32, i32
  }
  func.func @transform_3(%arg0: i32, %arg1: i32, %arg2: i32) -> (i32, i32) {
    %c0_i32 = arith.constant 0 : i32
    %c0_i32_0 = arith.constant 0 : i32
    %c0_i32_1 = arith.constant 0 : i32
    return %c0_i32, %c0_i32_0 : i32, i32
  }
  func.func @transform_4(%arg0: i32, %arg1: i32, %arg2: i32) -> (i32, i32) {
    %c0_i32 = arith.constant 0 : i32
    %c0_i32_0 = arith.constant 0 : i32
    return %arg1, %c0_i32 : i32, i32
  }
  func.func @transform_5(%arg0: i32, %arg1: i32, %arg2: i32) -> (i32, i32) {
    %c0_i32 = arith.constant 0 : i32
    %c0_i32_0 = arith.constant 0 : i32
    return %arg1, %c0_i32 : i32, i32
  }
  func.func @transform_6(%arg0: i32, %arg1: i32, %arg2: i32) -> (i32, i32) {
    %c0_i32 = arith.constant 0 : i32
    %c0_i32_0 = arith.constant 0 : i32
    return %arg2, %c0_i32 : i32, i32
  }
  func.func @transform_7(%arg0: i32, %arg1: i32, %arg2: i32) -> (i32, i32) {
    %c0_i32 = arith.constant 0 : i32
    %c0_i32_0 = arith.constant 0 : i32
    return %arg2, %c0_i32 : i32, i32
  }
  func.func @transform_8(%arg0: i32, %arg1: i32, %arg2: i32) -> (i32, i32) {
    %c0_i32 = arith.constant 0 : i32
    %c0_i32_0 = arith.constant 0 : i32
    %c0_i32_1 = arith.constant 0 : i32
    return %c0_i32, %c0_i32_0 : i32, i32
  }
  func.func @transform_9(%arg0: i32, %arg1: i32, %arg2: i32) -> (i32, i32) {
    %c0_i32 = arith.constant 0 : i32
    %c0_i32_0 = arith.constant 0 : i32
    %c0_i32_1 = arith.constant 0 : i32
    return %c0_i32, %c0_i32_0 : i32, i32
  }
  func.func @transform_10(%arg0: i32, %arg1: i32, %arg2: i32) -> (i32, i32, i32) {
    %c0_i32 = arith.constant 0 : i32
    %c0_i32_0 = arith.constant 0 : i32
    return %arg0, %arg1, %c0_i32 : i32, i32, i32
  }
}

module attributes {stable_mosaic.version = 11 : i64} {
  func.func @mha_kernel(%arg0: i32, %arg1: i32, %arg2: i32, %arg3: memref<1x8x32xbf16, #tpu.memory_space<vmem>>, %arg4: memref<1x8x32xbf16, #tpu.memory_space<vmem>>, %arg5: memref<32x32xbf16, #tpu.memory_space<vmem>>, %arg6: memref<32x64xbf16, #tpu.memory_space<vmem>>, %arg7: memref<8x16xf32, #tpu.memory_space<vmem>>, %arg8: memref<8x16xf32, #tpu.memory_space<vmem>>, %arg9: memref<8x16xf32, #tpu.memory_space<vmem>>, %arg10: memref<8x16xf32, #tpu.memory_space<vmem>>, %arg11: memref<32x32xbf16, #tpu.memory_space<vmem>>, %arg12: memref<1x32xf32, #tpu.memory_space<vmem>>, %arg13: memref<1x8x32xbf16, #tpu.memory_space<vmem>>, %arg14: memref<8x32xbf16, #tpu.memory_space<vmem>>, %arg15: memref<4x8x1xf32, #tpu.memory_space<vmem>>, %arg16: memref<4x8x1xf32, #tpu.memory_space<vmem>>, %arg17: memref<8x32xf32, #tpu.memory_space<vmem>>) attributes {dimension_semantics = [#tpu.dimension_semantics<parallel>, #tpu.dimension_semantics<parallel>, #tpu.dimension_semantics<arbitrary>], iteration_bounds = array<i64: 2, 1, 1>, scalar_prefetch = 0 : i64, scratch_operands = 4 : i64, tpu.core_type = #tpu.core_type<tc>, window_params = [{transform_indices = @transform_0, window_bounds = array<i64: 1, 8, 32>}, {transform_indices = @transform_1, window_bounds = array<i64: 1, 8, 32>}, {pipeline_mode = #tpu.pipeline_mode<synchronous>, transform_indices = @transform_2, window_bounds = array<i64: 32, 32>}, {pipeline_mode = #tpu.pipeline_mode<synchronous>, transform_indices = @transform_3, window_bounds = array<i64: 32, 64>}, {transform_indices = @transform_4, window_bounds = array<i64: 8, 16>}, {transform_indices = @transform_5, window_bounds = array<i64: 8, 16>}, {transform_indices = @transform_6, window_bounds = array<i64: 8, 16>}, {transform_indices = @transform_7, window_bounds = array<i64: 8, 16>}, {pipeline_mode = #tpu.pipeline_mode<synchronous>, transform_indices = @transform_8, window_bounds = array<i64: 32, 32>}, {pipeline_mode = #tpu.pipeline_mode<synchronous>, transform_indices = @transform_9, window_bounds = array<i64: 1, 32>}, {transform_indices = @transform_10, window_bounds = array<i64: 1, 8, 32>}]} {
    %c0_i32 = arith.constant 0 : i32
    %0 = arith.cmpi eq, %arg2, %c0_i32 : i32
    %1 = arith.extui %0 : i1 to i32
    %c0_i32_0 = arith.constant 0 : i32
    %2 = arith.cmpi ne, %1, %c0_i32_0 : i32
    scf.if %2 {
      %c0 = arith.constant 0 : index
      %c0_4 = arith.constant 0 : index
      %c0_5 = arith.constant 0 : index
      %9 = vector.load %arg3[%c0, %c0_4, %c0_5] : memref<1x8x32xbf16, #tpu.memory_space<vmem>>, vector<1x8x32xbf16>
      %10 = vector.shape_cast %9 : vector<1x8x32xbf16> to vector<8x32xbf16>
      %c0_6 = arith.constant 0 : index
      %c0_7 = arith.constant 0 : index
      %11 = vector.load %arg5[%c0_6, %c0_7] : memref<32x32xbf16, #tpu.memory_space<vmem>>, vector<32x32xbf16>
      %cst = arith.constant dense<0.000000e+00> : vector<8x32xf32>
      %12 = tpu.matmul %10, %11, %cst {dimension_numbers = #tpu.dot_dimension_numbers<[1], [0], [0], [1], [0, 0, 1, 1], [], []>} : vector<8x32xbf16>, vector<32x32xbf16>, vector<8x32xf32> -> vector<8x32xf32>
      %c0_8 = arith.constant 0 : index
      %c0_9 = arith.constant 0 : index
      %13 = vector.load %arg7[%c0_8, %c0_9] : memref<8x16xf32, #tpu.memory_space<vmem>>, vector<8x16xf32>
      %c0_10 = arith.constant 0 : index
      %c0_11 = arith.constant 0 : index
      %14 = vector.load %arg8[%c0_10, %c0_11] : memref<8x16xf32, #tpu.memory_space<vmem>>, vector<8x16xf32>
      %15 = vector.extract_strided_slice %12 {offsets = [0, 0], sizes = [8, 16], strides = [1, 1]} : vector<8x32xf32> to vector<8x16xf32>
      %16 = vector.extract_strided_slice %12 {offsets = [0, 16], sizes = [8, 16], strides = [1, 1]} : vector<8x32xf32> to vector<8x16xf32>
      %17 = arith.mulf %15, %13 : vector<8x16xf32>
      %18 = arith.mulf %16, %14 : vector<8x16xf32>
      %19 = arith.subf %17, %18 : vector<8x16xf32>
      %20 = arith.truncf %19 : vector<8x16xf32> to vector<8x16xbf16>
      %c0_12 = arith.constant 0 : index
      %c0_13 = arith.constant 0 : index
      %21 = vector.load %arg14[%c0_12, %c0_13] : memref<8x32xbf16, #tpu.memory_space<vmem>>, vector<8x16xbf16>
      tpu.vector_store %arg14[%c0_12, %c0_13], %20 {strides = array<i32>} : memref<8x32xbf16, #tpu.memory_space<vmem>>, vector<8x16xbf16>,
      %22 = arith.mulf %15, %14 : vector<8x16xf32>
      %23 = arith.mulf %16, %13 : vector<8x16xf32>
      %24 = arith.addf %22, %23 : vector<8x16xf32>
      %25 = arith.truncf %24 : vector<8x16xf32> to vector<8x16xbf16>
      %c0_14 = arith.constant 0 : index
      %c16 = arith.constant 16 : index
      %26 = vector.load %arg14[%c0_14, %c16] : memref<8x32xbf16, #tpu.memory_space<vmem>>, vector<8x16xbf16>
      tpu.vector_store %arg14[%c0_14, %c16], %25 {strides = array<i32>} : memref<8x32xbf16, #tpu.memory_space<vmem>>, vector<8x16xbf16>,
      %cst_15 = arith.constant 0xFF800000 : f32
      %27 = vector.broadcast %cst_15 : f32 to vector<4x8x1xf32>
      %c0_16 = arith.constant 0 : index
      %c0_17 = arith.constant 0 : index
      %c0_18 = arith.constant 0 : index
      %28 = vector.load %arg15[%c0_16, %c0_17, %c0_18] : memref<4x8x1xf32, #tpu.memory_space<vmem>>, vector<4x8x1xf32>
      tpu.vector_store %arg15[%c0_16, %c0_17, %c0_18], %27 {strides = array<i32>} : memref<4x8x1xf32, #tpu.memory_space<vmem>>, vector<4x8x1xf32>,
      %cst_19 = arith.constant 0.000000e+00 : f32
      %29 = vector.broadcast %cst_19 : f32 to vector<4x8x1xf32>
      %c0_20 = arith.constant 0 : index
      %c0_21 = arith.constant 0 : index
      %c0_22 = arith.constant 0 : index
      %30 = vector.load %arg16[%c0_20, %c0_21, %c0_22] : memref<4x8x1xf32, #tpu.memory_space<vmem>>, vector<4x8x1xf32>
      tpu.vector_store %arg16[%c0_20, %c0_21, %c0_22], %29 {strides = array<i32>} : memref<4x8x1xf32, #tpu.memory_space<vmem>>, vector<4x8x1xf32>,
      %cst_23 = arith.constant 0.000000e+00 : f32
      %31 = vector.broadcast %cst_23 : f32 to vector<8x32xf32>
      %c0_24 = arith.constant 0 : index
      %c0_25 = arith.constant 0 : index
      %32 = vector.load %arg17[%c0_24, %c0_25] : memref<8x32xf32, #tpu.memory_space<vmem>>, vector<8x32xf32>
      tpu.vector_store %arg17[%c0_24, %c0_25], %31 {strides = array<i32>} : memref<8x32xf32, #tpu.memory_space<vmem>>, vector<8x32xf32>,
    } else {
    }
    %3 = arith.cmpi sle, %arg2, %arg1 : i32
    %4 = arith.extui %3 : i1 to i32
    %c0_i32_1 = arith.constant 0 : i32
    %5 = arith.cmpi ne, %4, %c0_i32_1 : i32
    scf.if %5 {
      %c0 = arith.constant 0 : index
      %c0_4 = arith.constant 0 : index
      %c0_5 = arith.constant 0 : index
      %9 = vector.load %arg4[%c0, %c0_4, %c0_5] : memref<1x8x32xbf16, #tpu.memory_space<vmem>>, vector<1x8x32xbf16>
      %10 = vector.shape_cast %9 : vector<1x8x32xbf16> to vector<8x32xbf16>
      %c0_6 = arith.constant 0 : index
      %c0_7 = arith.constant 0 : index
      %11 = vector.load %arg6[%c0_6, %c0_7] : memref<32x64xbf16, #tpu.memory_space<vmem>>, vector<32x64xbf16>
      %cst = arith.constant dense<0.000000e+00> : vector<8x64xf32>
      %12 = tpu.matmul %10, %11, %cst {dimension_numbers = #tpu.dot_dimension_numbers<[1], [0], [0], [1], [0, 0, 1, 1], [], []>} : vector<8x32xbf16>, vector<32x64xbf16>, vector<8x64xf32> -> vector<8x64xf32>
      %c0_8 = arith.constant 0 : index
      %c0_9 = arith.constant 0 : index
      %13 = vector.load %arg9[%c0_8, %c0_9] : memref<8x16xf32, #tpu.memory_space<vmem>>, vector<8x16xf32>
      %c0_10 = arith.constant 0 : index
      %c0_11 = arith.constant 0 : index
      %14 = vector.load %arg10[%c0_10, %c0_11] : memref<8x16xf32, #tpu.memory_space<vmem>>, vector<8x16xf32>
      %15 = vector.extract_strided_slice %12 {offsets = [0, 0], sizes = [8, 16], strides = [1, 1]} : vector<8x64xf32> to vector<8x16xf32>
      %16 = vector.extract_strided_slice %12 {offsets = [0, 16], sizes = [8, 16], strides = [1, 1]} : vector<8x64xf32> to vector<8x16xf32>
      %17 = vector.extract_strided_slice %12 {offsets = [0, 32], sizes = [8, 32], strides = [1, 1]} : vector<8x64xf32> to vector<8x32xf32>
      %18 = arith.truncf %17 : vector<8x32xf32> to vector<8x32xbf16>
      %19 = arith.mulf %15, %13 : vector<8x16xf32>
      %20 = arith.mulf %16, %14 : vector<8x16xf32>
      %21 = arith.subf %19, %20 : vector<8x16xf32>
      %22 = arith.truncf %21 : vector<8x16xf32> to vector<8x16xbf16>
      %23 = arith.mulf %15, %14 : vector<8x16xf32>
      %24 = arith.mulf %16, %13 : vector<8x16xf32>
      %25 = arith.addf %23, %24 : vector<8x16xf32>
      %26 = arith.truncf %25 : vector<8x16xf32> to vector<8x16xbf16>
      %c8_i32 = arith.constant 8 : i32
      %27 = arith.muli %arg1, %c8_i32 : i32
      %28 = tpu.iota {dimensions = array<i32: 0>} : vector<8x8xi32>
      %29 = vector.broadcast %27 : i32 to vector<8x8xi32>
      %30 = arith.addi %29, %28 : vector<8x8xi32>
      %c8_i32_12 = arith.constant 8 : i32
      %31 = arith.muli %arg2, %c8_i32_12 : i32
      %32 = tpu.iota {dimensions = array<i32: 1>} : vector<8x8xi32>
      %33 = vector.broadcast %31 : i32 to vector<8x8xi32>
      %34 = arith.addi %33, %32 : vector<8x8xi32>
      %35 = arith.cmpi sle, %34, %30 : vector<8x8xi32>
      %c0_13 = arith.constant 0 : index
      %c0_14 = arith.constant 0 : index
      %36 = vector.load %arg14[%c0_13, %c0_14] : memref<8x32xbf16, #tpu.memory_space<vmem>>, vector<8x4xbf16>
      %37 = vector.extract_strided_slice %22 {offsets = [0, 0], sizes = [8, 4], strides = [1, 1]} : vector<8x16xbf16> to vector<8x4xbf16>
      %cst_15 = arith.constant dense<0.000000e+00> : vector<8x8xf32>
      %38 = tpu.matmul %36, %37, %cst_15 {dimension_numbers = #tpu.dot_dimension_numbers<[1], [1], [0], [0], [0, 0, 1, 0], [], []>} : vector<8x4xbf16>, vector<8x4xbf16>, vector<8x8xf32> -> vector<8x8xf32>
      %c0_16 = arith.constant 0 : index
      %c16 = arith.constant 16 : index
      %39 = vector.load %arg14[%c0_16, %c16] : memref<8x32xbf16, #tpu.memory_space<vmem>>, vector<8x4xbf16>
      %40 = vector.extract_strided_slice %26 {offsets = [0, 0], sizes = [8, 4], strides = [1, 1]} : vector<8x16xbf16> to vector<8x4xbf16>
      %cst_17 = arith.constant dense<0.000000e+00> : vector<8x8xf32>
      %41 = tpu.matmul %39, %40, %cst_17 {dimension_numbers = #tpu.dot_dimension_numbers<[1], [1], [0], [0], [0, 0, 1, 0], [], []>} : vector<8x4xbf16>, vector<8x4xbf16>, vector<8x8xf32> -> vector<8x8xf32>
      %42 = arith.addf %38, %41 : vector<8x8xf32>
      %cst_18 = arith.constant 0xFF800000 : f32
      %43 = vector.broadcast %cst_18 : f32 to vector<8x8xf32>
      %44 = arith.select %35, %42, %43 : vector<8x8xi1>, vector<8x8xf32>
      %c0_19 = arith.constant 0 : index
      %c0_20 = arith.constant 0 : index
      %c0_21 = arith.constant 0 : index
      %45 = vector.load %arg15[%c0_19, %c0_20, %c0_21] : memref<4x8x1xf32, #tpu.memory_space<vmem>>, vector<1x8x1xf32>
      %46 = vector.shape_cast %45 : vector<1x8x1xf32> to vector<8x1xf32>
      %c0_22 = arith.constant 0 : index
      %c0_23 = arith.constant 0 : index
      %c0_24 = arith.constant 0 : index
      %47 = vector.load %arg16[%c0_22, %c0_23, %c0_24] : memref<4x8x1xf32, #tpu.memory_space<vmem>>, vector<1x8x1xf32>
      %48 = vector.shape_cast %47 : vector<1x8x1xf32> to vector<8x1xf32>
      %cst_25 = arith.constant dense<0xFF800000> : vector<8xf32>
      %49 = vector.multi_reduction <maximumf>, %44, %cst_25 [1] : vector<8x8xf32> to vector<8xf32>
      %50 = vector.shape_cast %49 : vector<8xf32> to vector<8x1xf32>
      %51 = arith.maximumf %46, %50 : vector<8x1xf32>
      %52 = arith.subf %46, %51 : vector<8x1xf32>
      %53 = math.exp %52 : vector<8x1xf32>
      %54 = vector.broadcast %51 : vector<8x1xf32> to vector<8x8xf32>
      %55 = arith.subf %44, %54 : vector<8x8xf32>
      %56 = math.exp %55 : vector<8x8xf32>
      %57 = arith.mulf %53, %48 : vector<8x1xf32>
      %cst_26 = arith.constant dense<0.000000e+00> : vector<8xf32>
      %58 = vector.multi_reduction <add>, %56, %cst_26 [1] : vector<8x8xf32> to vector<8xf32>
      %59 = vector.shape_cast %58 : vector<8xf32> to vector<8x1xf32>
      %60 = arith.addf %57, %59 : vector<8x1xf32>
      %c0_27 = arith.constant 0 : index
      %c0_28 = arith.constant 0 : index
      %c0_29 = arith.constant 0 : index
      %61 = vector.load %arg16[%c0_27, %c0_28, %c0_29] : memref<4x8x1xf32, #tpu.memory_space<vmem>>, vector<1x8x1xf32>
      %62 = vector.shape_cast %61 : vector<1x8x1xf32> to vector<8x1xf32>
      %63 = vector.shape_cast %60 : vector<8x1xf32> to vector<1x8x1xf32>
      tpu.vector_store %arg16[%c0_27, %c0_28, %c0_29], %63 {strides = array<i32>} : memref<4x8x1xf32, #tpu.memory_space<vmem>>, vector<1x8x1xf32>,
      %c0_30 = arith.constant 0 : index
      %c0_31 = arith.constant 0 : index
      %c0_32 = arith.constant 0 : index
      %64 = vector.load %arg15[%c0_30, %c0_31, %c0_32] : memref<4x8x1xf32, #tpu.memory_space<vmem>>, vector<1x8x1xf32>
      %65 = vector.shape_cast %64 : vector<1x8x1xf32> to vector<8x1xf32>
      %66 = vector.shape_cast %51 : vector<8x1xf32> to vector<1x8x1xf32>
      tpu.vector_store %arg15[%c0_30, %c0_31, %c0_32], %66 {strides = array<i32>} : memref<4x8x1xf32, #tpu.memory_space<vmem>>, vector<1x8x1xf32>,
      %67 = arith.truncf %56 : vector<8x8xf32> to vector<8x8xbf16>
      %68 = vector.extract_strided_slice %18 {offsets = [0, 0], sizes = [8, 8], strides = [1, 1]} : vector<8x32xbf16> to vector<8x8xbf16>
      %cst_33 = arith.constant dense<0.000000e+00> : vector<8x8xf32>
      %69 = tpu.matmul %67, %68, %cst_33 {dimension_numbers = #tpu.dot_dimension_numbers<[1], [0], [0], [1], [0, 0, 1, 1], [], []>} : vector<8x8xbf16>, vector<8x8xbf16>, vector<8x8xf32> -> vector<8x8xf32>
      %c0_34 = arith.constant 0 : index
      %c0_35 = arith.constant 0 : index
      %70 = vector.load %arg17[%c0_34, %c0_35] : memref<8x32xf32, #tpu.memory_space<vmem>>, vector<8x8xf32>
      %71 = vector.broadcast %53 : vector<8x1xf32> to vector<8x8xf32>
      %72 = arith.mulf %71, %70 : vector<8x8xf32>
      %73 = arith.addf %72, %69 : vector<8x8xf32>
      %c0_36 = arith.constant 0 : index
      %c0_37 = arith.constant 0 : index
      %74 = vector.load %arg17[%c0_36, %c0_37] : memref<8x32xf32, #tpu.memory_space<vmem>>, vector<8x8xf32>
      tpu.vector_store %arg17[%c0_36, %c0_37], %73 {strides = array<i32>} : memref<8x32xf32, #tpu.memory_space<vmem>>, vector<8x8xf32>,
      %c0_38 = arith.constant 0 : index
      %c4 = arith.constant 4 : index
      %75 = vector.load %arg14[%c0_38, %c4] : memref<8x32xbf16, #tpu.memory_space<vmem>>, vector<8x4xbf16>
      %76 = vector.extract_strided_slice %22 {offsets = [0, 4], sizes = [8, 4], strides = [1, 1]} : vector<8x16xbf16> to vector<8x4xbf16>
      %cst_39 = arith.constant dense<0.000000e+00> : vector<8x8xf32>
      %77 = tpu.matmul %75, %76, %cst_39 {dimension_numbers = #tpu.dot_dimension_numbers<[1], [1], [0], [0], [0, 0, 1, 0], [], []>} : vector<8x4xbf16>, vector<8x4xbf16>, vector<8x8xf32> -> vector<8x8xf32>
      %c0_40 = arith.constant 0 : index
      %c20 = arith.constant 20 : index
      %78 = vector.load %arg14[%c0_40, %c20] : memref<8x32xbf16, #tpu.memory_space<vmem>>, vector<8x4xbf16>
      %79 = vector.extract_strided_slice %26 {offsets = [0, 4], sizes = [8, 4], strides = [1, 1]} : vector<8x16xbf16> to vector<8x4xbf16>
      %cst_41 = arith.constant dense<0.000000e+00> : vector<8x8xf32>
      %80 = tpu.matmul %78, %79, %cst_41 {dimension_numbers = #tpu.dot_dimension_numbers<[1], [1], [0], [0], [0, 0, 1, 0], [], []>} : vector<8x4xbf16>, vector<8x4xbf16>, vector<8x8xf32> -> vector<8x8xf32>
      %81 = arith.addf %77, %80 : vector<8x8xf32>
      %cst_42 = arith.constant 0xFF800000 : f32
      %82 = vector.broadcast %cst_42 : f32 to vector<8x8xf32>
      %83 = arith.select %35, %81, %82 : vector<8x8xi1>, vector<8x8xf32>
      %c1 = arith.constant 1 : index
      %c0_43 = arith.constant 0 : index
      %c0_44 = arith.constant 0 : index
      %84 = vector.load %arg15[%c1, %c0_43, %c0_44] : memref<4x8x1xf32, #tpu.memory_space<vmem>>, vector<1x8x1xf32>
      %85 = vector.shape_cast %84 : vector<1x8x1xf32> to vector<8x1xf32>
      %c1_45 = arith.constant 1 : index
      %c0_46 = arith.constant 0 : index
      %c0_47 = arith.constant 0 : index
      %86 = vector.load %arg16[%c1_45, %c0_46, %c0_47] : memref<4x8x1xf32, #tpu.memory_space<vmem>>, vector<1x8x1xf32>
      %87 = vector.shape_cast %86 : vector<1x8x1xf32> to vector<8x1xf32>
      %cst_48 = arith.constant dense<0xFF800000> : vector<8xf32>
      %88 = vector.multi_reduction <maximumf>, %83, %cst_48 [1] : vector<8x8xf32> to vector<8xf32>
      %89 = vector.shape_cast %88 : vector<8xf32> to vector<8x1xf32>
      %90 = arith.maximumf %85, %89 : vector<8x1xf32>
      %91 = arith.subf %85, %90 : vector<8x1xf32>
      %92 = math.exp %91 : vector<8x1xf32>
      %93 = vector.broadcast %90 : vector<8x1xf32> to vector<8x8xf32>
      %94 = arith.subf %83, %93 : vector<8x8xf32>
      %95 = math.exp %94 : vector<8x8xf32>
      %96 = arith.mulf %92, %87 : vector<8x1xf32>
      %cst_49 = arith.constant dense<0.000000e+00> : vector<8xf32>
      %97 = vector.multi_reduction <add>, %95, %cst_49 [1] : vector<8x8xf32> to vector<8xf32>
      %98 = vector.shape_cast %97 : vector<8xf32> to vector<8x1xf32>
      %99 = arith.addf %96, %98 : vector<8x1xf32>
      %c1_50 = arith.constant 1 : index
      %c0_51 = arith.constant 0 : index
      %c0_52 = arith.constant 0 : index
      %100 = vector.load %arg16[%c1_50, %c0_51, %c0_52] : memref<4x8x1xf32, #tpu.memory_space<vmem>>, vector<1x8x1xf32>
      %101 = vector.shape_cast %100 : vector<1x8x1xf32> to vector<8x1xf32>
      %102 = vector.shape_cast %99 : vector<8x1xf32> to vector<1x8x1xf32>
      tpu.vector_store %arg16[%c1_50, %c0_51, %c0_52], %102 {strides = array<i32>} : memref<4x8x1xf32, #tpu.memory_space<vmem>>, vector<1x8x1xf32>,
      %c1_53 = arith.constant 1 : index
      %c0_54 = arith.constant 0 : index
      %c0_55 = arith.constant 0 : index
      %103 = vector.load %arg15[%c1_53, %c0_54, %c0_55] : memref<4x8x1xf32, #tpu.memory_space<vmem>>, vector<1x8x1xf32>
      %104 = vector.shape_cast %103 : vector<1x8x1xf32> to vector<8x1xf32>
      %105 = vector.shape_cast %90 : vector<8x1xf32> to vector<1x8x1xf32>
      tpu.vector_store %arg15[%c1_53, %c0_54, %c0_55], %105 {strides = array<i32>} : memref<4x8x1xf32, #tpu.memory_space<vmem>>, vector<1x8x1xf32>,
      %106 = arith.truncf %95 : vector<8x8xf32> to vector<8x8xbf16>
      %107 = vector.extract_strided_slice %18 {offsets = [0, 8], sizes = [8, 8], strides = [1, 1]} : vector<8x32xbf16> to vector<8x8xbf16>
      %cst_56 = arith.constant dense<0.000000e+00> : vector<8x8xf32>
      %108 = tpu.matmul %106, %107, %cst_56 {dimension_numbers = #tpu.dot_dimension_numbers<[1], [0], [0], [1], [0, 0, 1, 1], [], []>} : vector<8x8xbf16>, vector<8x8xbf16>, vector<8x8xf32> -> vector<8x8xf32>
      %c0_57 = arith.constant 0 : index
      %c8 = arith.constant 8 : index
      %109 = vector.load %arg17[%c0_57, %c8] : memref<8x32xf32, #tpu.memory_space<vmem>>, vector<8x8xf32>
      %110 = vector.broadcast %92 : vector<8x1xf32> to vector<8x8xf32>
      %111 = arith.mulf %110, %109 : vector<8x8xf32>
      %112 = arith.addf %111, %108 : vector<8x8xf32>
      %c0_58 = arith.constant 0 : index
      %c8_59 = arith.constant 8 : index
      %113 = vector.load %arg17[%c0_58, %c8_59] : memref<8x32xf32, #tpu.memory_space<vmem>>, vector<8x8xf32>
      tpu.vector_store %arg17[%c0_58, %c8_59], %112 {strides = array<i32>} : memref<8x32xf32, #tpu.memory_space<vmem>>, vector<8x8xf32>,
      %c0_60 = arith.constant 0 : index
      %c8_61 = arith.constant 8 : index
      %114 = vector.load %arg14[%c0_60, %c8_61] : memref<8x32xbf16, #tpu.memory_space<vmem>>, vector<8x4xbf16>
      %115 = vector.extract_strided_slice %22 {offsets = [0, 8], sizes = [8, 4], strides = [1, 1]} : vector<8x16xbf16> to vector<8x4xbf16>
      %cst_62 = arith.constant dense<0.000000e+00> : vector<8x8xf32>
      %116 = tpu.matmul %114, %115, %cst_62 {dimension_numbers = #tpu.dot_dimension_numbers<[1], [1], [0], [0], [0, 0, 1, 0], [], []>} : vector<8x4xbf16>, vector<8x4xbf16>, vector<8x8xf32> -> vector<8x8xf32>
      %c0_63 = arith.constant 0 : index
      %c24 = arith.constant 24 : index
      %117 = vector.load %arg14[%c0_63, %c24] : memref<8x32xbf16, #tpu.memory_space<vmem>>, vector<8x4xbf16>
      %118 = vector.extract_strided_slice %26 {offsets = [0, 8], sizes = [8, 4], strides = [1, 1]} : vector<8x16xbf16> to vector<8x4xbf16>
      %cst_64 = arith.constant dense<0.000000e+00> : vector<8x8xf32>
      %119 = tpu.matmul %117, %118, %cst_64 {dimension_numbers = #tpu.dot_dimension_numbers<[1], [1], [0], [0], [0, 0, 1, 0], [], []>} : vector<8x4xbf16>, vector<8x4xbf16>, vector<8x8xf32> -> vector<8x8xf32>
      %120 = arith.addf %116, %119 : vector<8x8xf32>
      %cst_65 = arith.constant 0xFF800000 : f32
      %121 = vector.broadcast %cst_65 : f32 to vector<8x8xf32>
      %122 = arith.select %35, %120, %121 : vector<8x8xi1>, vector<8x8xf32>
      %c2 = arith.constant 2 : index
      %c0_66 = arith.constant 0 : index
      %c0_67 = arith.constant 0 : index
      %123 = vector.load %arg15[%c2, %c0_66, %c0_67] : memref<4x8x1xf32, #tpu.memory_space<vmem>>, vector<1x8x1xf32>
      %124 = vector.shape_cast %123 : vector<1x8x1xf32> to vector<8x1xf32>
      %c2_68 = arith.constant 2 : index
      %c0_69 = arith.constant 0 : index
      %c0_70 = arith.constant 0 : index
      %125 = vector.load %arg16[%c2_68, %c0_69, %c0_70] : memref<4x8x1xf32, #tpu.memory_space<vmem>>, vector<1x8x1xf32>
      %126 = vector.shape_cast %125 : vector<1x8x1xf32> to vector<8x1xf32>
      %cst_71 = arith.constant dense<0xFF800000> : vector<8xf32>
      %127 = vector.multi_reduction <maximumf>, %122, %cst_71 [1] : vector<8x8xf32> to vector<8xf32>
      %128 = vector.shape_cast %127 : vector<8xf32> to vector<8x1xf32>
      %129 = arith.maximumf %124, %128 : vector<8x1xf32>
      %130 = arith.subf %124, %129 : vector<8x1xf32>
      %131 = math.exp %130 : vector<8x1xf32>
      %132 = vector.broadcast %129 : vector<8x1xf32> to vector<8x8xf32>
      %133 = arith.subf %122, %132 : vector<8x8xf32>
      %134 = math.exp %133 : vector<8x8xf32>
      %135 = arith.mulf %131, %126 : vector<8x1xf32>
      %cst_72 = arith.constant dense<0.000000e+00> : vector<8xf32>
      %136 = vector.multi_reduction <add>, %134, %cst_72 [1] : vector<8x8xf32> to vector<8xf32>
      %137 = vector.shape_cast %136 : vector<8xf32> to vector<8x1xf32>
      %138 = arith.addf %135, %137 : vector<8x1xf32>
      %c2_73 = arith.constant 2 : index
      %c0_74 = arith.constant 0 : index
      %c0_75 = arith.constant 0 : index
      %139 = vector.load %arg16[%c2_73, %c0_74, %c0_75] : memref<4x8x1xf32, #tpu.memory_space<vmem>>, vector<1x8x1xf32>
      %140 = vector.shape_cast %139 : vector<1x8x1xf32> to vector<8x1xf32>
      %141 = vector.shape_cast %138 : vector<8x1xf32> to vector<1x8x1xf32>
      tpu.vector_store %arg16[%c2_73, %c0_74, %c0_75], %141 {strides = array<i32>} : memref<4x8x1xf32, #tpu.memory_space<vmem>>, vector<1x8x1xf32>,
      %c2_76 = arith.constant 2 : index
      %c0_77 = arith.constant 0 : index
      %c0_78 = arith.constant 0 : index
      %142 = vector.load %arg15[%c2_76, %c0_77, %c0_78] : memref<4x8x1xf32, #tpu.memory_space<vmem>>, vector<1x8x1xf32>
      %143 = vector.shape_cast %142 : vector<1x8x1xf32> to vector<8x1xf32>
      %144 = vector.shape_cast %129 : vector<8x1xf32> to vector<1x8x1xf32>
      tpu.vector_store %arg15[%c2_76, %c0_77, %c0_78], %144 {strides = array<i32>} : memref<4x8x1xf32, #tpu.memory_space<vmem>>, vector<1x8x1xf32>,
      %145 = arith.truncf %134 : vector<8x8xf32> to vector<8x8xbf16>
      %146 = vector.extract_strided_slice %18 {offsets = [0, 16], sizes = [8, 8], strides = [1, 1]} : vector<8x32xbf16> to vector<8x8xbf16>
      %cst_79 = arith.constant dense<0.000000e+00> : vector<8x8xf32>
      %147 = tpu.matmul %145, %146, %cst_79 {dimension_numbers = #tpu.dot_dimension_numbers<[1], [0], [0], [1], [0, 0, 1, 1], [], []>} : vector<8x8xbf16>, vector<8x8xbf16>, vector<8x8xf32> -> vector<8x8xf32>
      %c0_80 = arith.constant 0 : index
      %c16_81 = arith.constant 16 : index
      %148 = vector.load %arg17[%c0_80, %c16_81] : memref<8x32xf32, #tpu.memory_space<vmem>>, vector<8x8xf32>
      %149 = vector.broadcast %131 : vector<8x1xf32> to vector<8x8xf32>
      %150 = arith.mulf %149, %148 : vector<8x8xf32>
      %151 = arith.addf %150, %147 : vector<8x8xf32>
      %c0_82 = arith.constant 0 : index
      %c16_83 = arith.constant 16 : index
      %152 = vector.load %arg17[%c0_82, %c16_83] : memref<8x32xf32, #tpu.memory_space<vmem>>, vector<8x8xf32>
      tpu.vector_store %arg17[%c0_82, %c16_83], %151 {strides = array<i32>} : memref<8x32xf32, #tpu.memory_space<vmem>>, vector<8x8xf32>,
      %c0_84 = arith.constant 0 : index
      %c12 = arith.constant 12 : index
      %153 = vector.load %arg14[%c0_84, %c12] : memref<8x32xbf16, #tpu.memory_space<vmem>>, vector<8x4xbf16>
      %154 = vector.extract_strided_slice %22 {offsets = [0, 12], sizes = [8, 4], strides = [1, 1]} : vector<8x16xbf16> to vector<8x4xbf16>
      %cst_85 = arith.constant dense<0.000000e+00> : vector<8x8xf32>
      %155 = tpu.matmul %153, %154, %cst_85 {dimension_numbers = #tpu.dot_dimension_numbers<[1], [1], [0], [0], [0, 0, 1, 0], [], []>} : vector<8x4xbf16>, vector<8x4xbf16>, vector<8x8xf32> -> vector<8x8xf32>
      %c0_86 = arith.constant 0 : index
      %c28 = arith.constant 28 : index
      %156 = vector.load %arg14[%c0_86, %c28] : memref<8x32xbf16, #tpu.memory_space<vmem>>, vector<8x4xbf16>
      %157 = vector.extract_strided_slice %26 {offsets = [0, 12], sizes = [8, 4], strides = [1, 1]} : vector<8x16xbf16> to vector<8x4xbf16>
      %cst_87 = arith.constant dense<0.000000e+00> : vector<8x8xf32>
      %158 = tpu.matmul %156, %157, %cst_87 {dimension_numbers = #tpu.dot_dimension_numbers<[1], [1], [0], [0], [0, 0, 1, 0], [], []>} : vector<8x4xbf16>, vector<8x4xbf16>, vector<8x8xf32> -> vector<8x8xf32>
      %159 = arith.addf %155, %158 : vector<8x8xf32>
      %cst_88 = arith.constant 0xFF800000 : f32
      %160 = vector.broadcast %cst_88 : f32 to vector<8x8xf32>
      %161 = arith.select %35, %159, %160 : vector<8x8xi1>, vector<8x8xf32>
      %c3 = arith.constant 3 : index
      %c0_89 = arith.constant 0 : index
      %c0_90 = arith.constant 0 : index
      %162 = vector.load %arg15[%c3, %c0_89, %c0_90] : memref<4x8x1xf32, #tpu.memory_space<vmem>>, vector<1x8x1xf32>
      %163 = vector.shape_cast %162 : vector<1x8x1xf32> to vector<8x1xf32>
      %c3_91 = arith.constant 3 : index
      %c0_92 = arith.constant 0 : index
      %c0_93 = arith.constant 0 : index
      %164 = vector.load %arg16[%c3_91, %c0_92, %c0_93] : memref<4x8x1xf32, #tpu.memory_space<vmem>>, vector<1x8x1xf32>
      %165 = vector.shape_cast %164 : vector<1x8x1xf32> to vector<8x1xf32>
      %cst_94 = arith.constant dense<0xFF800000> : vector<8xf32>
      %166 = vector.multi_reduction <maximumf>, %161, %cst_94 [1] : vector<8x8xf32> to vector<8xf32>
      %167 = vector.shape_cast %166 : vector<8xf32> to vector<8x1xf32>
      %168 = arith.maximumf %163, %167 : vector<8x1xf32>
      %169 = arith.subf %163, %168 : vector<8x1xf32>
      %170 = math.exp %169 : vector<8x1xf32>
      %171 = vector.broadcast %168 : vector<8x1xf32> to vector<8x8xf32>
      %172 = arith.subf %161, %171 : vector<8x8xf32>
      %173 = math.exp %172 : vector<8x8xf32>
      %174 = arith.mulf %170, %165 : vector<8x1xf32>
      %cst_95 = arith.constant dense<0.000000e+00> : vector<8xf32>
      %175 = vector.multi_reduction <add>, %173, %cst_95 [1] : vector<8x8xf32> to vector<8xf32>
      %176 = vector.shape_cast %175 : vector<8xf32> to vector<8x1xf32>
      %177 = arith.addf %174, %176 : vector<8x1xf32>
      %c3_96 = arith.constant 3 : index
      %c0_97 = arith.constant 0 : index
      %c0_98 = arith.constant 0 : index
      %178 = vector.load %arg16[%c3_96, %c0_97, %c0_98] : memref<4x8x1xf32, #tpu.memory_space<vmem>>, vector<1x8x1xf32>
      %179 = vector.shape_cast %178 : vector<1x8x1xf32> to vector<8x1xf32>
      %180 = vector.shape_cast %177 : vector<8x1xf32> to vector<1x8x1xf32>
      tpu.vector_store %arg16[%c3_96, %c0_97, %c0_98], %180 {strides = array<i32>} : memref<4x8x1xf32, #tpu.memory_space<vmem>>, vector<1x8x1xf32>,
      %c3_99 = arith.constant 3 : index
      %c0_100 = arith.constant 0 : index
      %c0_101 = arith.constant 0 : index
      %181 = vector.load %arg15[%c3_99, %c0_100, %c0_101] : memref<4x8x1xf32, #tpu.memory_space<vmem>>, vector<1x8x1xf32>
      %182 = vector.shape_cast %181 : vector<1x8x1xf32> to vector<8x1xf32>
      %183 = vector.shape_cast %168 : vector<8x1xf32> to vector<1x8x1xf32>
      tpu.vector_store %arg15[%c3_99, %c0_100, %c0_101], %183 {strides = array<i32>} : memref<4x8x1xf32, #tpu.memory_space<vmem>>, vector<1x8x1xf32>,
      %184 = arith.truncf %173 : vector<8x8xf32> to vector<8x8xbf16>
      %185 = vector.extract_strided_slice %18 {offsets = [0, 24], sizes = [8, 8], strides = [1, 1]} : vector<8x32xbf16> to vector<8x8xbf16>
      %cst_102 = arith.constant dense<0.000000e+00> : vector<8x8xf32>
      %186 = tpu.matmul %184, %185, %cst_102 {dimension_numbers = #tpu.dot_dimension_numbers<[1], [0], [0], [1], [0, 0, 1, 1], [], []>} : vector<8x8xbf16>, vector<8x8xbf16>, vector<8x8xf32> -> vector<8x8xf32>
      %c0_103 = arith.constant 0 : index
      %c24_104 = arith.constant 24 : index
      %187 = vector.load %arg17[%c0_103, %c24_104] : memref<8x32xf32, #tpu.memory_space<vmem>>, vector<8x8xf32>
      %188 = vector.broadcast %170 : vector<8x1xf32> to vector<8x8xf32>
      %189 = arith.mulf %188, %187 : vector<8x8xf32>
      %190 = arith.addf %189, %186 : vector<8x8xf32>
      %c0_105 = arith.constant 0 : index
      %c24_106 = arith.constant 24 : index
      %191 = vector.load %arg17[%c0_105, %c24_106] : memref<8x32xf32, #tpu.memory_space<vmem>>, vector<8x8xf32>
      tpu.vector_store %arg17[%c0_105, %c24_106], %190 {strides = array<i32>} : memref<8x32xf32, #tpu.memory_space<vmem>>, vector<8x8xf32>,
    } else {
    }
    %c0_i32_2 = arith.constant 0 : i32
    %6 = arith.cmpi eq, %arg2, %c0_i32_2 : i32
    %7 = arith.extui %6 : i1 to i32
    %c0_i32_3 = arith.constant 0 : i32
    %8 = arith.cmpi ne, %7, %c0_i32_3 : i32
    scf.if %8 {
      %c0 = arith.constant 0 : index
      %c0_4 = arith.constant 0 : index
      %c0_5 = arith.constant 0 : index
      %9 = vector.load %arg16[%c0, %c0_4, %c0_5] : memref<4x8x1xf32, #tpu.memory_space<vmem>>, vector<1x8x1xf32>
      %10 = vector.shape_cast %9 : vector<1x8x1xf32> to vector<8x1xf32>
      %11 = tpu.reciprocal %10 {approx = true} : vector<8x1xf32> -> vector<8x1xf32>
      %c0_6 = arith.constant 0 : index
      %c0_7 = arith.constant 0 : index
      %12 = vector.load %arg17[%c0_6, %c0_7] : memref<8x32xf32, #tpu.memory_space<vmem>>, vector<8x8xf32>
      %13 = vector.broadcast %11 : vector<8x1xf32> to vector<8x8xf32>
      %14 = arith.mulf %12, %13 : vector<8x8xf32>
      %15 = arith.truncf %14 : vector<8x8xf32> to vector<8x8xbf16>
      %c0_8 = arith.constant 0 : index
      %c0_9 = arith.constant 0 : index
      %16 = vector.load %arg14[%c0_8, %c0_9] : memref<8x32xbf16, #tpu.memory_space<vmem>>, vector<8x8xbf16>
      tpu.vector_store %arg14[%c0_8, %c0_9], %15 {strides = array<i32>} : memref<8x32xbf16, #tpu.memory_space<vmem>>, vector<8x8xbf16>,
      %c1 = arith.constant 1 : index
      %c0_10 = arith.constant 0 : index
      %c0_11 = arith.constant 0 : index
      %17 = vector.load %arg16[%c1, %c0_10, %c0_11] : memref<4x8x1xf32, #tpu.memory_space<vmem>>, vector<1x8x1xf32>
      %18 = vector.shape_cast %17 : vector<1x8x1xf32> to vector<8x1xf32>
      %19 = tpu.reciprocal %18 {approx = true} : vector<8x1xf32> -> vector<8x1xf32>
      %c0_12 = arith.constant 0 : index
      %c8 = arith.constant 8 : index
      %20 = vector.load %arg17[%c0_12, %c8] : memref<8x32xf32, #tpu.memory_space<vmem>>, vector<8x8xf32>
      %21 = vector.broadcast %19 : vector<8x1xf32> to vector<8x8xf32>
      %22 = arith.mulf %20, %21 : vector<8x8xf32>
      %23 = arith.truncf %22 : vector<8x8xf32> to vector<8x8xbf16>
      %c0_13 = arith.constant 0 : index
      %c8_14 = arith.constant 8 : index
      %24 = vector.load %arg14[%c0_13, %c8_14] : memref<8x32xbf16, #tpu.memory_space<vmem>>, vector<8x8xbf16>
      tpu.vector_store %arg14[%c0_13, %c8_14], %23 {strides = array<i32>} : memref<8x32xbf16, #tpu.memory_space<vmem>>, vector<8x8xbf16>,
      %c2 = arith.constant 2 : index
      %c0_15 = arith.constant 0 : index
      %c0_16 = arith.constant 0 : index
      %25 = vector.load %arg16[%c2, %c0_15, %c0_16] : memref<4x8x1xf32, #tpu.memory_space<vmem>>, vector<1x8x1xf32>
      %26 = vector.shape_cast %25 : vector<1x8x1xf32> to vector<8x1xf32>
      %27 = tpu.reciprocal %26 {approx = true} : vector<8x1xf32> -> vector<8x1xf32>
      %c0_17 = arith.constant 0 : index
      %c16 = arith.constant 16 : index
      %28 = vector.load %arg17[%c0_17, %c16] : memref<8x32xf32, #tpu.memory_space<vmem>>, vector<8x8xf32>
      %29 = vector.broadcast %27 : vector<8x1xf32> to vector<8x8xf32>
      %30 = arith.mulf %28, %29 : vector<8x8xf32>
      %31 = arith.truncf %30 : vector<8x8xf32> to vector<8x8xbf16>
      %c0_18 = arith.constant 0 : index
      %c16_19 = arith.constant 16 : index
      %32 = vector.load %arg14[%c0_18, %c16_19] : memref<8x32xbf16, #tpu.memory_space<vmem>>, vector<8x8xbf16>
      tpu.vector_store %arg14[%c0_18, %c16_19], %31 {strides = array<i32>} : memref<8x32xbf16, #tpu.memory_space<vmem>>, vector<8x8xbf16>,
      %c3 = arith.constant 3 : index
      %c0_20 = arith.constant 0 : index
      %c0_21 = arith.constant 0 : index
      %33 = vector.load %arg16[%c3, %c0_20, %c0_21] : memref<4x8x1xf32, #tpu.memory_space<vmem>>, vector<1x8x1xf32>
      %34 = vector.shape_cast %33 : vector<1x8x1xf32> to vector<8x1xf32>
      %35 = tpu.reciprocal %34 {approx = true} : vector<8x1xf32> -> vector<8x1xf32>
      %c0_22 = arith.constant 0 : index
      %c24 = arith.constant 24 : index
      %36 = vector.load %arg17[%c0_22, %c24] : memref<8x32xf32, #tpu.memory_space<vmem>>, vector<8x8xf32>
      %37 = vector.broadcast %35 : vector<8x1xf32> to vector<8x8xf32>
      %38 = arith.mulf %36, %37 : vector<8x8xf32>
      %39 = arith.truncf %38 : vector<8x8xf32> to vector<8x8xbf16>
      %c0_23 = arith.constant 0 : index
      %c24_24 = arith.constant 24 : index
      %40 = vector.load %arg14[%c0_23, %c24_24] : memref<8x32xbf16, #tpu.memory_space<vmem>>, vector<8x8xbf16>
      tpu.vector_store %arg14[%c0_23, %c24_24], %39 {strides = array<i32>} : memref<8x32xbf16, #tpu.memory_space<vmem>>, vector<8x8xbf16>,
      %c0_25 = arith.constant 0 : index
      %c0_26 = arith.constant 0 : index
      %41 = vector.load %arg14[%c0_25, %c0_26] : memref<8x32xbf16, #tpu.memory_space<vmem>>, vector<8x32xbf16>
      %c0_27 = arith.constant 0 : index
      %c0_28 = arith.constant 0 : index
      %42 = vector.load %arg11[%c0_27, %c0_28] : memref<32x32xbf16, #tpu.memory_space<vmem>>, vector<32x32xbf16>
      %cst = arith.constant dense<0.000000e+00> : vector<8x32xf32>
      %43 = tpu.matmul %41, %42, %cst {dimension_numbers = #tpu.dot_dimension_numbers<[1], [0], [0], [1], [0, 0, 1, 1], [], []>} : vector<8x32xbf16>, vector<32x32xbf16>, vector<8x32xf32> -> vector<8x32xf32>
      %c0_29 = arith.constant 0 : index
      %c0_30 = arith.constant 0 : index
      %44 = vector.load %arg12[%c0_29, %c0_30] : memref<1x32xf32, #tpu.memory_space<vmem>>, vector<1x32xf32>
      %45 = vector.broadcast %44 : vector<1x32xf32> to vector<8x32xf32>
      %46 = arith.addf %43, %45 : vector<8x32xf32>
      %47 = arith.truncf %46 : vector<8x32xf32> to vector<8x32xbf16>
      %c0_31 = arith.constant 0 : index
      %c0_32 = arith.constant 0 : index
      %c0_33 = arith.constant 0 : index
      %48 = vector.load %arg13[%c0_31, %c0_32, %c0_33] : memref<1x8x32xbf16, #tpu.memory_space<vmem>>, vector<1x8x32xbf16>
      %49 = vector.shape_cast %48 : vector<1x8x32xbf16> to vector<8x32xbf16>
      %50 = vector.shape_cast %47 : vector<8x32xbf16> to vector<1x8x32xbf16>
      tpu.vector_store %arg13[%c0_31, %c0_32, %c0_33], %50 {strides = array<i32>} : memref<1x8x32xbf16, #tpu.memory_space<vmem>>, vector<1x8x32xbf16>,
    } else {
    }
    return
  }
  func.func @transform_0(%arg0: i32, %arg1: i32, %arg2: i32) -> (i32, i32, i32) {
    %c0_i32 = arith.constant 0 : i32
    %c0_i32_0 = arith.constant 0 : i32
    return %arg0, %arg1, %c0_i32 : i32, i32, i32
  }
  func.func @transform_1(%arg0: i32, %arg1: i32, %arg2: i32) -> (i32, i32, i32) {
    %c0_i32 = arith.constant 0 : i32
    %c0_i32_0 = arith.constant 0 : i32
    return %arg0, %arg2, %c0_i32 : i32, i32, i32
  }
  func.func @transform_2(%arg0: i32, %arg1: i32, %arg2: i32) -> (i32, i32) {
    %c0_i32 = arith.constant 0 : i32
    %c0_i32_0 = arith.constant 0 : i32
    %c0_i32_1 = arith.constant 0 : i32
    return %c0_i32, %c0_i32_0 : i32, i32
  }
  func.func @transform_3(%arg0: i32, %arg1: i32, %arg2: i32) -> (i32, i32) {
    %c0_i32 = arith.constant 0 : i32
    %c0_i32_0 = arith.constant 0 : i32
    %c0_i32_1 = arith.constant 0 : i32
    return %c0_i32, %c0_i32_0 : i32, i32
  }
  func.func @transform_4(%arg0: i32, %arg1: i32, %arg2: i32) -> (i32, i32) {
    %c0_i32 = arith.constant 0 : i32
    %c0_i32_0 = arith.constant 0 : i32
    return %arg1, %c0_i32 : i32, i32
  }
  func.func @transform_5(%arg0: i32, %arg1: i32, %arg2: i32) -> (i32, i32) {
    %c0_i32 = arith.constant 0 : i32
    %c0_i32_0 = arith.constant 0 : i32
    return %arg1, %c0_i32 : i32, i32
  }
  func.func @transform_6(%arg0: i32, %arg1: i32, %arg2: i32) -> (i32, i32) {
    %c0_i32 = arith.constant 0 : i32
    %c0_i32_0 = arith.constant 0 : i32
    return %arg2, %c0_i32 : i32, i32
  }
  func.func @transform_7(%arg0: i32, %arg1: i32, %arg2: i32) -> (i32, i32) {
    %c0_i32 = arith.constant 0 : i32
    %c0_i32_0 = arith.constant 0 : i32
    return %arg2, %c0_i32 : i32, i32
  }
  func.func @transform_8(%arg0: i32, %arg1: i32, %arg2: i32) -> (i32, i32) {
    %c0_i32 = arith.constant 0 : i32
    %c0_i32_0 = arith.constant 0 : i32
    %c0_i32_1 = arith.constant 0 : i32
    return %c0_i32, %c0_i32_0 : i32, i32
  }
  func.func @transform_9(%arg0: i32, %arg1: i32, %arg2: i32) -> (i32, i32) {
    %c0_i32 = arith.constant 0 : i32
    %c0_i32_0 = arith.constant 0 : i32
    %c0_i32_1 = arith.constant 0 : i32
    return %c0_i32, %c0_i32_0 : i32, i32
  }
  func.func @transform_10(%arg0: i32, %arg1: i32, %arg2: i32) -> (i32, i32, i32) {
    %c0_i32 = arith.constant 0 : i32
    %c0_i32_0 = arith.constant 0 : i32
    return %arg0, %arg1, %c0_i32 : i32, i32, i32
  }
}

</mosaic_0001>

<llo_original>
// kernel: tpu_custom_call.1
$region0: #{tpu_custom_call.1}
  #allocation0 [shape = 'u32[]', space=smem, size = 0x4, offset = 0x4, fixed_abs, tag = 'smem constant byte address 0x4 - core index']
  #allocation1 [shape = 'u32[144,128]{1,0:T(1,128)}', space=vmem, size = 0x12000, scoped, tag = 'internal scratch']
  #allocation2 [shape = 'bf16[8,32]{1,0:T(8,128)(2,1)}', space=vmem, size = 0x800, scoped, tag = 'scratch operand']
  #allocation3 [shape = 'f32[4,8,1]{2,1,0:T(8,128)}', space=vmem, size = 0x4000, scoped, tag = 'scratch operand']
  #allocation4 [shape = 'f32[4,8,1]{2,1,0:T(8,128)}', space=vmem, size = 0x4000, scoped, tag = 'scratch operand']
  #allocation5 [shape = 'f32[8,32]{1,0:T(8,128)}', space=vmem, size = 0x1000, scoped, tag = 'scratch operand']
  %s0 = inlined_call_operand.hbm [shape: bf16[2,8,32], index: 0, kind: input, shape index: {}]
  %s1 = inlined_call_operand.hbm [shape: bf16[2,8,32], index: 1, kind: input, shape index: {}]
  %s2 = inlined_call_operand.hbm [shape: bf16[32,32], index: 2, kind: input, shape index: {}]
  %s3 = inlined_call_operand.hbm [shape: bf16[32,64], index: 3, kind: input, shape index: {}]
  %s4 = inlined_call_operand.vmem [shape: f32[8,16], index: 4, kind: input, shape index: {}]
  %s5 = inlined_call_operand.hbm [shape: f32[8,16], index: 5, kind: input, shape index: {}]
  %s6 = inlined_call_operand.hbm [shape: f32[8,16], index: 6, kind: input, shape index: {}]
  %s7 = inlined_call_operand.hbm [shape: f32[8,16], index: 7, kind: input, shape index: {}]
  %s8 = inlined_call_operand.vmem [shape: bf16[32,32], index: 8, kind: input, shape index: {}]
  %s9 = inlined_call_operand.vmem [shape: f32[1,32], index: 9, kind: input, shape index: {}]
  %s10 = inlined_call_operand.hbm [shape: bf16[2,8,32], index: 10, kind: output, shape index: {}]
  %s11 = sld [smem:[#allocation0]]
  $region113: #{tpu_custom_call.1} parent=0
    _
  %s13 = ssub.s32 1, %s11
  %s14 = scalar_select 0, %s13, %s11
  $region1: #{tpu_custom_call.1} parent=0
    #allocation6 [shape = 'u8[4096]{0}', space=vmem, size = 0x1000, scoped, tag = 'input window, operand 0']
    #allocation7 [shape = 's32[2]{0}', space=sflag, size = 0x8, scoped, tag = 'scoped memory for tpu_custom_call.1']
    #allocation8 [shape = 's32[2]{0}', space=sflag, size = 0x8, scoped, tag = 'scoped memory for tpu_custom_call.1']
    #allocation9 [shape = 'u8[4096]{0}', space=vmem, size = 0x1000, scoped, tag = 'input window, operand 1']
    #allocation10 [shape = 's32[2]{0}', space=sflag, size = 0x8, scoped, tag = 'scoped memory for tpu_custom_call.1']
    #allocation11 [shape = 'u8[8192]{0}', space=vmem, size = 0x2000, scoped, tag = 'input window, operand 2, single buffered']
    #allocation12 [shape = 'u8[8192]{0}', space=vmem, size = 0x2000, scoped, tag = 'input window, operand 3, single buffered']
    #allocation13 [shape = 's32[1]{0}', space=sflag, size = 0x4, scoped, tag = 'scoped memory for tpu_custom_call.1']
    #allocation14 [shape = 'u8[4096]{0}', space=vmem, size = 0x1000, scoped, tag = 'input window, operand 5, single buffered']
    #allocation15 [shape = 'u8[4096]{0}', space=vmem, size = 0x1000, scoped, tag = 'input window, operand 6, single buffered']
    #allocation16 [shape = 's32[1]{0}', space=sflag, size = 0x4, scoped, tag = 'scoped memory for tpu_custom_call.1']
    #allocation17 [shape = 'u8[4096]{0}', space=vmem, size = 0x1000, scoped, tag = 'input window, operand 7, single buffered']
    #allocation18 [shape = 'u8[4096]{0}', space=vmem, size = 0x1000, scoped, tag = 'output window, operand 0']
    %15 = vsyncpa [#allocation7], 0
    %s16 = scalar_lea.sflag [#allocation7], 1
    %17 = vsyncpa %s16, 0
    %18 = vsyncpa [#allocation10], 0
    %s19 = scalar_lea.sflag [#allocation10], 1
    %20 = vsyncpa %s19, 0
    %21 = vsyncpa [#allocation13], 0
    %22 = vsyncpa [#allocation16], 0
    %23 = vsyncpa [#allocation8], 0
    %s24 = scalar_lea.sflag [#allocation8], 1
    %25 = vsyncpa %s24, 0
    loop: start=0, step=1, limit=4
    $region2: #{tpu_custom_call.1} parent=1 // loop_pre_header
      _
    $region3: #{tpu_custom_call.1} parent=1 // loop_header
      %s27 = sphi 0, %s31
      %p28 = scmp.ge.s32.totalorder %s27, 4
      %s34 = sphi 0, %s53
      %s35 = sphi 0, %s49
      %s36 = sphi 0, %s45
      %s37 = sphi 0, %s34
      %s38 = sphi 0, %s35
      %s39 = sphi 0, %s36
      %s40 = sphi 0, %s37
      %s41 = sphi 0, %s38
      %s42 = sphi 0, %s39
      %s58 = sphi 0, %s60
      %s61 = sphi 0, %s58
      %s62 = sphi 0, %s61
      %s78 = sphi 0, %s62
      %s86 = sphi 0, %s88
      %s89 = sphi 0, %s86
      %s90 = sphi 0, %s89
      %s106 = sphi 0, %s90
      %s110 = sphi 0, %s110
      %s112 = sphi 0, %s110
      %s113 = sphi 0, %s112
      %s127 = sphi 0, %s113
      %s131 = sphi 0, %s131
      %s133 = sphi 0, %s131
      %s134 = sphi 0, %s133
      %s148 = sphi 0, %s134
      %s154 = sphi 0, %s156
      %s157 = sphi 0, %s154
      %s158 = sphi 0, %s157
      %s174 = sphi 0, %s158
      %s180 = sphi 0, %s182
      %s183 = sphi 0, %s180
      %s184 = sphi 0, %s183
      %s200 = sphi 0, %s184
      %s206 = sphi 0, %s208
      %s209 = sphi 0, %s206
      %s210 = sphi 0, %s209
      %s226 = sphi 0, %s210
      %s232 = sphi 0, %s234
      %s235 = sphi 0, %s232
      %s236 = sphi 0, %s235
      %s252 = sphi 0, %s236
      %s256 = sphi 0, %s256
      %s258 = sphi 0, %s256
      %s259 = sphi 0, %s258
      %s273 = sphi 0, %s259
      %s277 = sphi 0, %s277
      %s279 = sphi 0, %s277
      %s280 = sphi 0, %s279
      %s294 = sphi 0, %s280
      %s302 = sphi 0, %s304
      %s305 = sphi 0, %s302
      %s306 = sphi 0, %s305
      %s322 = sphi 0, %s306
    $region4: #{tpu_custom_call.1} parent=1 // loop_header_branch
      %30 = sbr.rel (%p28) target = $region8
    $region5: #{tpu_custom_call.1} parent=1 // loop_body
      %s32 = ssub.s32 %s27, 1
      %s33 = ssub.s32 %s27, 2
      %s43 = sadd.s32 1, %s36
      %p44 = scmp.ge.s32.totalorder %s43, 1
      %s45 = scalar_select %p44, 0, %s43
      %s46 = sadd.s32 1, %s35
      %s47 = scalar_select %p44, %s46, %s35
      %p48 = scmp.ge.s32.totalorder %s47, 1
      %s49 = scalar_select %p48, 0, %s47
      %s50 = sadd.s32 1, %s34
      %s51 = scalar_select %p48, %s50, %s34
      %p52 = scmp.ge.s32.totalorder %s51, 2
      %s53 = scalar_select %p52, 0, %s51
      %s54 = ssub.s32 %s34, %s53
      %s55 = ssub.s32 %s35, %s49
      %s56 = sor.u32 %s54, %s55
      %p57 = scmp.eq.s32.totalorder %s56, 0
      %s59 = sadd.s32 %s58, 1
      %s60 = scalar_select %p57, %s58, %s59
      %p63 = pneg %p57
      %p64 = scmp.eq.s32.totalorder %s27, 1
      %p65 = por %p63, %p64
      %p66 = scmp.ne.s32.totalorder %s58, %s61
      %p67 = scmp.eq.s32.totalorder %s27, 0
      %p68 = por %p66, %p67
      %p69 = scmp.ne.s32.totalorder %s58, %s61
      %p70 = scmp.eq.s32.totalorder %s32, 1
      %p71 = por %p69, %p70
      %p72 = scmp.ne.s32.totalorder %s61, %s62
      %p73 = scmp.eq.s32.totalorder %s32, 0
      %p74 = por %p72, %p73
      %p75 = scmp.ne.s32.totalorder %s61, %s62
      %p76 = scmp.eq.s32.totalorder %s33, 1
      %p77 = por %p75, %p76
      %p79 = scmp.ne.s32.totalorder %s62, %s78
      %p80 = scmp.eq.s32.totalorder %s33, 0
      %p81 = por %p79, %p80
      %s82 = ssub.s32 %s34, %s53
      %s83 = ssub.s32 %s36, %s45
      %s84 = sor.u32 %s82, %s83
      %p85 = scmp.eq.s32.totalorder %s84, 0
      %s87 = sadd.s32 %s86, 1
      %s88 = scalar_select %p85, %s86, %s87
      %p91 = pneg %p85
      %p92 = scmp.eq.s32.totalorder %s27, 1
      %p93 = por %p91, %p92
      %p94 = scmp.ne.s32.totalorder %s86, %s89
      %p95 = scmp.eq.s32.totalorder %s27, 0
      %p96 = por %p94, %p95
      %p97 = scmp.ne.s32.totalorder %s86, %s89
      %p98 = scmp.eq.s32.totalorder %s32, 1
      %p99 = por %p97, %p98
      %p100 = scmp.ne.s32.totalorder %s89, %s90
      %p101 = scmp.eq.s32.totalorder %s32, 0
      %p102 = por %p100, %p101
      %p103 = scmp.ne.s32.totalorder %s89, %s90
      %p104 = scmp.eq.s32.totalorder %s33, 1
      %p105 = por %p103, %p104
      %p107 = scmp.ne.s32.totalorder %s90, %s106
      %p108 = scmp.eq.s32.totalorder %s33, 0
      %p109 = por %p107, %p108
      %s111 = sadd.s32 %s110, 1
      %p114 = scmp.eq.s32.totalorder %s27, 1
      %p115 = scmp.ne.s32.totalorder %s110, %s112
      %p116 = scmp.eq.s32.totalorder %s27, 0
      %p117 = por %p115, %p116
      %p118 = scmp.ne.s32.totalorder %s110, %s112
      %p119 = scmp.eq.s32.totalorder %s32, 1
      %p120 = por %p118, %p119
      %p121 = scmp.ne.s32.totalorder %s112, %s113
      %p122 = scmp.eq.s32.totalorder %s32, 0
      %p123 = por %p121, %p122
      %p124 = scmp.ne.s32.totalorder %s112, %s113
      %p125 = scmp.eq.s32.totalorder %s33, 1
      %p126 = por %p124, %p125
      %p128 = scmp.ne.s32.totalorder %s113, %s127
      %p129 = scmp.eq.s32.totalorder %s33, 0
      %p130 = por %p128, %p129
      %s132 = sadd.s32 %s131, 1
      %p135 = scmp.eq.s32.totalorder %s27, 1
      %p136 = scmp.ne.s32.totalorder %s131, %s133
      %p137 = scmp.eq.s32.totalorder %s27, 0
      %p138 = por %p136, %p137
      %p139 = scmp.ne.s32.totalorder %s131, %s133
      %p140 = scmp.eq.s32.totalorder %s32, 1
      %p141 = por %p139, %p140
      %p142 = scmp.ne.s32.totalorder %s133, %s134
      %p143 = scmp.eq.s32.totalorder %s32, 0
      %p144 = por %p142, %p143
      %p145 = scmp.ne.s32.totalorder %s133, %s134
      %p146 = scmp.eq.s32.totalorder %s33, 1
      %p147 = por %p145, %p146
      %p149 = scmp.ne.s32.totalorder %s134, %s148
      %p150 = scmp.eq.s32.totalorder %s33, 0
      %p151 = por %p149, %p150
      %s152 = ssub.s32 %s35, %s49
      %p153 = scmp.eq.s32.totalorder %s152, 0
      %s155 = sadd.s32 %s154, 1
      %s156 = scalar_select %p153, %s154, %s155
      %p159 = pneg %p153
      %p160 = scmp.eq.s32.totalorder %s27, 1
      %p161 = por %p159, %p160
      %p162 = scmp.ne.s32.totalorder %s154, %s157
      %p163 = scmp.eq.s32.totalorder %s27, 0
      %p164 = por %p162, %p163
      %p165 = scmp.ne.s32.totalorder %s154, %s157
      %p166 = scmp.eq.s32.totalorder %s32, 1
      %p167 = por %p165, %p166
      %p168 = scmp.ne.s32.totalorder %s157, %s158
      %p169 = scmp.eq.s32.totalorder %s32, 0
      %p170 = por %p168, %p169
      %p171 = scmp.ne.s32.totalorder %s157, %s158
      %p172 = scmp.eq.s32.totalorder %s33, 1
      %p173 = por %p171, %p172
      %p175 = scmp.ne.s32.totalorder %s158, %s174
      %p176 = scmp.eq.s32.totalorder %s33, 0
      %p177 = por %p175, %p176
      %s178 = ssub.s32 %s35, %s49
      %p179 = scmp.eq.s32.totalorder %s178, 0
      %s181 = sadd.s32 %s180, 1
      %s182 = scalar_select %p179, %s180, %s181
      %p185 = pneg %p179
      %p186 = scmp.eq.s32.totalorder %s27, 1
      %p187 = por %p185, %p186
      %p188 = scmp.ne.s32.totalorder %s180, %s183
      %p189 = scmp.eq.s32.totalorder %s27, 0
      %p190 = por %p188, %p189
      %p191 = scmp.ne.s32.totalorder %s180, %s183
      %p192 = scmp.eq.s32.totalorder %s32, 1
      %p193 = por %p191, %p192
      %p194 = scmp.ne.s32.totalorder %s183, %s184
      %p195 = scmp.eq.s32.totalorder %s32, 0
      %p196 = por %p194, %p195
      %p197 = scmp.ne.s32.totalorder %s183, %s184
      %p198 = scmp.eq.s32.totalorder %s33, 1
      %p199 = por %p197, %p198
      %p201 = scmp.ne.s32.totalorder %s184, %s200
      %p202 = scmp.eq.s32.totalorder %s33, 0
      %p203 = por %p201, %p202
      %s204 = ssub.s32 %s36, %s45
      %p205 = scmp.eq.s32.totalorder %s204, 0
      %s207 = sadd.s32 %s206, 1
      %s208 = scalar_select %p205, %s206, %s207
      %p211 = pneg %p205
      %p212 = scmp.eq.s32.totalorder %s27, 1
      %p213 = por %p211, %p212
      %p214 = scmp.ne.s32.totalorder %s206, %s209
      %p215 = scmp.eq.s32.totalorder %s27, 0
      %p216 = por %p214, %p215
      %p217 = scmp.ne.s32.totalorder %s206, %s209
      %p218 = scmp.eq.s32.totalorder %s32, 1
      %p219 = por %p217, %p218
      %p220 = scmp.ne.s32.totalorder %s209, %s210
      %p221 = scmp.eq.s32.totalorder %s32, 0
      %p222 = por %p220, %p221
      %p223 = scmp.ne.s32.totalorder %s209, %s210
      %p224 = scmp.eq.s32.totalorder %s33, 1
      %p225 = por %p223, %p224
      %p227 = scmp.ne.s32.totalorder %s210, %s226
      %p228 = scmp.eq.s32.totalorder %s33, 0
      %p229 = por %p227, %p228
      %s230 = ssub.s32 %s36, %s45
      %p231 = scmp.eq.s32.totalorder %s230, 0
      %s233 = sadd.s32 %s232, 1
      %s234 = scalar_select %p231, %s232, %s233
      %p237 = pneg %p231
      %p238 = scmp.eq.s32.totalorder %s27, 1
      %p239 = por %p237, %p238
      %p240 = scmp.ne.s32.totalorder %s232, %s235
      %p241 = scmp.eq.s32.totalorder %s27, 0
      %p242 = por %p240, %p241
      %p243 = scmp.ne.s32.totalorder %s232, %s235
      %p244 = scmp.eq.s32.totalorder %s32, 1
      %p245 = por %p243, %p244
      %p246 = scmp.ne.s32.totalorder %s235, %s236
      %p247 = scmp.eq.s32.totalorder %s32, 0
      %p248 = por %p246, %p247
      %p249 = scmp.ne.s32.totalorder %s235, %s236
      %p250 = scmp.eq.s32.totalorder %s33, 1
      %p251 = por %p249, %p250
      %p253 = scmp.ne.s32.totalorder %s236, %s252
      %p254 = scmp.eq.s32.totalorder %s33, 0
      %p255 = por %p253, %p254
      %s257 = sadd.s32 %s256, 1
      %p260 = scmp.eq.s32.totalorder %s27, 1
      %p261 = scmp.ne.s32.totalorder %s256, %s258
      %p262 = scmp.eq.s32.totalorder %s27, 0
      %p263 = por %p261, %p262
      %p264 = scmp.ne.s32.totalorder %s256, %s258
      %p265 = scmp.eq.s32.totalorder %s32, 1
      %p266 = por %p264, %p265
      %p267 = scmp.ne.s32.totalorder %s258, %s259
      %p268 = scmp.eq.s32.totalorder %s32, 0
      %p269 = por %p267, %p268
      %p270 = scmp.ne.s32.totalorder %s258, %s259
      %p271 = scmp.eq.s32.totalorder %s33, 1
      %p272 = por %p270, %p271
      %p274 = scmp.ne.s32.totalorder %s259, %s273
      %p275 = scmp.eq.s32.totalorder %s33, 0
      %p276 = por %p274, %p275
      %s278 = sadd.s32 %s277, 1
      %p281 = scmp.eq.s32.totalorder %s27, 1
      %p282 = scmp.ne.s32.totalorder %s277, %s279
      %p283 = scmp.eq.s32.totalorder %s27, 0
      %p284 = por %p282, %p283
      %p285 = scmp.ne.s32.totalorder %s277, %s279
      %p286 = scmp.eq.s32.totalorder %s32, 1
      %p287 = por %p285, %p286
      %p288 = scmp.ne.s32.totalorder %s279, %s280
      %p289 = scmp.eq.s32.totalorder %s32, 0
      %p290 = por %p288, %p289
      %p291 = scmp.ne.s32.totalorder %s279, %s280
      %p292 = scmp.eq.s32.totalorder %s33, 1
      %p293 = por %p291, %p292
      %p295 = scmp.ne.s32.totalorder %s280, %s294
      %p296 = scmp.eq.s32.totalorder %s33, 0
      %p297 = por %p295, %p296
      %s298 = ssub.s32 %s34, %s53
      %s299 = ssub.s32 %s35, %s49
      %s300 = sor.u32 %s298, %s299
      %p301 = scmp.eq.s32.totalorder %s300, 0
      %s303 = sadd.s32 %s302, 1
      %s304 = scalar_select %p301, %s302, %s303
      %p307 = pneg %p301
      %p308 = scmp.eq.s32.totalorder %s27, 1
      %p309 = por %p307, %p308
      %p310 = scmp.ne.s32.totalorder %s302, %s305
      %p311 = scmp.eq.s32.totalorder %s27, 0
      %p312 = por %p310, %p311
      %p313 = scmp.ne.s32.totalorder %s302, %s305
      %p314 = scmp.eq.s32.totalorder %s32, 1
      %p315 = por %p313, %p314
      %p316 = scmp.ne.s32.totalorder %s305, %s306
      %p317 = scmp.eq.s32.totalorder %s32, 0
      %p318 = por %p316, %p317
      %p319 = scmp.ne.s32.totalorder %s305, %s306
      %p320 = scmp.eq.s32.totalorder %s33, 1
      %p321 = por %p319, %p320
      %p323 = scmp.ne.s32.totalorder %s306, %s322
      %p324 = scmp.eq.s32.totalorder %s33, 0
      %p325 = por %p323, %p324
      %p326 = scmp.le.s32.totalorder 1, %s27
      %p327 = scmp.lt.s32.totalorder %s27, 3
      %p328 = pnand %p326, %p327
      %p329 = pneg %p328
      // Predicated region
      $region9: #{tpu_custom_call.1} parent=5 // pred_check
        _
      $region10: #{tpu_custom_call.1} parent=5 // pred_check_branch
        %331 = sbr.rel (%p328) target = $region12
      $region11: #{tpu_custom_call.1} parent=5 // pred_region
        %s332 = ssub.s32 %s27, 1
        // Predicated region
        $region13: #{tpu_custom_call.1} parent=11 // pred_check
          %p333 = pneg %p123
        $region14: #{tpu_custom_call.1} parent=11 // pred_check_branch
          %335 = sbr.rel (%p333) target = $region16
        $region15: #{tpu_custom_call.1} parent=11 // pred_region
          %s337 = ssub.s32 256, 256
          %338 = vsyncadd [#allocation10], %s337
          %s339 = sshll.u32 [#allocation11], 4
          %s340 = int_to_ptr.vmem [resolvable:$true] %s339
          %345 = dma.hbm_to_vmem [thread:$0]  %s2, 256, %s340, [#allocation10], 64, 64, 4
        $region16: #{tpu_custom_call.1} parent=11 // pred_fallthru
          _
        // Predicated region
        $region17: #{tpu_custom_call.1} parent=11 // pred_check
          %p346 = pneg %p144
        $region18: #{tpu_custom_call.1} parent=11 // pred_check_branch
          %348 = sbr.rel (%p346) target = $region20
        $region19: #{tpu_custom_call.1} parent=11 // pred_region
          %s350 = ssub.s32 256, 256
          %351 = vsyncadd [#allocation13], %s350
          %s352 = sshll.u32 [#allocation12], 4
          %s353 = int_to_ptr.vmem [resolvable:$true] %s352
          %358 = dma.hbm_to_vmem [thread:$0]  %s3, 256, %s353, [#allocation13], 64, 64, 4
        $region20: #{tpu_custom_call.1} parent=11 // pred_fallthru
          _
        // Predicated region
        $region21: #{tpu_custom_call.1} parent=11 // pred_check
          %p359 = pneg %p170
        $region22: #{tpu_custom_call.1} parent=11 // pred_check_branch
          %361 = sbr.rel (%p359) target = $region24
        $region23: #{tpu_custom_call.1} parent=11 // pred_region
          %p362 = scmp.lt.s32.totalorder %s38, 0
          %s363 = scalar_select %p362, %s38, 0
          %s364 = smul.addr %s363, 8
          %s365 = scalar_lea.vmem %s4, %s364
        $region24: #{tpu_custom_call.1} parent=11 // pred_fallthru
          _
        // Predicated region
        $region25: #{tpu_custom_call.1} parent=11 // pred_check
          %p366 = pneg %p196
        $region26: #{tpu_custom_call.1} parent=11 // pred_check_branch
          %368 = sbr.rel (%p366) target = $region28
        $region27: #{tpu_custom_call.1} parent=11 // pred_region
          %s370 = ssub.s32 128, 128
          %371 = vsyncadd [#allocation13], %s370
          %s372 = smul.addr %s38, 128
          %s373 = scalar_lea.hbm %s5, %s372
          %s375 = sshll.u32 [#allocation14], 4
          %s376 = int_to_ptr.vmem [resolvable:$true] %s375
          %378 = dma.hbm_to_vmem [thread:$0]  %s373, 128, %s376, [#allocation13]
        $region28: #{tpu_custom_call.1} parent=11 // pred_fallthru
          _
        // Predicated region
        $region29: #{tpu_custom_call.1} parent=11 // pred_check
          %p379 = pneg %p222
        $region30: #{tpu_custom_call.1} parent=11 // pred_check_branch
          %381 = sbr.rel (%p379) target = $region32
        $region31: #{tpu_custom_call.1} parent=11 // pred_region
          %s383 = ssub.s32 128, 128
          %384 = vsyncadd [#allocation16], %s383
          %s385 = smul.addr %s39, 128
          %s386 = scalar_lea.hbm %s6, %s385
          %s388 = sshll.u32 [#allocation15], 4
          %s389 = int_to_ptr.vmem [resolvable:$true] %s388
          %391 = dma.hbm_to_vmem [thread:$0]  %s386, 128, %s389, [#allocation16]
        $region32: #{tpu_custom_call.1} parent=11 // pred_fallthru
          _
        // Predicated region
        $region33: #{tpu_custom_call.1} parent=11 // pred_check
          %p392 = pneg %p248
        $region34: #{tpu_custom_call.1} parent=11 // pred_check_branch
          %394 = sbr.rel (%p392) target = $region36
        $region35: #{tpu_custom_call.1} parent=11 // pred_region
          %s396 = ssub.s32 128, 128
          %397 = vsyncadd [#allocation16], %s396
          %s398 = smul.addr %s39, 128
          %s399 = scalar_lea.hbm %s7, %s398
          %s401 = sshll.u32 [#allocation17], 4
          %s402 = int_to_ptr.vmem [resolvable:$true] %s401
          %404 = dma.hbm_to_vmem [thread:$0]  %s399, 128, %s402, [#allocation16]
        $region36: #{tpu_custom_call.1} parent=11 // pred_fallthru
          _
        // Predicated region
        $region37: #{tpu_custom_call.1} parent=11 // pred_check
          %p405 = pneg %p269
        $region38: #{tpu_custom_call.1} parent=11 // pred_check_branch
          %407 = sbr.rel (%p405) target = $region40
        $region39: #{tpu_custom_call.1} parent=11 // pred_region
          _
        $region40: #{tpu_custom_call.1} parent=11 // pred_fallthru
          _
        // Predicated region
        $region41: #{tpu_custom_call.1} parent=11 // pred_check
          %p408 = pneg %p290
        $region42: #{tpu_custom_call.1} parent=11 // pred_check_branch
          %410 = sbr.rel (%p408) target = $region44
        $region43: #{tpu_custom_call.1} parent=11 // pred_region
          _
        $region44: #{tpu_custom_call.1} parent=11 // pred_fallthru
          _
      $region12: #{tpu_custom_call.1} parent=5 // pred_fallthru
        _
      %p411 = scmp.lt.s32.totalorder %s27, 2
      // Predicated region
      $region45: #{tpu_custom_call.1} parent=5 // pred_check
        %p412 = pneg %p411
      $region46: #{tpu_custom_call.1} parent=5 // pred_check_branch
        %414 = sbr.rel (%p412) target = $region48
      $region47: #{tpu_custom_call.1} parent=5 // pred_region
        // Predicated region
        $region49: #{tpu_custom_call.1} parent=47 // pred_check
          %p415 = pneg %p68
        $region50: #{tpu_custom_call.1} parent=47 // pred_check_branch
          %417 = sbr.rel (%p415) target = $region52
        $region51: #{tpu_custom_call.1} parent=47 // pred_region
          %s418 = sand.u32 %s58, 1
          %s419 = scalar_lea.sflag [#allocation7], %s418
          %s420 = sand.u32 %s58, 1
          %s421 = smul.addr %s420, 4
          %s422 = scalar_lea.vmem [#allocation6], %s421
          %s424 = ssub.s32 64, 64
          %425 = vsyncadd %s419, %s424
          %s426 = sadd.s32 %s35, %s34
          %s427 = smul.addr %s426, 64
          %s428 = scalar_lea.hbm %s0, %s427
          %s430 = sshll.u32 %s422, 4
          %s431 = int_to_ptr.vmem [resolvable:$true] %s430
          %433 = dma.hbm_to_vmem [thread:$0]  %s428, 64, %s431, %s419
        $region52: #{tpu_custom_call.1} parent=47 // pred_fallthru
          _
        // Predicated region
        $region53: #{tpu_custom_call.1} parent=47 // pred_check
          %p434 = pneg %p96
        $region54: #{tpu_custom_call.1} parent=47 // pred_check_branch
          %436 = sbr.rel (%p434) target = $region56
        $region55: #{tpu_custom_call.1} parent=47 // pred_region
          %s437 = sand.u32 %s27, 1
          %s438 = scalar_lea.sflag [#allocation10], %s437
          %s439 = sand.u32 %s86, 1
          %s440 = smul.addr %s439, 4
          %s441 = scalar_lea.vmem [#allocation9], %s440
          %s443 = ssub.s32 64, 64
          %444 = vsyncadd %s438, %s443
          %s445 = sadd.s32 %s36, %s34
          %s446 = smul.addr %s445, 64
          %s447 = scalar_lea.hbm %s1, %s446
          %s449 = sshll.u32 %s441, 4
          %s450 = int_to_ptr.vmem [resolvable:$true] %s449
          %452 = dma.hbm_to_vmem [thread:$0]  %s447, 64, %s450, %s438
        $region56: #{tpu_custom_call.1} parent=47 // pred_fallthru
          _
      $region48: #{tpu_custom_call.1} parent=5 // pred_fallthru
        _
      %p453 = scmp.le.s32.totalorder 1, %s27
      %p454 = scmp.lt.s32.totalorder %s27, 3
      %p455 = pnand %p453, %p454
      %p456 = pneg %p455
      // Predicated region
      $region57: #{tpu_custom_call.1} parent=5 // pred_check
        _
      $region58: #{tpu_custom_call.1} parent=5 // pred_check_branch
        %458 = sbr.rel (%p455) target = $region60
      $region59: #{tpu_custom_call.1} parent=5 // pred_region
        %s459 = ssub.s32 %s27, 1
        %s460 = sand.u32 %s61, 1
        %s461 = scalar_lea.sflag [#allocation7], %s460
        %s462 = sand.u32 %s61, 1
        %s463 = smul.addr %s462, 4
        %s464 = scalar_lea.vmem [#allocation6], %s463
        // Predicated region
        $region61: #{tpu_custom_call.1} parent=59 // pred_check
          %p465 = pneg %p74
        $region62: #{tpu_custom_call.1} parent=59 // pred_check_branch
          %467 = sbr.rel (%p465) target = $region64
        $region63: #{tpu_custom_call.1} parent=59 // pred_region
          %468 = dma.done %s461, 64
        $region64: #{tpu_custom_call.1} parent=59 // pred_fallthru
          _
        %s469 = sand.u32 %s32, 1
        %s470 = scalar_lea.sflag [#allocation10], %s469
        %s471 = sand.u32 %s89, 1
        %s472 = smul.addr %s471, 4
        %s473 = scalar_lea.vmem [#allocation9], %s472
        // Predicated region
        $region65: #{tpu_custom_call.1} parent=59 // pred_check
          %p474 = pneg %p102
        $region66: #{tpu_custom_call.1} parent=59 // pred_check_branch
          %476 = sbr.rel (%p474) target = $region68
        $region67: #{tpu_custom_call.1} parent=59 // pred_region
          %477 = dma.done %s470, 64
        $region68: #{tpu_custom_call.1} parent=59 // pred_fallthru
          _
        // Predicated region
        $region69: #{tpu_custom_call.1} parent=59 // pred_check
          %p478 = pneg %p123
        $region70: #{tpu_custom_call.1} parent=59 // pred_check_branch
          %480 = sbr.rel (%p478) target = $region72
        $region71: #{tpu_custom_call.1} parent=59 // pred_region
          %481 = dma.done [#allocation10], 256
        $region72: #{tpu_custom_call.1} parent=59 // pred_fallthru
          _
        // Predicated region
        $region73: #{tpu_custom_call.1} parent=59 // pred_check
          %p482 = pneg %p144
        $region74: #{tpu_custom_call.1} parent=59 // pred_check_branch
          %484 = sbr.rel (%p482) target = $region76
        $region75: #{tpu_custom_call.1} parent=59 // pred_region
          %485 = dma.done [#allocation13], 256
        $region76: #{tpu_custom_call.1} parent=59 // pred_fallthru
          _
        // Predicated region
        $region77: #{tpu_custom_call.1} parent=59 // pred_check
          %p486 = pneg %p196
        $region78: #{tpu_custom_call.1} parent=59 // pred_check_branch
          %488 = sbr.rel (%p486) target = $region80
        $region79: #{tpu_custom_call.1} parent=59 // pred_region
          %489 = dma.done [#allocation13], 128
        $region80: #{tpu_custom_call.1} parent=59 // pred_fallthru
          _
        // Predicated region
        $region81: #{tpu_custom_call.1} parent=59 // pred_check
          %p490 = pneg %p222
        $region82: #{tpu_custom_call.1} parent=59 // pred_check_branch
          %492 = sbr.rel (%p490) target = $region84
        $region83: #{tpu_custom_call.1} parent=59 // pred_region
          %493 = dma.done [#allocation16], 128
        $region84: #{tpu_custom_call.1} parent=59 // pred_fallthru
          _
        // Predicated region
        $region85: #{tpu_custom_call.1} parent=59 // pred_check
          %p494 = pneg %p248
        $region86: #{tpu_custom_call.1} parent=59 // pred_check_branch
          %496 = sbr.rel (%p494) target = $region88
        $region87: #{tpu_custom_call.1} parent=59 // pred_region
          %497 = dma.done [#allocation16], 128
        $region88: #{tpu_custom_call.1} parent=59 // pred_fallthru
          _
        %s498 = sand.u32 %s61, 1
        %s499 = scalar_lea.sflag [#allocation7], %s498
        %s500 = sand.u32 %s61, 1
        %s501 = smul.addr %s500, 4
        %s502 = scalar_lea.vmem [#allocation6], %s501
        %p503 = pneg %p74
        %p504 = pneg %p71
        %s505 = sand.u32 %s32, 1
        %s506 = scalar_lea.sflag [#allocation10], %s505
        %s507 = sand.u32 %s89, 1
        %s508 = smul.addr %s507, 4
        %s509 = scalar_lea.vmem [#allocation9], %s508
        %p510 = pneg %p102
        %p511 = pneg %p99
        %p512 = pneg %p123
        %p513 = pneg %p120
        %p514 = pneg %p144
        %p515 = pneg %p141
        %p516 = scmp.lt.s32.totalorder %s38, 0
        %s517 = scalar_select %p516, %s38, 0
        %s518 = smul.addr %s517, 8
        %s519 = scalar_lea.vmem %s4, %s518
        %p520 = pneg %p170
        %p521 = pneg %p167
        %p522 = pneg %p196
        %p523 = pneg %p193
        %p524 = pneg %p222
        %p525 = pneg %p219
        %p526 = pneg %p248
        %p527 = pneg %p245
        %p528 = pneg %p269
        %p529 = pneg %p266
        %p530 = pneg %p290
        %p531 = pneg %p287
        %p532 = pneg %p318
        %p533 = pneg %p315
        %s534 = sand.u32 %s305, 1
        %s535 = scalar_lea.sflag [#allocation8], %s534
        %s536 = sand.u32 %s305, 1
        %s537 = smul.addr %s536, 4
        %s538 = scalar_lea.vmem [#allocation18], %s537
        %p539 = scmp.lt.s32.totalorder %s38, 0
        %s540 = scalar_select %p539, %s38, 0
        %s541 = smul.addr %s540, 8
        %s542 = scalar_lea.vmem %s4, %s541
        %p544 = scmp.eq.s32.totalorder %s39, 0
        // Predicated region
        $region89: #{tpu_custom_call.1} parent=59 // pred_check
          %p545 = pneg %p544
        $region90: #{tpu_custom_call.1} parent=59 // pred_check_branch
          %547 = sbr.rel (%p545) target = $region92
        $region91: #{tpu_custom_call.1} parent=59 // pred_region
          %v548 = vld [vmem:[%s464] sm:$0xf]
          %v549 = vld [vmem:[#allocation11] sm:$0xf]
          %v550 = vld [vmem:[#allocation11 + $0x4] sm:$0xf]
          %v551 = vld [vmem:[#allocation11 + $0x8] sm:$0xf]
          %v552 = vld [vmem:[#allocation11 + $0xc] sm:$0xf]
          %v557 = vunpack.c.l.b16 %v549
          %v558 = vunpack.c.l.b16 %v550
          %v559 = vunpack.c.l.b16 %v551
          %v560 = vunpack.c.l.b16 %v552
          %v561 = vpack.c.b16 %v558, %v557
          %v562 = vpack.c.b16 %v560, %v559
          %vm565 = vcmask 261120
          %v567 = vsel %vm565, %v548, 0
          %569 = vmatprep.subr.bf16.mxu0 0
          %570 = vmatpush1.bf16.msra.mxu0 %v561
          %571 = vmatprep.subr.bf16.mxu0 0
          %572 = vmatpush1.bf16.msra.mxu0 %v562
          %573 = vmatprep.subr.bf16.mxu0 0
          %574 = vmatpush1.bf16.msra.mxu0 0
          %575 = vmatprep.subr.bf16.mxu0 0
          %576 = vmatpush1.bf16.msra.mxu0 0
          %577 = vmatprep.subr.bf16.mxu0 0
          %578 = vmatpush1.bf16.msra.mxu0 0
          %579 = vmatprep.subr.bf16.mxu0 0
          %580 = vmatpush1.bf16.msra.mxu0 0
          %581 = vmatprep.subr.bf16.mxu0 0
          %582 = vmatpush1.bf16.msra.mxu0 0
          %583 = vmatprep.subr.bf16.mxu0 0
          %584 = vmatpush1.bf16.msra.mxu0 0
          %585 = vmatprep.subr.bf16.mxu0 0
          %586 = vmatpush1.bf16.msra.mxu0 0
          %587 = vmatprep.subr.bf16.mxu0 0
          %588 = vmatpush1.bf16.msra.mxu0 0
          %589 = vmatprep.subr.bf16.mxu0 0
          %590 = vmatpush1.bf16.msra.mxu0 0
          %591 = vmatprep.subr.bf16.mxu0 0
          %592 = vmatpush1.bf16.msra.mxu0 0
          %593 = vmatprep.subr.bf16.mxu0 0
          %594 = vmatpush1.bf16.msra.mxu0 0
          %595 = vmatprep.subr.bf16.mxu0 0
          %596 = vmatpush1.bf16.msra.mxu0 0
          %597 = vmatprep.subr.bf16.mxu0 0
          %598 = vmatpush1.bf16.msra.mxu0 0
          %599 = vmatprep.subr.bf16.mxu0 0
          %600 = vmatpush1.bf16.msra.mxu0 0
          %601 = vmatprep.mubr.bf16.mxu0 0
          %602 = vmatmul.mubr.bf16.gmra.mrb[0].mxu0 %v567
          %v603 = vpop.f32.mrb[0].mxu0
          %v604 = vadd.f32 0.0, %v603
          %v605 = vpop.f32.mrb[0].mxu0
          %v606 = vpop.f32.mrb[0].mxu0
          %v607 = vpop.f32.mrb[0].mxu0
          %608 = vdwg.mxu0
          %v609 = vld [vmem:[%s542] sm:$0xff]
          %v610 = vld [vmem:[#allocation14] sm:$0xff]
          %v611 = vmul.f32 %v604, %v609
          %613 = vrot.lane.b32.xlu0 %v610, 16
          %v614 = vpop.permute.xlu0 %613
          %v616 = vmul.f32 %v604, %v614
          %618 = vrot.lane.b32.xlu0 %v616, 112
          %v619 = vpop.permute.xlu0 %618
          %v621 = vsub.f32 %v611, %v619
          %v622 = vpack.c.bf16 %v621, %v621
          %vm623 = vcmask 125952
          %624 = vst.msk [vmem:[#allocation2] sm:$0xf] %vm623, %v622
          %v625 = vmul.f32 %v604, %v610
          %627 = vrot.lane.b32.xlu0 %v609, 16
          %v628 = vpop.permute.xlu0 %627
          %v630 = vmul.f32 %v604, %v628
          %632 = vrot.lane.b32.xlu0 %v630, 112
          %v633 = vpop.permute.xlu0 %632
          %v635 = vadd.f32 %v625, %v633
          %v636 = vpack.c.bf16 %v635, %v635
          %v638 = vunpack.c.l.b16 %v636
          %v639 = vpack.c.b16 %v638, %v638
          %640 = vrot.lane.b32.xlu0 %v639, 16
          %v641 = vpop.permute.xlu0 %640
          %vm643 = vcmask 257152
          %644 = vst.msk [vmem:[#allocation2] sm:$0xf] %vm643, %v641
          %vm645 = vcmask 7168
          %646 = vst.msk [vmem:[#allocation3] sm:$0xff] %vm645, -inf
          %647 = vst.msk [vmem:[#allocation3 + $0x8] sm:$0xff] %vm645, -inf
          %648 = vst.msk [vmem:[#allocation3 + $0x10] sm:$0xff] %vm645, -inf
          %649 = vst.msk [vmem:[#allocation3 + $0x18] sm:$0xff] %vm645, -inf
          %650 = vst.msk [vmem:[#allocation4] sm:$0xff] %vm645, 0.0
          %651 = vst.msk [vmem:[#allocation4 + $0x8] sm:$0xff] %vm645, 0.0
          %652 = vst.msk [vmem:[#allocation4 + $0x10] sm:$0xff] %vm645, 0.0
          %653 = vst.msk [vmem:[#allocation4 + $0x18] sm:$0xff] %vm645, 0.0
          %654 = vst.msk [vmem:[#allocation5] sm:$0xff] %vm565, 0.0
        $region92: #{tpu_custom_call.1} parent=59 // pred_fallthru
          _
        %p655 = scmp.le.s32.totalorder %s39, %s38
        // Predicated region
        $region93: #{tpu_custom_call.1} parent=59 // pred_check
          %p656 = pneg %p655
        $region94: #{tpu_custom_call.1} parent=59 // pred_check_branch
          %658 = sbr.rel (%p656) target = $region96
        $region95: #{tpu_custom_call.1} parent=59 // pred_region
          %v659 = vld [vmem:[%s473] sm:$0xf]
          %v660 = vld [vmem:[#allocation12] sm:$0xf]
          %v661 = vld [vmem:[#allocation12 + $0x4] sm:$0xf]
          %v662 = vld [vmem:[#allocation12 + $0x8] sm:$0xf]
          %v663 = vld [vmem:[#allocation12 + $0xc] sm:$0xf]
          %v668 = vunpack.c.l.b16 %v660
          %v669 = vunpack.c.l.b16 %v661
          %v670 = vunpack.c.l.b16 %v662
          %v671 = vunpack.c.l.b16 %v663
          %v672 = vpack.c.b16 %v669, %v668
          %v673 = vpack.c.b16 %v671, %v670
          %vm676 = vcmask 261120
          %v678 = vsel %vm676, %v659, 0
          %680 = vmatprep.subr.bf16.mxu0 0
          %681 = vmatpush1.bf16.msra.mxu0 %v672
          %682 = vmatprep.subr.bf16.mxu0 0
          %683 = vmatpush1.bf16.msra.mxu0 %v673
          %684 = vmatprep.subr.bf16.mxu0 0
          %685 = vmatpush1.bf16.msra.mxu0 0
          %686 = vmatprep.subr.bf16.mxu0 0
          %687 = vmatpush1.bf16.msra.mxu0 0
          %688 = vmatprep.subr.bf16.mxu0 0
          %689 = vmatpush1.bf16.msra.mxu0 0
          %690 = vmatprep.subr.bf16.mxu0 0
          %691 = vmatpush1.bf16.msra.mxu0 0
          %692 = vmatprep.subr.bf16.mxu0 0
          %693 = vmatpush1.bf16.msra.mxu0 0
          %694 = vmatprep.subr.bf16.mxu0 0
          %695 = vmatpush1.bf16.msra.mxu0 0
          %696 = vmatprep.subr.bf16.mxu0 0
          %697 = vmatpush1.bf16.msra.mxu0 0
          %698 = vmatprep.subr.bf16.mxu0 0
          %699 = vmatpush1.bf16.msra.mxu0 0
          %700 = vmatprep.subr.bf16.mxu0 0
          %701 = vmatpush1.bf16.msra.mxu0 0
          %702 = vmatprep.subr.bf16.mxu0 0
          %703 = vmatpush1.bf16.msra.mxu0 0
          %704 = vmatprep.subr.bf16.mxu0 0
          %705 = vmatpush1.bf16.msra.mxu0 0
          %706 = vmatprep.subr.bf16.mxu0 0
          %707 = vmatpush1.bf16.msra.mxu0 0
          %708 = vmatprep.subr.bf16.mxu0 0
          %709 = vmatpush1.bf16.msra.mxu0 0
          %710 = vmatprep.subr.bf16.mxu0 0
          %711 = vmatpush1.bf16.msra.mxu0 0
          %712 = vmatprep.mubr.bf16.mxu0 0
          %713 = vmatmul.mubr.bf16.gmra.mrb[0].mxu0 %v678
          %v714 = vpop.f32.mrb[0].mxu0
          %v715 = vadd.f32 0.0, %v714
          %v716 = vpop.f32.mrb[0].mxu0
          %v717 = vpop.f32.mrb[0].mxu0
          %v718 = vpop.f32.mrb[0].mxu0
          %719 = vdwg.mxu0
          %v720 = vld [vmem:[#allocation15] sm:$0xff]
          %v721 = vld [vmem:[#allocation17] sm:$0xff]
          %v722 = vpack.c.bf16 %v715, %v715
          %v723 = vmul.f32 %v715, %v720
          %725 = vrot.lane.b32.xlu0 %v721, 16
          %v726 = vpop.permute.xlu0 %725
          %v728 = vmul.f32 %v715, %v726
          %730 = vrot.lane.b32.xlu0 %v728, 112
          %v731 = vpop.permute.xlu0 %730
          %v733 = vsub.f32 %v723, %v731
          %v734 = vpack.c.bf16 %v733, %v733
          %v735 = vmul.f32 %v715, %v721
          %737 = vrot.lane.b32.xlu0 %v720, 16
          %v738 = vpop.permute.xlu0 %737
          %v740 = vmul.f32 %v715, %v738
          %742 = vrot.lane.b32.xlu0 %v740, 112
          %v743 = vpop.permute.xlu0 %742
          %v745 = vadd.f32 %v735, %v743
          %v746 = vpack.c.bf16 %v745, %v745
          %s747 = smul.u32 %s38, 8
          %v748 = vlaneseq
          %v749 = vshrl.u32 %v748, 7
          %v750 = vstv %s747
          %v751 = vadd.s32 %v750, %v749
          %s752 = smul.u32 %s39, 8
          %v753 = vlaneseq
          %v754 = vand.u32 %v753, 127
          %v755 = vstv %s752
          %v756 = vadd.s32 %v755, %v754
          %vm757 = vcmp.le.s32.totalorder %v756, %v751
          %v758 = vld [vmem:[#allocation2] sm:$0xf]
          %v760 = vunpack.c.l.b16 %v758
          %v761 = vpack.c.b16 %v760, %v760
          %762 = vrot.lane.b32.xlu0 %v761, 112
          %v763 = vpop.permute.xlu0 %762
          %vm764 = vcmask 31744
          %v766 = vsel %vm764, %v763, 0
          %v769 = vsel %vm764, %v746, 0
          %771 = vmatprep.subr.bf16.mxu0 0
          %772 = vmatpush1.bf16.xpose.msra.mxu0 %v769
          %773 = vmatprep.subr.bf16.mxu0 0
          %774 = vmatpush1.bf16.xpose.msra.mxu0 0
          %775 = vmatprep.subr.bf16.mxu0 0
          %776 = vmatpush1.bf16.xpose.msra.mxu0 0
          %777 = vmatprep.subr.bf16.mxu0 0
          %778 = vmatpush1.bf16.xpose.msra.mxu0 0
          %779 = vmatprep.subr.bf16.mxu0 0
          %780 = vmatpush1.bf16.xpose.msra.mxu0 0
          %781 = vmatprep.subr.bf16.mxu0 0
          %782 = vmatpush1.bf16.xpose.msra.mxu0 0
          %783 = vmatprep.subr.bf16.mxu0 0
          %784 = vmatpush1.bf16.xpose.msra.mxu0 0
          %785 = vmatprep.subr.bf16.mxu0 0
          %786 = vmatpush1.bf16.xpose.msra.mxu0 0
          %787 = vmatprep.subr.bf16.mxu0 0
          %788 = vmatpush1.bf16.xpose.msra.mxu0 0
          %789 = vmatprep.subr.bf16.mxu0 0
          %790 = vmatpush1.bf16.xpose.msra.mxu0 0
          %791 = vmatprep.subr.bf16.mxu0 0
          %792 = vmatpush1.bf16.xpose.msra.mxu0 0
          %793 = vmatprep.subr.bf16.mxu0 0
          %794 = vmatpush1.bf16.xpose.msra.mxu0 0
          %795 = vmatprep.subr.bf16.mxu0 0
          %796 = vmatpush1.bf16.xpose.msra.mxu0 0
          %797 = vmatprep.subr.bf16.mxu0 0
          %798 = vmatpush1.bf16.xpose.msra.mxu0 0
          %799 = vmatprep.subr.bf16.mxu0 0
          %800 = vmatpush1.bf16.xpose.msra.mxu0 0
          %801 = vmatprep.subr.bf16.mxu0 0
          %802 = vmatpush1.bf16.xpose.msra.mxu0 0
          %803 = vmatprep.mubr.bf16.mxu0 0
          %804 = vmatmul.mubr.bf16.gmra.mrb[0].mxu0 %v766
          %v805 = vpop.f32.mrb[0].mxu0
          %v806 = vadd.f32 0.0, %v805
          %v807 = vpop.f32.mrb[0].mxu0
          %v808 = vpop.f32.mrb[0].mxu0
          %v809 = vpop.f32.mrb[0].mxu0
          %810 = vdwg.mxu0
          %v812 = vsel %vm764, %v758, 0
          %v815 = vsel %vm764, %v734, 0
          %817 = vmatprep.subr.bf16.mxu0 0
          %818 = vmatpush1.bf16.xpose.msra.mxu0 %v815
          %819 = vmatprep.subr.bf16.mxu0 0
          %820 = vmatpush1.bf16.xpose.msra.mxu0 0
          %821 = vmatprep.subr.bf16.mxu0 0
          %822 = vmatpush1.bf16.xpose.msra.mxu0 0
          %823 = vmatprep.subr.bf16.mxu0 0
          %824 = vmatpush1.bf16.xpose.msra.mxu0 0
          %825 = vmatprep.subr.bf16.mxu0 0
          %826 = vmatpush1.bf16.xpose.msra.mxu0 0
          %827 = vmatprep.subr.bf16.mxu0 0
          %828 = vmatpush1.bf16.xpose.msra.mxu0 0
          %829 = vmatprep.subr.bf16.mxu0 0
          %830 = vmatpush1.bf16.xpose.msra.mxu0 0
          %831 = vmatprep.subr.bf16.mxu0 0
          %832 = vmatpush1.bf16.xpose.msra.mxu0 0
          %833 = vmatprep.subr.bf16.mxu0 0
          %834 = vmatpush1.bf16.xpose.msra.mxu0 0
          %835 = vmatprep.subr.bf16.mxu0 0
          %836 = vmatpush1.bf16.xpose.msra.mxu0 0
          %837 = vmatprep.subr.bf16.mxu0 0
          %838 = vmatpush1.bf16.xpose.msra.mxu0 0
          %839 = vmatprep.subr.bf16.mxu0 0
          %840 = vmatpush1.bf16.xpose.msra.mxu0 0
          %841 = vmatprep.subr.bf16.mxu0 0
          %842 = vmatpush1.bf16.xpose.msra.mxu0 0
          %843 = vmatprep.subr.bf16.mxu0 0
          %844 = vmatpush1.bf16.xpose.msra.mxu0 0
          %845 = vmatprep.subr.bf16.mxu0 0
          %846 = vmatpush1.bf16.xpose.msra.mxu0 0
          %847 = vmatprep.subr.bf16.mxu0 0
          %848 = vmatpush1.bf16.xpose.msra.mxu0 0
          %849 = vmatprep.mubr.bf16.mxu0 0
          %850 = vmatmul.mubr.bf16.gmra.mrb[0].mxu0 %v812
          %v851 = vpop.f32.mrb[0].mxu0
          %v852 = vadd.f32 %v806, %v851
          %v853 = vpop.f32.mrb[0].mxu0
          %v854 = vpop.f32.mrb[0].mxu0
          %v855 = vpop.f32.mrb[0].mxu0
          %856 = vdwg.mxu0
          %v857 = vsel %vm757, %v852, -inf
          %v858 = vld [vmem:[#allocation3] sm:$0xff]
          %v859 = vld [vmem:[#allocation4] sm:$0xff]
          %vm860 = vcmask 64512
          %v861 = vsel %vm860, %v857, -inf
          %862 = vmax.xlane.f32.xlu0 %v861
          %v863 = vpop.xlane.xlu0 %862
          %v864 = vmax.f32 %v858, %v863
          %v865 = vsub.f32 %v858, %v864
          %v866 = vmul.f32 %v865, 1.442695
          %v867 = vpow.pop %v866
          %869 = vset.pattern.permute.xlu0 0
          %870 = vperm.xlu0 %869, %v864
          %v871 = vpop.permute.xlu0 %870
          %v873 = vsub.f32 %v857, %v871
          %v874 = vmul.f32 %v873, 1.442695
          %v875 = vpow.pop %v874
          %v876 = vmul.f32 %v867, %v859
          %v877 = vsel %vm860, %v875, 0.0
          %878 = vadd.xlane.f32.xlu0 %v877
          %v879 = vpop.xlane.xlu0 %878
          %v880 = vadd.f32 %v876, %v879
          %vm881 = vcmask 7168
          %882 = vst.msk [vmem:[#allocation4] sm:$0xff] %vm881, %v880
          %883 = vst.msk [vmem:[#allocation3] sm:$0xff] %vm881, %v864
          %v884 = vpack.c.bf16 %v875, %v875
          %886 = vrot.lane.b32.xlu0 %v722, 96
          %v887 = vpop.permute.xlu0 %886
          %v889 = vsel %vm860, %v884, 0
          %vm891 = vcmask 1043456
          %v893 = vsel %vm891, %v887, 0
          %895 = vmatprep.subr.bf16.mxu0 0
          %896 = vmatpush1.bf16.msra.mxu0 %v893
          %897 = vmatprep.subr.bf16.mxu0 0
          %898 = vmatpush1.bf16.msra.mxu0 0
          %899 = vmatprep.subr.bf16.mxu0 0
          %900 = vmatpush1.bf16.msra.mxu0 0
          %901 = vmatprep.subr.bf16.mxu0 0
          %902 = vmatpush1.bf16.msra.mxu0 0
          %903 = vmatprep.subr.bf16.mxu0 0
          %904 = vmatpush1.bf16.msra.mxu0 0
          %905 = vmatprep.subr.bf16.mxu0 0
          %906 = vmatpush1.bf16.msra.mxu0 0
          %907 = vmatprep.subr.bf16.mxu0 0
          %908 = vmatpush1.bf16.msra.mxu0 0
          %909 = vmatprep.subr.bf16.mxu0 0
          %910 = vmatpush1.bf16.msra.mxu0 0
          %911 = vmatprep.subr.bf16.mxu0 0
          %912 = vmatpush1.bf16.msra.mxu0 0
          %913 = vmatprep.subr.bf16.mxu0 0
          %914 = vmatpush1.bf16.msra.mxu0 0
          %915 = vmatprep.subr.bf16.mxu0 0
          %916 = vmatpush1.bf16.msra.mxu0 0
          %917 = vmatprep.subr.bf16.mxu0 0
          %918 = vmatpush1.bf16.msra.mxu0 0
          %919 = vmatprep.subr.bf16.mxu0 0
          %920 = vmatpush1.bf16.msra.mxu0 0
          %921 = vmatprep.subr.bf16.mxu0 0
          %922 = vmatpush1.bf16.msra.mxu0 0
          %923 = vmatprep.subr.bf16.mxu0 0
          %924 = vmatpush1.bf16.msra.mxu0 0
          %925 = vmatprep.subr.bf16.mxu0 0
          %926 = vmatpush1.bf16.msra.mxu0 0
          %927 = vmatprep.mubr.bf16.mxu0 0
          %928 = vmatmul.mubr.bf16.gmra.mrb[0].mxu0 %v889
          %v929 = vpop.f32.mrb[0].mxu0
          %v930 = vadd.f32 0.0, %v929
          %v931 = vpop.f32.mrb[0].mxu0
          %v932 = vpop.f32.mrb[0].mxu0
          %v933 = vpop.f32.mrb[0].mxu0
          %934 = vdwg.mxu0
          %v935 = vld [vmem:[#allocation5] sm:$0xff]
          %937 = vset.pattern.permute.xlu0 0
          %938 = vperm.xlu0 %937, %v867
          %v939 = vpop.permute.xlu0 %938
          %v941 = vmul.f32 %v939, %v935
          %v942 = vadd.f32 %v941, %v930
          %943 = vst.msk [vmem:[#allocation5] sm:$0xff] %vm860, %v942
          %v944 = vld [vmem:[#allocation2] sm:$0xf]
          %v946 = vunpack.c.l.b16 %v944
          %v947 = vpack.c.b16 %v946, %v946
          %948 = vrot.lane.b32.xlu0 %v947, 108
          %v949 = vpop.permute.xlu0 %948
          %951 = vrot.lane.b32.xlu0 %v746, 124
          %v952 = vpop.permute.xlu0 %951
          %v954 = vsel %vm764, %v949, 0
          %v957 = vsel %vm764, %v952, 0
          %959 = vmatprep.subr.bf16.mxu0 0
          %960 = vmatpush1.bf16.xpose.msra.mxu0 %v957
          %961 = vmatprep.subr.bf16.mxu0 0
          %962 = vmatpush1.bf16.xpose.msra.mxu0 0
          %963 = vmatprep.subr.bf16.mxu0 0
          %964 = vmatpush1.bf16.xpose.msra.mxu0 0
          %965 = vmatprep.subr.bf16.mxu0 0
          %966 = vmatpush1.bf16.xpose.msra.mxu0 0
          %967 = vmatprep.subr.bf16.mxu0 0
          %968 = vmatpush1.bf16.xpose.msra.mxu0 0
          %969 = vmatprep.subr.bf16.mxu0 0
          %970 = vmatpush1.bf16.xpose.msra.mxu0 0
          %971 = vmatprep.subr.bf16.mxu0 0
          %972 = vmatpush1.bf16.xpose.msra.mxu0 0
          %973 = vmatprep.subr.bf16.mxu0 0
          %974 = vmatpush1.bf16.xpose.msra.mxu0 0
          %975 = vmatprep.subr.bf16.mxu0 0
          %976 = vmatpush1.bf16.xpose.msra.mxu0 0
          %977 = vmatprep.subr.bf16.mxu0 0
          %978 = vmatpush1.bf16.xpose.msra.mxu0 0
          %979 = vmatprep.subr.bf16.mxu0 0
          %980 = vmatpush1.bf16.xpose.msra.mxu0 0
          %981 = vmatprep.subr.bf16.mxu0 0
          %982 = vmatpush1.bf16.xpose.msra.mxu0 0
          %983 = vmatprep.subr.bf16.mxu0 0
          %984 = vmatpush1.bf16.xpose.msra.mxu0 0
          %985 = vmatprep.subr.bf16.mxu0 0
          %986 = vmatpush1.bf16.xpose.msra.mxu0 0
          %987 = vmatprep.subr.bf16.mxu0 0
          %988 = vmatpush1.bf16.xpose.msra.mxu0 0
          %989 = vmatprep.subr.bf16.mxu0 0
          %990 = vmatpush1.bf16.xpose.msra.mxu0 0
          %991 = vmatprep.mubr.bf16.mxu0 0
          %992 = vmatmul.mubr.bf16.gmra.mrb[0].mxu0 %v954
          %v993 = vpop.f32.mrb[0].mxu0
          %v994 = vadd.f32 0.0, %v993
          %v995 = vpop.f32.mrb[0].mxu0
          %v996 = vpop.f32.mrb[0].mxu0
          %v997 = vpop.f32.mrb[0].mxu0
          %998 = vdwg.mxu0
          %999 = vrot.lane.b32.xlu0 %v947, 124
          %v1000 = vpop.permute.xlu0 %999
          %1002 = vrot.lane.b32.xlu0 %v734, 124
          %v1003 = vpop.permute.xlu0 %1002
          %v1005 = vsel %vm764, %v1000, 0
          %v1008 = vsel %vm764, %v1003, 0
          %1010 = vmatprep.subr.bf16.mxu0 0
          %1011 = vmatpush1.bf16.xpose.msra.mxu0 %v1008
          %1012 = vmatprep.subr.bf16.mxu0 0
          %1013 = vmatpush1.bf16.xpose.msra.mxu0 0
          %1014 = vmatprep.subr.bf16.mxu0 0
          %1015 = vmatpush1.bf16.xpose.msra.mxu0 0
          %1016 = vmatprep.subr.bf16.mxu0 0
          %1017 = vmatpush1.bf16.xpose.msra.mxu0 0
          %1018 = vmatprep.subr.bf16.mxu0 0
          %1019 = vmatpush1.bf16.xpose.msra.mxu0 0
          %1020 = vmatprep.subr.bf16.mxu0 0
          %1021 = vmatpush1.bf16.xpose.msra.mxu0 0
          %1022 = vmatprep.subr.bf16.mxu0 0
          %1023 = vmatpush1.bf16.xpose.msra.mxu0 0
          %1024 = vmatprep.subr.bf16.mxu0 0
          %1025 = vmatpush1.bf16.xpose.msra.mxu0 0
          %1026 = vmatprep.subr.bf16.mxu0 0
          %1027 = vmatpush1.bf16.xpose.msra.mxu0 0
          %1028 = vmatprep.subr.bf16.mxu0 0
          %1029 = vmatpush1.bf16.xpose.msra.mxu0 0
          %1030 = vmatprep.subr.bf16.mxu0 0
          %1031 = vmatpush1.bf16.xpose.msra.mxu0 0
          %1032 = vmatprep.subr.bf16.mxu0 0
          %1033 = vmatpush1.bf16.xpose.msra.mxu0 0
          %1034 = vmatprep.subr.bf16.mxu0 0
          %1035 = vmatpush1.bf16.xpose.msra.mxu0 0
          %1036 = vmatprep.subr.bf16.mxu0 0
          %1037 = vmatpush1.bf16.xpose.msra.mxu0 0
          %1038 = vmatprep.subr.bf16.mxu0 0
          %1039 = vmatpush1.bf16.xpose.msra.mxu0 0
          %1040 = vmatprep.subr.bf16.mxu0 0
          %1041 = vmatpush1.bf16.xpose.msra.mxu0 0
          %1042 = vmatprep.mubr.bf16.mxu0 0
          %1043 = vmatmul.mubr.bf16.gmra.mrb[0].mxu0 %v1005
          %v1044 = vpop.f32.mrb[0].mxu0
          %v1045 = vadd.f32 %v994, %v1044
          %v1046 = vpop.f32.mrb[0].mxu0
          %v1047 = vpop.f32.mrb[0].mxu0
          %v1048 = vpop.f32.mrb[0].mxu0
          %1049 = vdwg.mxu0
          %v1050 = vsel %vm757, %v1045, -inf
          %s1051 = scalar_lea.vmem [#allocation3], 8
          %v1052 = vld [vmem:[%s1051] sm:$0xff]
          %s1053 = scalar_lea.vmem [#allocation4], 8
          %v1054 = vld [vmem:[%s1053] sm:$0xff]
          %v1055 = vsel %vm860, %v1050, -inf
          %1056 = vmax.xlane.f32.xlu0 %v1055
          %v1057 = vpop.xlane.xlu0 %1056
          %v1058 = vmax.f32 %v1052, %v1057
          %v1059 = vsub.f32 %v1052, %v1058
          %v1060 = vmul.f32 %v1059, 1.442695
          %v1061 = vpow.pop %v1060
          %1063 = vset.pattern.permute.xlu0 0
          %1064 = vperm.xlu0 %1063, %v1058
          %v1065 = vpop.permute.xlu0 %1064
          %v1067 = vsub.f32 %v1050, %v1065
          %v1068 = vmul.f32 %v1067, 1.442695
          %v1069 = vpow.pop %v1068
          %v1070 = vmul.f32 %v1061, %v1054
          %v1071 = vsel %vm860, %v1069, 0.0
          %1072 = vadd.xlane.f32.xlu0 %v1071
          %v1073 = vpop.xlane.xlu0 %1072
          %v1074 = vadd.f32 %v1070, %v1073
          %1075 = vst.msk [vmem:[%s1053] sm:$0xff] %vm881, %v1074
          %1076 = vst.msk [vmem:[%s1051] sm:$0xff] %vm881, %v1058
          %v1077 = vpack.c.bf16 %v1069, %v1069
          %1078 = vrot.lane.b32.xlu0 %v722, 88
          %v1079 = vpop.permute.xlu0 %1078
          %v1081 = vsel %vm860, %v1077, 0
          %v1084 = vsel %vm891, %v1079, 0
          %1086 = vmatprep.subr.bf16.mxu0 0
          %1087 = vmatpush1.bf16.msra.mxu0 %v1084
          %1088 = vmatprep.subr.bf16.mxu0 0
          %1089 = vmatpush1.bf16.msra.mxu0 0
          %1090 = vmatprep.subr.bf16.mxu0 0
          %1091 = vmatpush1.bf16.msra.mxu0 0
          %1092 = vmatprep.subr.bf16.mxu0 0
          %1093 = vmatpush1.bf16.msra.mxu0 0
          %1094 = vmatprep.subr.bf16.mxu0 0
          %1095 = vmatpush1.bf16.msra.mxu0 0
          %1096 = vmatprep.subr.bf16.mxu0 0
          %1097 = vmatpush1.bf16.msra.mxu0 0
          %1098 = vmatprep.subr.bf16.mxu0 0
          %1099 = vmatpush1.bf16.msra.mxu0 0
          %1100 = vmatprep.subr.bf16.mxu0 0
          %1101 = vmatpush1.bf16.msra.mxu0 0
          %1102 = vmatprep.subr.bf16.mxu0 0
          %1103 = vmatpush1.bf16.msra.mxu0 0
          %1104 = vmatprep.subr.bf16.mxu0 0
          %1105 = vmatpush1.bf16.msra.mxu0 0
          %1106 = vmatprep.subr.bf16.mxu0 0
          %1107 = vmatpush1.bf16.msra.mxu0 0
          %1108 = vmatprep.subr.bf16.mxu0 0
          %1109 = vmatpush1.bf16.msra.mxu0 0
          %1110 = vmatprep.subr.bf16.mxu0 0
          %1111 = vmatpush1.bf16.msra.mxu0 0
          %1112 = vmatprep.subr.bf16.mxu0 0
          %1113 = vmatpush1.bf16.msra.mxu0 0
          %1114 = vmatprep.subr.bf16.mxu0 0
          %1115 = vmatpush1.bf16.msra.mxu0 0
          %1116 = vmatprep.subr.bf16.mxu0 0
          %1117 = vmatpush1.bf16.msra.mxu0 0
          %1118 = vmatprep.mubr.bf16.mxu0 0
          %1119 = vmatmul.mubr.bf16.gmra.mrb[0].mxu0 %v1081
          %v1120 = vpop.f32.mrb[0].mxu0
          %v1121 = vadd.f32 0.0, %v1120
          %v1122 = vpop.f32.mrb[0].mxu0
          %v1123 = vpop.f32.mrb[0].mxu0
          %v1124 = vpop.f32.mrb[0].mxu0
          %1125 = vdwg.mxu0
          %v1126 = vld [vmem:[#allocation5] sm:$0xff]
          %1128 = vset.pattern.permute.xlu0 0
          %1129 = vperm.xlu0 %1128, %v1061
          %v1130 = vpop.permute.xlu0 %1129
          %v1132 = vmul.f32 %v1130, %v1126
          %1134 = vrot.lane.b32.xlu0 %v1121, 8
          %v1135 = vpop.permute.xlu0 %1134
          %v1137 = vadd.f32 %v1132, %v1135
          %vm1138 = vcmask 130112
          %1139 = vst.msk [vmem:[#allocation5] sm:$0xff] %vm1138, %v1137
          %v1140 = vld [vmem:[#allocation2] sm:$0xf]
          %v1142 = vunpack.c.l.b16 %v1140
          %v1143 = vpack.c.b16 %v1142, %v1142
          %1144 = vrot.lane.b32.xlu0 %v1143, 104
          %v1145 = vpop.permute.xlu0 %1144
          %1146 = vrot.lane.b32.xlu0 %v746, 120
          %v1147 = vpop.permute.xlu0 %1146
          %v1149 = vsel %vm764, %v1145, 0
          %v1152 = vsel %vm764, %v1147, 0
          %1154 = vmatprep.subr.bf16.mxu0 0
          %1155 = vmatpush1.bf16.xpose.msra.mxu0 %v1152
          %1156 = vmatprep.subr.bf16.mxu0 0
          %1157 = vmatpush1.bf16.xpose.msra.mxu0 0
          %1158 = vmatprep.subr.bf16.mxu0 0
          %1159 = vmatpush1.bf16.xpose.msra.mxu0 0
          %1160 = vmatprep.subr.bf16.mxu0 0
          %1161 = vmatpush1.bf16.xpose.msra.mxu0 0
          %1162 = vmatprep.subr.bf16.mxu0 0
          %1163 = vmatpush1.bf16.xpose.msra.mxu0 0
          %1164 = vmatprep.subr.bf16.mxu0 0
          %1165 = vmatpush1.bf16.xpose.msra.mxu0 0
          %1166 = vmatprep.subr.bf16.mxu0 0
          %1167 = vmatpush1.bf16.xpose.msra.mxu0 0
          %1168 = vmatprep.subr.bf16.mxu0 0
          %1169 = vmatpush1.bf16.xpose.msra.mxu0 0
          %1170 = vmatprep.subr.bf16.mxu0 0
          %1171 = vmatpush1.bf16.xpose.msra.mxu0 0
          %1172 = vmatprep.subr.bf16.mxu0 0
          %1173 = vmatpush1.bf16.xpose.msra.mxu0 0
          %1174 = vmatprep.subr.bf16.mxu0 0
          %1175 = vmatpush1.bf16.xpose.msra.mxu0 0
          %1176 = vmatprep.subr.bf16.mxu0 0
          %1177 = vmatpush1.bf16.xpose.msra.mxu0 0
          %1178 = vmatprep.subr.bf16.mxu0 0
          %1179 = vmatpush1.bf16.xpose.msra.mxu0 0
          %1180 = vmatprep.subr.bf16.mxu0 0
          %1181 = vmatpush1.bf16.xpose.msra.mxu0 0
          %1182 = vmatprep.subr.bf16.mxu0 0
          %1183 = vmatpush1.bf16.xpose.msra.mxu0 0
          %1184 = vmatprep.subr.bf16.mxu0 0
          %1185 = vmatpush1.bf16.xpose.msra.mxu0 0
          %1186 = vmatprep.mubr.bf16.mxu0 0
          %1187 = vmatmul.mubr.bf16.gmra.mrb[0].mxu0 %v1149
          %v1188 = vpop.f32.mrb[0].mxu0
          %v1189 = vadd.f32 0.0, %v1188
          %v1190 = vpop.f32.mrb[0].mxu0
          %v1191 = vpop.f32.mrb[0].mxu0
          %v1192 = vpop.f32.mrb[0].mxu0
          %1193 = vdwg.mxu0
          %1194 = vrot.lane.b32.xlu0 %v1143, 120
          %v1195 = vpop.permute.xlu0 %1194
          %1196 = vrot.lane.b32.xlu0 %v734, 120
          %v1197 = vpop.permute.xlu0 %1196
          %v1199 = vsel %vm764, %v1195, 0
          %v1202 = vsel %vm764, %v1197, 0
          %1204 = vmatprep.subr.bf16.mxu0 0
          %1205 = vmatpush1.bf16.xpose.msra.mxu0 %v1202
          %1206 = vmatprep.subr.bf16.mxu0 0
          %1207 = vmatpush1.bf16.xpose.msra.mxu0 0
          %1208 = vmatprep.subr.bf16.mxu0 0
          %1209 = vmatpush1.bf16.xpose.msra.mxu0 0
          %1210 = vmatprep.subr.bf16.mxu0 0
          %1211 = vmatpush1.bf16.xpose.msra.mxu0 0
          %1212 = vmatprep.subr.bf16.mxu0 0
          %1213 = vmatpush1.bf16.xpose.msra.mxu0 0
          %1214 = vmatprep.subr.bf16.mxu0 0
          %1215 = vmatpush1.bf16.xpose.msra.mxu0 0
          %1216 = vmatprep.subr.bf16.mxu0 0
          %1217 = vmatpush1.bf16.xpose.msra.mxu0 0
          %1218 = vmatprep.subr.bf16.mxu0 0
          %1219 = vmatpush1.bf16.xpose.msra.mxu0 0
          %1220 = vmatprep.subr.bf16.mxu0 0
          %1221 = vmatpush1.bf16.xpose.msra.mxu0 0
          %1222 = vmatprep.subr.bf16.mxu0 0
          %1223 = vmatpush1.bf16.xpose.msra.mxu0 0
          %1224 = vmatprep.subr.bf16.mxu0 0
          %1225 = vmatpush1.bf16.xpose.msra.mxu0 0
          %1226 = vmatprep.subr.bf16.mxu0 0
          %1227 = vmatpush1.bf16.xpose.msra.mxu0 0
          %1228 = vmatprep.subr.bf16.mxu0 0
          %1229 = vmatpush1.bf16.xpose.msra.mxu0 0
          %1230 = vmatprep.subr.bf16.mxu0 0
          %1231 = vmatpush1.bf16.xpose.msra.mxu0 0
          %1232 = vmatprep.subr.bf16.mxu0 0
          %1233 = vmatpush1.bf16.xpose.msra.mxu0 0
          %1234 = vmatprep.subr.bf16.mxu0 0
          %1235 = vmatpush1.bf16.xpose.msra.mxu0 0
          %1236 = vmatprep.mubr.bf16.mxu0 0
          %1237 = vmatmul.mubr.bf16.gmra.mrb[0].mxu0 %v1199
          %v1238 = vpop.f32.mrb[0].mxu0
          %v1239 = vadd.f32 %v1189, %v1238
          %v1240 = vpop.f32.mrb[0].mxu0
          %v1241 = vpop.f32.mrb[0].mxu0
          %v1242 = vpop.f32.mrb[0].mxu0
          %1243 = vdwg.mxu0
          %v1244 = vsel %vm757, %v1239, -inf
          %s1245 = scalar_lea.vmem [#allocation3], 16
          %v1246 = vld [vmem:[%s1245] sm:$0xff]
          %s1247 = scalar_lea.vmem [#allocation4], 16
          %v1248 = vld [vmem:[%s1247] sm:$0xff]
          %v1249 = vsel %vm860, %v1244, -inf
          %1250 = vmax.xlane.f32.xlu0 %v1249
          %v1251 = vpop.xlane.xlu0 %1250
          %v1252 = vmax.f32 %v1246, %v1251
          %v1253 = vsub.f32 %v1246, %v1252
          %v1254 = vmul.f32 %v1253, 1.442695
          %v1255 = vpow.pop %v1254
          %1257 = vset.pattern.permute.xlu0 0
          %1258 = vperm.xlu0 %1257, %v1252
          %v1259 = vpop.permute.xlu0 %1258
          %v1261 = vsub.f32 %v1244, %v1259
          %v1262 = vmul.f32 %v1261, 1.442695
          %v1263 = vpow.pop %v1262
          %v1264 = vmul.f32 %v1255, %v1248
          %v1265 = vsel %vm860, %v1263, 0.0
          %1266 = vadd.xlane.f32.xlu0 %v1265
          %v1267 = vpop.xlane.xlu0 %1266
          %v1268 = vadd.f32 %v1264, %v1267
          %1269 = vst.msk [vmem:[%s1247] sm:$0xff] %vm881, %v1268
          %1270 = vst.msk [vmem:[%s1245] sm:$0xff] %vm881, %v1252
          %v1271 = vpack.c.bf16 %v1263, %v1263
          %1272 = vrot.lane.b32.xlu0 %v722, 80
          %v1273 = vpop.permute.xlu0 %1272
          %v1275 = vsel %vm860, %v1271, 0
          %v1278 = vsel %vm891, %v1273, 0
          %1280 = vmatprep.subr.bf16.mxu0 0
          %1281 = vmatpush1.bf16.msra.mxu0 %v1278
          %1282 = vmatprep.subr.bf16.mxu0 0
          %1283 = vmatpush1.bf16.msra.mxu0 0
          %1284 = vmatprep.subr.bf16.mxu0 0
          %1285 = vmatpush1.bf16.msra.mxu0 0
          %1286 = vmatprep.subr.bf16.mxu0 0
          %1287 = vmatpush1.bf16.msra.mxu0 0
          %1288 = vmatprep.subr.bf16.mxu0 0
          %1289 = vmatpush1.bf16.msra.mxu0 0
          %1290 = vmatprep.subr.bf16.mxu0 0
          %1291 = vmatpush1.bf16.msra.mxu0 0
          %1292 = vmatprep.subr.bf16.mxu0 0
          %1293 = vmatpush1.bf16.msra.mxu0 0
          %1294 = vmatprep.subr.bf16.mxu0 0
          %1295 = vmatpush1.bf16.msra.mxu0 0
          %1296 = vmatprep.subr.bf16.mxu0 0
          %1297 = vmatpush1.bf16.msra.mxu0 0
          %1298 = vmatprep.subr.bf16.mxu0 0
          %1299 = vmatpush1.bf16.msra.mxu0 0
          %1300 = vmatprep.subr.bf16.mxu0 0
          %1301 = vmatpush1.bf16.msra.mxu0 0
          %1302 = vmatprep.subr.bf16.mxu0 0
          %1303 = vmatpush1.bf16.msra.mxu0 0
          %1304 = vmatprep.subr.bf16.mxu0 0
          %1305 = vmatpush1.bf16.msra.mxu0 0
          %1306 = vmatprep.subr.bf16.mxu0 0
          %1307 = vmatpush1.bf16.msra.mxu0 0
          %1308 = vmatprep.subr.bf16.mxu0 0
          %1309 = vmatpush1.bf16.msra.mxu0 0
          %1310 = vmatprep.subr.bf16.mxu0 0
          %1311 = vmatpush1.bf16.msra.mxu0 0
          %1312 = vmatprep.mubr.bf16.mxu0 0
          %1313 = vmatmul.mubr.bf16.gmra.mrb[0].mxu0 %v1275
          %v1314 = vpop.f32.mrb[0].mxu0
          %v1315 = vadd.f32 0.0, %v1314
          %v1316 = vpop.f32.mrb[0].mxu0
          %v1317 = vpop.f32.mrb[0].mxu0
          %v1318 = vpop.f32.mrb[0].mxu0
          %1319 = vdwg.mxu0
          %v1320 = vld [vmem:[#allocation5] sm:$0xff]
          %1322 = vset.pattern.permute.xlu0 0
          %1323 = vperm.xlu0 %1322, %v1255
          %v1324 = vpop.permute.xlu0 %1323
          %v1326 = vmul.f32 %v1324, %v1320
          %1328 = vrot.lane.b32.xlu0 %v1315, 16
          %v1329 = vpop.permute.xlu0 %1328
          %v1331 = vadd.f32 %v1326, %v1329
          %vm1332 = vcmask 195712
          %1333 = vst.msk [vmem:[#allocation5] sm:$0xff] %vm1332, %v1331
          %v1334 = vld [vmem:[#allocation2] sm:$0xf]
          %v1336 = vunpack.c.l.b16 %v1334
          %v1337 = vpack.c.b16 %v1336, %v1336
          %1338 = vrot.lane.b32.xlu0 %v1337, 100
          %v1339 = vpop.permute.xlu0 %1338
          %1340 = vrot.lane.b32.xlu0 %v746, 116
          %v1341 = vpop.permute.xlu0 %1340
          %v1343 = vsel %vm764, %v1339, 0
          %v1346 = vsel %vm764, %v1341, 0
          %1348 = vmatprep.subr.bf16.mxu0 0
          %1349 = vmatpush1.bf16.xpose.msra.mxu0 %v1346
          %1350 = vmatprep.subr.bf16.mxu0 0
          %1351 = vmatpush1.bf16.xpose.msra.mxu0 0
          %1352 = vmatprep.subr.bf16.mxu0 0
          %1353 = vmatpush1.bf16.xpose.msra.mxu0 0
          %1354 = vmatprep.subr.bf16.mxu0 0
          %1355 = vmatpush1.bf16.xpose.msra.mxu0 0
          %1356 = vmatprep.subr.bf16.mxu0 0
          %1357 = vmatpush1.bf16.xpose.msra.mxu0 0
          %1358 = vmatprep.subr.bf16.mxu0 0
          %1359 = vmatpush1.bf16.xpose.msra.mxu0 0
          %1360 = vmatprep.subr.bf16.mxu0 0
          %1361 = vmatpush1.bf16.xpose.msra.mxu0 0
          %1362 = vmatprep.subr.bf16.mxu0 0
          %1363 = vmatpush1.bf16.xpose.msra.mxu0 0
          %1364 = vmatprep.subr.bf16.mxu0 0
          %1365 = vmatpush1.bf16.xpose.msra.mxu0 0
          %1366 = vmatprep.subr.bf16.mxu0 0
          %1367 = vmatpush1.bf16.xpose.msra.mxu0 0
          %1368 = vmatprep.subr.bf16.mxu0 0
          %1369 = vmatpush1.bf16.xpose.msra.mxu0 0
          %1370 = vmatprep.subr.bf16.mxu0 0
          %1371 = vmatpush1.bf16.xpose.msra.mxu0 0
          %1372 = vmatprep.subr.bf16.mxu0 0
          %1373 = vmatpush1.bf16.xpose.msra.mxu0 0
          %1374 = vmatprep.subr.bf16.mxu0 0
          %1375 = vmatpush1.bf16.xpose.msra.mxu0 0
          %1376 = vmatprep.subr.bf16.mxu0 0
          %1377 = vmatpush1.bf16.xpose.msra.mxu0 0
          %1378 = vmatprep.subr.bf16.mxu0 0
          %1379 = vmatpush1.bf16.xpose.msra.mxu0 0
          %1380 = vmatprep.mubr.bf16.mxu0 0
          %1381 = vmatmul.mubr.bf16.gmra.mrb[0].mxu0 %v1343
          %v1382 = vpop.f32.mrb[0].mxu0
          %v1383 = vadd.f32 0.0, %v1382
          %v1384 = vpop.f32.mrb[0].mxu0
          %v1385 = vpop.f32.mrb[0].mxu0
          %v1386 = vpop.f32.mrb[0].mxu0
          %1387 = vdwg.mxu0
          %1388 = vrot.lane.b32.xlu0 %v1337, 116
          %v1389 = vpop.permute.xlu0 %1388
          %1390 = vrot.lane.b32.xlu0 %v734, 116
          %v1391 = vpop.permute.xlu0 %1390
          %v1393 = vsel %vm764, %v1389, 0
          %v1396 = vsel %vm764, %v1391, 0
          %1398 = vmatprep.subr.bf16.mxu0 0
          %1399 = vmatpush1.bf16.xpose.msra.mxu0 %v1396
          %1400 = vmatprep.subr.bf16.mxu0 0
          %1401 = vmatpush1.bf16.xpose.msra.mxu0 0
          %1402 = vmatprep.subr.bf16.mxu0 0
          %1403 = vmatpush1.bf16.xpose.msra.mxu0 0
          %1404 = vmatprep.subr.bf16.mxu0 0
          %1405 = vmatpush1.bf16.xpose.msra.mxu0 0
          %1406 = vmatprep.subr.bf16.mxu0 0
          %1407 = vmatpush1.bf16.xpose.msra.mxu0 0
          %1408 = vmatprep.subr.bf16.mxu0 0
          %1409 = vmatpush1.bf16.xpose.msra.mxu0 0
          %1410 = vmatprep.subr.bf16.mxu0 0
          %1411 = vmatpush1.bf16.xpose.msra.mxu0 0
          %1412 = vmatprep.subr.bf16.mxu0 0
          %1413 = vmatpush1.bf16.xpose.msra.mxu0 0
          %1414 = vmatprep.subr.bf16.mxu0 0
          %1415 = vmatpush1.bf16.xpose.msra.mxu0 0
          %1416 = vmatprep.subr.bf16.mxu0 0
          %1417 = vmatpush1.bf16.xpose.msra.mxu0 0
          %1418 = vmatprep.subr.bf16.mxu0 0
          %1419 = vmatpush1.bf16.xpose.msra.mxu0 0
          %1420 = vmatprep.subr.bf16.mxu0 0
          %1421 = vmatpush1.bf16.xpose.msra.mxu0 0
          %1422 = vmatprep.subr.bf16.mxu0 0
          %1423 = vmatpush1.bf16.xpose.msra.mxu0 0
          %1424 = vmatprep.subr.bf16.mxu0 0
          %1425 = vmatpush1.bf16.xpose.msra.mxu0 0
          %1426 = vmatprep.subr.bf16.mxu0 0
          %1427 = vmatpush1.bf16.xpose.msra.mxu0 0
          %1428 = vmatprep.subr.bf16.mxu0 0
          %1429 = vmatpush1.bf16.xpose.msra.mxu0 0
          %1430 = vmatprep.mubr.bf16.mxu0 0
          %1431 = vmatmul.mubr.bf16.gmra.mrb[0].mxu0 %v1393
          %v1432 = vpop.f32.mrb[0].mxu0
          %v1433 = vadd.f32 %v1383, %v1432
          %v1434 = vpop.f32.mrb[0].mxu0
          %v1435 = vpop.f32.mrb[0].mxu0
          %v1436 = vpop.f32.mrb[0].mxu0
          %1437 = vdwg.mxu0
          %v1438 = vsel %vm757, %v1433, -inf
          %s1439 = scalar_lea.vmem [#allocation3], 24
          %v1440 = vld [vmem:[%s1439] sm:$0xff]
          %s1441 = scalar_lea.vmem [#allocation4], 24
          %v1442 = vld [vmem:[%s1441] sm:$0xff]
          %v1443 = vsel %vm860, %v1438, -inf
          %1444 = vmax.xlane.f32.xlu0 %v1443
          %v1445 = vpop.xlane.xlu0 %1444
          %v1446 = vmax.f32 %v1440, %v1445
          %v1447 = vsub.f32 %v1440, %v1446
          %v1448 = vmul.f32 %v1447, 1.442695
          %v1449 = vpow.pop %v1448
          %1451 = vset.pattern.permute.xlu0 0
          %1452 = vperm.xlu0 %1451, %v1446
          %v1453 = vpop.permute.xlu0 %1452
          %v1455 = vsub.f32 %v1438, %v1453
          %v1456 = vmul.f32 %v1455, 1.442695
          %v1457 = vpow.pop %v1456
          %v1458 = vmul.f32 %v1449, %v1442
          %v1459 = vsel %vm860, %v1457, 0.0
          %1460 = vadd.xlane.f32.xlu0 %v1459
          %v1461 = vpop.xlane.xlu0 %1460
          %v1462 = vadd.f32 %v1458, %v1461
          %1463 = vst.msk [vmem:[%s1441] sm:$0xff] %vm881, %v1462
          %1464 = vst.msk [vmem:[%s1439] sm:$0xff] %vm881, %v1446
          %v1465 = vpack.c.bf16 %v1457, %v1457
          %1466 = vrot.lane.b32.xlu0 %v722, 72
          %v1467 = vpop.permute.xlu0 %1466
          %v1469 = vsel %vm860, %v1465, 0
          %v1472 = vsel %vm891, %v1467, 0
          %1474 = vmatprep.subr.bf16.mxu0 0
          %1475 = vmatpush1.bf16.msra.mxu0 %v1472
          %1476 = vmatprep.subr.bf16.mxu0 0
          %1477 = vmatpush1.bf16.msra.mxu0 0
          %1478 = vmatprep.subr.bf16.mxu0 0
          %1479 = vmatpush1.bf16.msra.mxu0 0
          %1480 = vmatprep.subr.bf16.mxu0 0
          %1481 = vmatpush1.bf16.msra.mxu0 0
          %1482 = vmatprep.subr.bf16.mxu0 0
          %1483 = vmatpush1.bf16.msra.mxu0 0
          %1484 = vmatprep.subr.bf16.mxu0 0
          %1485 = vmatpush1.bf16.msra.mxu0 0
          %1486 = vmatprep.subr.bf16.mxu0 0
          %1487 = vmatpush1.bf16.msra.mxu0 0
          %1488 = vmatprep.subr.bf16.mxu0 0
          %1489 = vmatpush1.bf16.msra.mxu0 0
          %1490 = vmatprep.subr.bf16.mxu0 0
          %1491 = vmatpush1.bf16.msra.mxu0 0
          %1492 = vmatprep.subr.bf16.mxu0 0
          %1493 = vmatpush1.bf16.msra.mxu0 0
          %1494 = vmatprep.subr.bf16.mxu0 0
          %1495 = vmatpush1.bf16.msra.mxu0 0
          %1496 = vmatprep.subr.bf16.mxu0 0
          %1497 = vmatpush1.bf16.msra.mxu0 0
          %1498 = vmatprep.subr.bf16.mxu0 0
          %1499 = vmatpush1.bf16.msra.mxu0 0
          %1500 = vmatprep.subr.bf16.mxu0 0
          %1501 = vmatpush1.bf16.msra.mxu0 0
          %1502 = vmatprep.subr.bf16.mxu0 0
          %1503 = vmatpush1.bf16.msra.mxu0 0
          %1504 = vmatprep.subr.bf16.mxu0 0
          %1505 = vmatpush1.bf16.msra.mxu0 0
          %1506 = vmatprep.mubr.bf16.mxu0 0
          %1507 = vmatmul.mubr.bf16.gmra.mrb[0].mxu0 %v1469
          %v1508 = vpop.f32.mrb[0].mxu0
          %v1509 = vadd.f32 0.0, %v1508
          %v1510 = vpop.f32.mrb[0].mxu0
          %v1511 = vpop.f32.mrb[0].mxu0
          %v1512 = vpop.f32.mrb[0].mxu0
          %1513 = vdwg.mxu0
          %v1514 = vld [vmem:[#allocation5] sm:$0xff]
          %1516 = vset.pattern.permute.xlu0 0
          %1517 = vperm.xlu0 %1516, %v1449
          %v1518 = vpop.permute.xlu0 %1517
          %v1520 = vmul.f32 %v1518, %v1514
          %1522 = vrot.lane.b32.xlu0 %v1509, 24
          %v1523 = vpop.permute.xlu0 %1522
          %v1525 = vadd.f32 %v1520, %v1523
          %vm1526 = vcmask 261312
          %1527 = vst.msk [vmem:[#allocation5] sm:$0xff] %vm1526, %v1525
        $region96: #{tpu_custom_call.1} parent=59 // pred_fallthru
          _
        // Predicated region
        $region97: #{tpu_custom_call.1} parent=59 // pred_check
          %p1528 = pneg %p544
        $region98: #{tpu_custom_call.1} parent=59 // pred_check_branch
          %1530 = sbr.rel (%p1528) target = $region100
        $region99: #{tpu_custom_call.1} parent=59 // pred_region
          %v1531 = vld [vmem:[#allocation4] sm:$0xff]
          %v1532 = vrcp.pop %v1531
          %v1533 = vld [vmem:[#allocation5] sm:$0xff]
          %1535 = vset.pattern.permute.xlu0 0
          %1536 = vperm.xlu0 %1535, %v1532
          %v1537 = vpop.permute.xlu0 %1536
          %v1539 = vmul.f32 %v1533, %v1537
          %v1540 = vpack.c.bf16 %v1539, %v1539
          %vm1541 = vcmask 60416
          %1542 = vst.msk [vmem:[#allocation2] sm:$0xf] %vm1541, %v1540
          %s1543 = scalar_lea.vmem [#allocation4], 8
          %v1544 = vld [vmem:[%s1543] sm:$0xff]
          %v1545 = vrcp.pop %v1544
          %v1546 = vld [vmem:[#allocation5] sm:$0xff]
          %1548 = vset.pattern.permute.xlu0 0
          %1549 = vperm.xlu0 %1548, %v1545
          %v1550 = vpop.permute.xlu0 %1549
          %v1552 = vmul.f32 %v1546, %v1550
          %v1553 = vpack.c.bf16 %v1552, %v1552
          %vm1554 = vcmask 126016
          %1555 = vst.msk [vmem:[#allocation2] sm:$0xf] %vm1554, %v1553
          %s1556 = scalar_lea.vmem [#allocation4], 16
          %v1557 = vld [vmem:[%s1556] sm:$0xff]
          %v1558 = vrcp.pop %v1557
          %v1559 = vld [vmem:[#allocation5] sm:$0xff]
          %1561 = vset.pattern.permute.xlu0 0
          %1562 = vperm.xlu0 %1561, %v1558
          %v1563 = vpop.permute.xlu0 %1562
          %v1565 = vmul.f32 %v1559, %v1563
          %v1566 = vpack.c.bf16 %v1565, %v1565
          %vm1567 = vcmask 191616
          %1568 = vst.msk [vmem:[#allocation2] sm:$0xf] %vm1567, %v1566
          %s1569 = scalar_lea.vmem [#allocation4], 24
          %v1570 = vld [vmem:[%s1569] sm:$0xff]
          %v1571 = vrcp.pop %v1570
          %v1572 = vld [vmem:[#allocation5] sm:$0xff]
          %1574 = vset.pattern.permute.xlu0 0
          %1575 = vperm.xlu0 %1574, %v1571
          %v1576 = vpop.permute.xlu0 %1575
          %v1578 = vmul.f32 %v1572, %v1576
          %v1579 = vpack.c.bf16 %v1578, %v1578
          %vm1580 = vcmask 257216
          %1581 = vst.msk [vmem:[#allocation2] sm:$0xf] %vm1580, %v1579
          %v1582 = vld [vmem:[#allocation2] sm:$0xf]
          %v1583 = vld [vmem:[%s8] sm:$0xf]
          %v1584 = vld [vmem:[%s8 + $0x4] sm:$0xf]
          %v1585 = vld [vmem:[%s8 + $0x8] sm:$0xf]
          %v1586 = vld [vmem:[%s8 + $0xc] sm:$0xf]
          %v1587 = vld [vmem:[%s9] sm:$0x1]
          %v1589 = vlaneseq
          %v1590 = vshrl.u32 %v1589, 7
          %v1591 = vsub.s32 0, %v1590
          %v1592 = vrot.slane %v1587, %v1591
          %v1598 = vunpack.c.l.b16 %v1583
          %v1599 = vunpack.c.l.b16 %v1584
          %v1600 = vunpack.c.l.b16 %v1585
          %v1601 = vunpack.c.l.b16 %v1586
          %v1602 = vpack.c.b16 %v1599, %v1598
          %v1603 = vpack.c.b16 %v1601, %v1600
          %vm1606 = vcmask 261120
          %v1608 = vsel %vm1606, %v1582, 0
          %1610 = vmatprep.subr.bf16.mxu0 0
          %1611 = vmatpush1.bf16.msra.mxu0 %v1602
          %1612 = vmatprep.subr.bf16.mxu0 0
          %1613 = vmatpush1.bf16.msra.mxu0 %v1603
          %1614 = vmatprep.subr.bf16.mxu0 0
          %1615 = vmatpush1.bf16.msra.mxu0 0
          %1616 = vmatprep.subr.bf16.mxu0 0
          %1617 = vmatpush1.bf16.msra.mxu0 0
          %1618 = vmatprep.subr.bf16.mxu0 0
          %1619 = vmatpush1.bf16.msra.mxu0 0
          %1620 = vmatprep.subr.bf16.mxu0 0
          %1621 = vmatpush1.bf16.msra.mxu0 0
          %1622 = vmatprep.subr.bf16.mxu0 0
          %1623 = vmatpush1.bf16.msra.mxu0 0
          %1624 = vmatprep.subr.bf16.mxu0 0
          %1625 = vmatpush1.bf16.msra.mxu0 0
          %1626 = vmatprep.subr.bf16.mxu0 0
          %1627 = vmatpush1.bf16.msra.mxu0 0
          %1628 = vmatprep.subr.bf16.mxu0 0
          %1629 = vmatpush1.bf16.msra.mxu0 0
          %1630 = vmatprep.subr.bf16.mxu0 0
          %1631 = vmatpush1.bf16.msra.mxu0 0
          %1632 = vmatprep.subr.bf16.mxu0 0
          %1633 = vmatpush1.bf16.msra.mxu0 0
          %1634 = vmatprep.subr.bf16.mxu0 0
          %1635 = vmatpush1.bf16.msra.mxu0 0
          %1636 = vmatprep.subr.bf16.mxu0 0
          %1637 = vmatpush1.bf16.msra.mxu0 0
          %1638 = vmatprep.subr.bf16.mxu0 0
          %1639 = vmatpush1.bf16.msra.mxu0 0
          %1640 = vmatprep.subr.bf16.mxu0 0
          %1641 = vmatpush1.bf16.msra.mxu0 0
          %1642 = vmatprep.mubr.bf16.mxu0 0
          %1643 = vmatmul.mubr.bf16.gmra.mrb[0].mxu0 %v1608
          %v1644 = vpop.f32.mrb[0].mxu0
          %v1645 = vadd.f32 %v1592, %v1644
          %v1646 = vpop.f32.mrb[0].mxu0
          %v1647 = vpop.f32.mrb[0].mxu0
          %v1648 = vpop.f32.mrb[0].mxu0
          %1649 = vdwg.mxu0
          %v1650 = vpack.c.bf16 %v1645, %v1645
          %vm1651 = vcmask 257024
          %1652 = vst.msk [vmem:[%s538] sm:$0xf] %vm1651, %v1650
        $region100: #{tpu_custom_call.1} parent=59 // pred_fallthru
          _
        %s1653 = sand.u32 %s305, 1
        %s1654 = scalar_lea.sflag [#allocation8], %s1653
        %s1655 = sand.u32 %s305, 1
        %s1656 = smul.addr %s1655, 4
        %s1657 = scalar_lea.vmem [#allocation18], %s1656
        // Predicated region
        $region101: #{tpu_custom_call.1} parent=59 // pred_check
          %p1658 = pneg %p315
        $region102: #{tpu_custom_call.1} parent=59 // pred_check_branch
          %1660 = sbr.rel (%p1658) target = $region104
        $region103: #{tpu_custom_call.1} parent=59 // pred_region
          %s1662 = ssub.s32 64, 64
          %1663 = vsyncadd %s1654, %s1662
          %s1664 = sadd.s32 %s38, %s37
          %s1665 = smul.addr %s1664, 64
          %s1666 = scalar_lea.hbm %s10, %s1665
          %s1668 = sshll.u32 %s1657, 4
          %s1669 = int_to_ptr.vmem [resolvable:$true] %s1668
          %1671 = dma.vmem_to_hbm [thread:$0]  %s1669, 64, %s1666, %s1654
        $region104: #{tpu_custom_call.1} parent=59 // pred_fallthru
          _
      $region60: #{tpu_custom_call.1} parent=5 // pred_fallthru
        _
      %p1672 = scmp.le.s32.totalorder 2, %s27
      // Predicated region
      $region105: #{tpu_custom_call.1} parent=5 // pred_check
        %p1673 = pneg %p1672
      $region106: #{tpu_custom_call.1} parent=5 // pred_check_branch
        %1675 = sbr.rel (%p1673) target = $region108
      $region107: #{tpu_custom_call.1} parent=5 // pred_region
        %s1676 = ssub.s32 %s27, 2
        // Predicated region
        $region109: #{tpu_custom_call.1} parent=107 // pred_check
          %p1677 = pneg %p321
        $region110: #{tpu_custom_call.1} parent=107 // pred_check_branch
          %1679 = sbr.rel (%p1677) target = $region112
        $region111: #{tpu_custom_call.1} parent=107 // pred_region
          %s1680 = sand.u32 %s306, 1
          %s1681 = scalar_lea.sflag [#allocation8], %s1680
          %s1682 = sand.u32 %s306, 1
          %s1683 = smul.addr %s1682, 4
          %s1684 = scalar_lea.vmem [#allocation18], %s1683
          %1685 = dma.done %s1681, 64
        $region112: #{tpu_custom_call.1} parent=107 // pred_fallthru
          _
      $region108: #{tpu_custom_call.1} parent=5 // pred_fallthru
        _
    $region6: #{tpu_custom_call.1} parent=1 // loop_footer
      %s31 = sadd.s32 1, %s27
    $region7: #{tpu_custom_call.1} parent=1 // loop_footer_branch
      %26 = sbr.rel target = $region3
    $region8: #{tpu_custom_call.1} parent=1 // loop_exit
      _
    %1686 = vsyncpa [#allocation7], 1
    %s1687 = scalar_lea.sflag [#allocation7], 1
    %1688 = vsyncpa %s1687, 1
    %1689 = vsyncpa [#allocation10], 1
    %s1690 = scalar_lea.sflag [#allocation10], 1
    %1691 = vsyncpa %s1690, 1
    %1692 = vsyncpa [#allocation13], 1
    %1693 = vsyncpa [#allocation16], 1
    %1694 = vsyncpa [#allocation8], 1
    %s1695 = scalar_lea.sflag [#allocation8], 1
    %1696 = vsyncpa %s1695, 1

// kernel: tpu_custom_call.1
$region0: #{tpu_custom_call.1}
  #allocation0 [shape = 'u32[]', space=smem, size = 0x4, offset = 0x4, fixed_abs, tag = 'smem constant byte address 0x4 - core index']
  #allocation1 [shape = 'u32[144,128]{1,0:T(1,128)}', space=vmem, size = 0x12000, scoped, tag = 'internal scratch']
  #allocation2 [shape = 'bf16[8,32]{1,0:T(8,128)(2,1)}', space=vmem, size = 0x800, scoped, tag = 'scratch operand']
  #allocation3 [shape = 'f32[4,8,1]{2,1,0:T(8,128)}', space=vmem, size = 0x4000, scoped, tag = 'scratch operand']
  #allocation4 [shape = 'f32[4,8,1]{2,1,0:T(8,128)}', space=vmem, size = 0x4000, scoped, tag = 'scratch operand']
  #allocation5 [shape = 'f32[8,32]{1,0:T(8,128)}', space=vmem, size = 0x1000, scoped, tag = 'scratch operand']
  %s0 = inlined_call_operand.hbm [shape: bf16[2,8,32], index: 0, kind: input, shape index: {}]
  %s1 = inlined_call_operand.hbm [shape: bf16[2,8,32], index: 1, kind: input, shape index: {}]
  %s2 = inlined_call_operand.hbm [shape: bf16[32,32], index: 2, kind: input, shape index: {}]
  %s3 = inlined_call_operand.hbm [shape: bf16[32,64], index: 3, kind: input, shape index: {}]
  %s4 = inlined_call_operand.vmem [shape: f32[8,16], index: 4, kind: input, shape index: {}]
  %s5 = inlined_call_operand.hbm [shape: f32[8,16], index: 5, kind: input, shape index: {}]
  %s6 = inlined_call_operand.hbm [shape: f32[8,16], index: 6, kind: input, shape index: {}]
  %s7 = inlined_call_operand.hbm [shape: f32[8,16], index: 7, kind: input, shape index: {}]
  %s8 = inlined_call_operand.vmem [shape: bf16[32,32], index: 8, kind: input, shape index: {}]
  %s9 = inlined_call_operand.vmem [shape: f32[1,32], index: 9, kind: input, shape index: {}]
  %s10 = inlined_call_operand.hbm [shape: bf16[2,8,32], index: 10, kind: output, shape index: {}]
  %s11 = sld [smem:[#allocation0]]
  $region113: #{tpu_custom_call.1} parent=0
    _
  %s13 = ssub.s32 1, %s11
  %s14 = scalar_select 0, %s13, %s11
  $region1: #{tpu_custom_call.1} parent=0
    #allocation6 [shape = 'u8[4096]{0}', space=vmem, size = 0x1000, scoped, tag = 'input window, operand 0']
    #allocation7 [shape = 's32[2]{0}', space=sflag, size = 0x8, scoped, tag = 'scoped memory for tpu_custom_call.1']
    #allocation8 [shape = 's32[2]{0}', space=sflag, size = 0x8, scoped, tag = 'scoped memory for tpu_custom_call.1']
    #allocation9 [shape = 'u8[4096]{0}', space=vmem, size = 0x1000, scoped, tag = 'input window, operand 1']
    #allocation10 [shape = 's32[2]{0}', space=sflag, size = 0x8, scoped, tag = 'scoped memory for tpu_custom_call.1']
    #allocation11 [shape = 'u8[8192]{0}', space=vmem, size = 0x2000, scoped, tag = 'input window, operand 2, single buffered']
    #allocation12 [shape = 'u8[8192]{0}', space=vmem, size = 0x2000, scoped, tag = 'input window, operand 3, single buffered']
    #allocation13 [shape = 's32[1]{0}', space=sflag, size = 0x4, scoped, tag = 'scoped memory for tpu_custom_call.1']
    #allocation14 [shape = 'u8[4096]{0}', space=vmem, size = 0x1000, scoped, tag = 'input window, operand 5, single buffered']
    #allocation15 [shape = 'u8[4096]{0}', space=vmem, size = 0x1000, scoped, tag = 'input window, operand 6, single buffered']
    #allocation16 [shape = 's32[1]{0}', space=sflag, size = 0x4, scoped, tag = 'scoped memory for tpu_custom_call.1']
    #allocation17 [shape = 'u8[4096]{0}', space=vmem, size = 0x1000, scoped, tag = 'input window, operand 7, single buffered']
    #allocation18 [shape = 'u8[4096]{0}', space=vmem, size = 0x1000, scoped, tag = 'output window, operand 0']
    %15 = vsyncpa [#allocation7], 0
    %s16 = scalar_lea.sflag [#allocation7], 1
    %17 = vsyncpa %s16, 0
    %18 = vsyncpa [#allocation10], 0
    %s19 = scalar_lea.sflag [#allocation10], 1
    %20 = vsyncpa %s19, 0
    %21 = vsyncpa [#allocation13], 0
    %22 = vsyncpa [#allocation16], 0
    %23 = vsyncpa [#allocation8], 0
    %s24 = scalar_lea.sflag [#allocation8], 1
    %25 = vsyncpa %s24, 0
    loop: start=0, step=1, limit=4
    $region2: #{tpu_custom_call.1} parent=1 // loop_pre_header
      _
    $region3: #{tpu_custom_call.1} parent=1 // loop_header
      %s27 = sphi 0, %s31
      %p28 = scmp.ge.s32.totalorder %s27, 4
      %s34 = sphi 0, %s53
      %s35 = sphi 0, %s49
      %s36 = sphi 0, %s45
      %s37 = sphi 0, %s34
      %s38 = sphi 0, %s35
      %s39 = sphi 0, %s36
      %s40 = sphi 0, %s37
      %s41 = sphi 0, %s38
      %s42 = sphi 0, %s39
      %s58 = sphi 0, %s60
      %s61 = sphi 0, %s58
      %s62 = sphi 0, %s61
      %s78 = sphi 0, %s62
      %s86 = sphi 0, %s88
      %s89 = sphi 0, %s86
      %s90 = sphi 0, %s89
      %s106 = sphi 0, %s90
      %s110 = sphi 0, %s110
      %s112 = sphi 0, %s110
      %s113 = sphi 0, %s112
      %s127 = sphi 0, %s113
      %s131 = sphi 0, %s131
      %s133 = sphi 0, %s131
      %s134 = sphi 0, %s133
      %s148 = sphi 0, %s134
      %s154 = sphi 0, %s156
      %s157 = sphi 0, %s154
      %s158 = sphi 0, %s157
      %s174 = sphi 0, %s158
      %s180 = sphi 0, %s182
      %s183 = sphi 0, %s180
      %s184 = sphi 0, %s183
      %s200 = sphi 0, %s184
      %s206 = sphi 0, %s208
      %s209 = sphi 0, %s206
      %s210 = sphi 0, %s209
      %s226 = sphi 0, %s210
      %s232 = sphi 0, %s234
      %s235 = sphi 0, %s232
      %s236 = sphi 0, %s235
      %s252 = sphi 0, %s236
      %s256 = sphi 0, %s256
      %s258 = sphi 0, %s256
      %s259 = sphi 0, %s258
      %s273 = sphi 0, %s259
      %s277 = sphi 0, %s277
      %s279 = sphi 0, %s277
      %s280 = sphi 0, %s279
      %s294 = sphi 0, %s280
      %s302 = sphi 0, %s304
      %s305 = sphi 0, %s302
      %s306 = sphi 0, %s305
      %s322 = sphi 0, %s306
    $region4: #{tpu_custom_call.1} parent=1 // loop_header_branch
      %30 = sbr.rel (%p28) target = $region8
    $region5: #{tpu_custom_call.1} parent=1 // loop_body
      %s32 = ssub.s32 %s27, 1
      %s33 = ssub.s32 %s27, 2
      %s43 = sadd.s32 1, %s36
      %p44 = scmp.ge.s32.totalorder %s43, 1
      %s45 = scalar_select %p44, 0, %s43
      %s46 = sadd.s32 1, %s35
      %s47 = scalar_select %p44, %s46, %s35
      %p48 = scmp.ge.s32.totalorder %s47, 1
      %s49 = scalar_select %p48, 0, %s47
      %s50 = sadd.s32 1, %s34
      %s51 = scalar_select %p48, %s50, %s34
      %p52 = scmp.ge.s32.totalorder %s51, 2
      %s53 = scalar_select %p52, 0, %s51
      %s54 = ssub.s32 %s34, %s53
      %s55 = ssub.s32 %s35, %s49
      %s56 = sor.u32 %s54, %s55
      %p57 = scmp.eq.s32.totalorder %s56, 0
      %s59 = sadd.s32 %s58, 1
      %s60 = scalar_select %p57, %s58, %s59
      %p63 = pneg %p57
      %p64 = scmp.eq.s32.totalorder %s27, 1
      %p65 = por %p63, %p64
      %p66 = scmp.ne.s32.totalorder %s58, %s61
      %p67 = scmp.eq.s32.totalorder %s27, 0
      %p68 = por %p66, %p67
      %p69 = scmp.ne.s32.totalorder %s58, %s61
      %p70 = scmp.eq.s32.totalorder %s32, 1
      %p71 = por %p69, %p70
      %p72 = scmp.ne.s32.totalorder %s61, %s62
      %p73 = scmp.eq.s32.totalorder %s32, 0
      %p74 = por %p72, %p73
      %p75 = scmp.ne.s32.totalorder %s61, %s62
      %p76 = scmp.eq.s32.totalorder %s33, 1
      %p77 = por %p75, %p76
      %p79 = scmp.ne.s32.totalorder %s62, %s78
      %p80 = scmp.eq.s32.totalorder %s33, 0
      %p81 = por %p79, %p80
      %s82 = ssub.s32 %s34, %s53
      %s83 = ssub.s32 %s36, %s45
      %s84 = sor.u32 %s82, %s83
      %p85 = scmp.eq.s32.totalorder %s84, 0
      %s87 = sadd.s32 %s86, 1
      %s88 = scalar_select %p85, %s86, %s87
      %p91 = pneg %p85
      %p92 = scmp.eq.s32.totalorder %s27, 1
      %p93 = por %p91, %p92
      %p94 = scmp.ne.s32.totalorder %s86, %s89
      %p95 = scmp.eq.s32.totalorder %s27, 0
      %p96 = por %p94, %p95
      %p97 = scmp.ne.s32.totalorder %s86, %s89
      %p98 = scmp.eq.s32.totalorder %s32, 1
      %p99 = por %p97, %p98
      %p100 = scmp.ne.s32.totalorder %s89, %s90
      %p101 = scmp.eq.s32.totalorder %s32, 0
      %p102 = por %p100, %p101
      %p103 = scmp.ne.s32.totalorder %s89, %s90
      %p104 = scmp.eq.s32.totalorder %s33, 1
      %p105 = por %p103, %p104
      %p107 = scmp.ne.s32.totalorder %s90, %s106
      %p108 = scmp.eq.s32.totalorder %s33, 0
      %p109 = por %p107, %p108
      %s111 = sadd.s32 %s110, 1
      %p114 = scmp.eq.s32.totalorder %s27, 1
      %p115 = scmp.ne.s32.totalorder %s110, %s112
      %p116 = scmp.eq.s32.totalorder %s27, 0
      %p117 = por %p115, %p116
      %p118 = scmp.ne.s32.totalorder %s110, %s112
      %p119 = scmp.eq.s32.totalorder %s32, 1
      %p120 = por %p118, %p119
      %p121 = scmp.ne.s32.totalorder %s112, %s113
      %p122 = scmp.eq.s32.totalorder %s32, 0
      %p123 = por %p121, %p122
      %p124 = scmp.ne.s32.totalorder %s112, %s113
      %p125 = scmp.eq.s32.totalorder %s33, 1
      %p126 = por %p124, %p125
      %p128 = scmp.ne.s32.totalorder %s113, %s127
      %p129 = scmp.eq.s32.totalorder %s33, 0
      %p130 = por %p128, %p129
      %s132 = sadd.s32 %s131, 1
      %p135 = scmp.eq.s32.totalorder %s27, 1
      %p136 = scmp.ne.s32.totalorder %s131, %s133
      %p137 = scmp.eq.s32.totalorder %s27, 0
      %p138 = por %p136, %p137
      %p139 = scmp.ne.s32.totalorder %s131, %s133
      %p140 = scmp.eq.s32.totalorder %s32, 1
      %p141 = por %p139, %p140
      %p142 = scmp.ne.s32.totalorder %s133, %s134
      %p143 = scmp.eq.s32.totalorder %s32, 0
      %p144 = por %p142, %p143
      %p145 = scmp.ne.s32.totalorder %s133, %s134
      %p146 = scmp.eq.s32.totalorder %s33, 1
      %p147 = por %p145, %p146
      %p149 = scmp.ne.s32.totalorder %s134, %s148
      %p150 = scmp.eq.s32.totalorder %s33, 0
      %p151 = por %p149, %p150
      %s152 = ssub.s32 %s35, %s49
      %p153 = scmp.eq.s32.totalorder %s152, 0
      %s155 = sadd.s32 %s154, 1
      %s156 = scalar_select %p153, %s154, %s155
      %p159 = pneg %p153
      %p160 = scmp.eq.s32.totalorder %s27, 1
      %p161 = por %p159, %p160
      %p162 = scmp.ne.s32.totalorder %s154, %s157
      %p163 = scmp.eq.s32.totalorder %s27, 0
      %p164 = por %p162, %p163
      %p165 = scmp.ne.s32.totalorder %s154, %s157
      %p166 = scmp.eq.s32.totalorder %s32, 1
      %p167 = por %p165, %p166
      %p168 = scmp.ne.s32.totalorder %s157, %s158
      %p169 = scmp.eq.s32.totalorder %s32, 0
      %p170 = por %p168, %p169
      %p171 = scmp.ne.s32.totalorder %s157, %s158
      %p172 = scmp.eq.s32.totalorder %s33, 1
      %p173 = por %p171, %p172
      %p175 = scmp.ne.s32.totalorder %s158, %s174
      %p176 = scmp.eq.s32.totalorder %s33, 0
      %p177 = por %p175, %p176
      %s178 = ssub.s32 %s35, %s49
      %p179 = scmp.eq.s32.totalorder %s178, 0
      %s181 = sadd.s32 %s180, 1
      %s182 = scalar_select %p179, %s180, %s181
      %p185 = pneg %p179
      %p186 = scmp.eq.s32.totalorder %s27, 1
      %p187 = por %p185, %p186
      %p188 = scmp.ne.s32.totalorder %s180, %s183
      %p189 = scmp.eq.s32.totalorder %s27, 0
      %p190 = por %p188, %p189
      %p191 = scmp.ne.s32.totalorder %s180, %s183
      %p192 = scmp.eq.s32.totalorder %s32, 1
      %p193 = por %p191, %p192
      %p194 = scmp.ne.s32.totalorder %s183, %s184
      %p195 = scmp.eq.s32.totalorder %s32, 0
      %p196 = por %p194, %p195
      %p197 = scmp.ne.s32.totalorder %s183, %s184
      %p198 = scmp.eq.s32.totalorder %s33, 1
      %p199 = por %p197, %p198
      %p201 = scmp.ne.s32.totalorder %s184, %s200
      %p202 = scmp.eq.s32.totalorder %s33, 0
      %p203 = por %p201, %p202
      %s204 = ssub.s32 %s36, %s45
      %p205 = scmp.eq.s32.totalorder %s204, 0
      %s207 = sadd.s32 %s206, 1
      %s208 = scalar_select %p205, %s206, %s207
      %p211 = pneg %p205
      %p212 = scmp.eq.s32.totalorder %s27, 1
      %p213 = por %p211, %p212
      %p214 = scmp.ne.s32.totalorder %s206, %s209
      %p215 = scmp.eq.s32.totalorder %s27, 0
      %p216 = por %p214, %p215
      %p217 = scmp.ne.s32.totalorder %s206, %s209
      %p218 = scmp.eq.s32.totalorder %s32, 1
      %p219 = por %p217, %p218
      %p220 = scmp.ne.s32.totalorder %s209, %s210
      %p221 = scmp.eq.s32.totalorder %s32, 0
      %p222 = por %p220, %p221
      %p223 = scmp.ne.s32.totalorder %s209, %s210
      %p224 = scmp.eq.s32.totalorder %s33, 1
      %p225 = por %p223, %p224
      %p227 = scmp.ne.s32.totalorder %s210, %s226
      %p228 = scmp.eq.s32.totalorder %s33, 0
      %p229 = por %p227, %p228
      %s230 = ssub.s32 %s36, %s45
      %p231 = scmp.eq.s32.totalorder %s230, 0
      %s233 = sadd.s32 %s232, 1
      %s234 = scalar_select %p231, %s232, %s233
      %p237 = pneg %p231
      %p238 = scmp.eq.s32.totalorder %s27, 1
      %p239 = por %p237, %p238
      %p240 = scmp.ne.s32.totalorder %s232, %s235
      %p241 = scmp.eq.s32.totalorder %s27, 0
      %p242 = por %p240, %p241
      %p243 = scmp.ne.s32.totalorder %s232, %s235
      %p244 = scmp.eq.s32.totalorder %s32, 1
      %p245 = por %p243, %p244
      %p246 = scmp.ne.s32.totalorder %s235, %s236
      %p247 = scmp.eq.s32.totalorder %s32, 0
      %p248 = por %p246, %p247
      %p249 = scmp.ne.s32.totalorder %s235, %s236
      %p250 = scmp.eq.s32.totalorder %s33, 1
      %p251 = por %p249, %p250
      %p253 = scmp.ne.s32.totalorder %s236, %s252
      %p254 = scmp.eq.s32.totalorder %s33, 0
      %p255 = por %p253, %p254
      %s257 = sadd.s32 %s256, 1
      %p260 = scmp.eq.s32.totalorder %s27, 1
      %p261 = scmp.ne.s32.totalorder %s256, %s258
      %p262 = scmp.eq.s32.totalorder %s27, 0
      %p263 = por %p261, %p262
      %p264 = scmp.ne.s32.totalorder %s256, %s258
      %p265 = scmp.eq.s32.totalorder %s32, 1
      %p266 = por %p264, %p265
      %p267 = scmp.ne.s32.totalorder %s258, %s259
      %p268 = scmp.eq.s32.totalorder %s32, 0
      %p269 = por %p267, %p268
      %p270 = scmp.ne.s32.totalorder %s258, %s259
      %p271 = scmp.eq.s32.totalorder %s33, 1
      %p272 = por %p270, %p271
      %p274 = scmp.ne.s32.totalorder %s259, %s273
      %p275 = scmp.eq.s32.totalorder %s33, 0
      %p276 = por %p274, %p275
      %s278 = sadd.s32 %s277, 1
      %p281 = scmp.eq.s32.totalorder %s27, 1
      %p282 = scmp.ne.s32.totalorder %s277, %s279
      %p283 = scmp.eq.s32.totalorder %s27, 0
      %p284 = por %p282, %p283
      %p285 = scmp.ne.s32.totalorder %s277, %s279
      %p286 = scmp.eq.s32.totalorder %s32, 1
      %p287 = por %p285, %p286
      %p288 = scmp.ne.s32.totalorder %s279, %s280
      %p289 = scmp.eq.s32.totalorder %s32, 0
      %p290 = por %p288, %p289
      %p291 = scmp.ne.s32.totalorder %s279, %s280
      %p292 = scmp.eq.s32.totalorder %s33, 1
      %p293 = por %p291, %p292
      %p295 = scmp.ne.s32.totalorder %s280, %s294
      %p296 = scmp.eq.s32.totalorder %s33, 0
      %p297 = por %p295, %p296
      %s298 = ssub.s32 %s34, %s53
      %s299 = ssub.s32 %s35, %s49
      %s300 = sor.u32 %s298, %s299
      %p301 = scmp.eq.s32.totalorder %s300, 0
      %s303 = sadd.s32 %s302, 1
      %s304 = scalar_select %p301, %s302, %s303
      %p307 = pneg %p301
      %p308 = scmp.eq.s32.totalorder %s27, 1
      %p309 = por %p307, %p308
      %p310 = scmp.ne.s32.totalorder %s302, %s305
      %p311 = scmp.eq.s32.totalorder %s27, 0
      %p312 = por %p310, %p311
      %p313 = scmp.ne.s32.totalorder %s302, %s305
      %p314 = scmp.eq.s32.totalorder %s32, 1
      %p315 = por %p313, %p314
      %p316 = scmp.ne.s32.totalorder %s305, %s306
      %p317 = scmp.eq.s32.totalorder %s32, 0
      %p318 = por %p316, %p317
      %p319 = scmp.ne.s32.totalorder %s305, %s306
      %p320 = scmp.eq.s32.totalorder %s33, 1
      %p321 = por %p319, %p320
      %p323 = scmp.ne.s32.totalorder %s306, %s322
      %p324 = scmp.eq.s32.totalorder %s33, 0
      %p325 = por %p323, %p324
      %p326 = scmp.le.s32.totalorder 1, %s27
      %p327 = scmp.lt.s32.totalorder %s27, 3
      %p328 = pnand %p326, %p327
      %p329 = pneg %p328
      // Predicated region
      $region9: #{tpu_custom_call.1} parent=5 // pred_check
        _
      $region10: #{tpu_custom_call.1} parent=5 // pred_check_branch
        %331 = sbr.rel (%p328) target = $region12
      $region11: #{tpu_custom_call.1} parent=5 // pred_region
        %s332 = ssub.s32 %s27, 1
        // Predicated region
        $region13: #{tpu_custom_call.1} parent=11 // pred_check
          %p333 = pneg %p123
        $region14: #{tpu_custom_call.1} parent=11 // pred_check_branch
          %335 = sbr.rel (%p333) target = $region16
        $region15: #{tpu_custom_call.1} parent=11 // pred_region
          %s337 = ssub.s32 256, 256
          %338 = vsyncadd [#allocation10], %s337
          %s339 = sshll.u32 [#allocation11], 4
          %s340 = int_to_ptr.vmem [resolvable:$true] %s339
          %345 = dma.hbm_to_vmem [thread:$0]  %s2, 256, %s340, [#allocation10], 64, 64, 4
        $region16: #{tpu_custom_call.1} parent=11 // pred_fallthru
          _
        // Predicated region
        $region17: #{tpu_custom_call.1} parent=11 // pred_check
          %p346 = pneg %p144
        $region18: #{tpu_custom_call.1} parent=11 // pred_check_branch
          %348 = sbr.rel (%p346) target = $region20
        $region19: #{tpu_custom_call.1} parent=11 // pred_region
          %s350 = ssub.s32 256, 256
          %351 = vsyncadd [#allocation13], %s350
          %s352 = sshll.u32 [#allocation12], 4
          %s353 = int_to_ptr.vmem [resolvable:$true] %s352
          %358 = dma.hbm_to_vmem [thread:$0]  %s3, 256, %s353, [#allocation13], 64, 64, 4
        $region20: #{tpu_custom_call.1} parent=11 // pred_fallthru
          _
        // Predicated region
        $region21: #{tpu_custom_call.1} parent=11 // pred_check
          %p359 = pneg %p170
        $region22: #{tpu_custom_call.1} parent=11 // pred_check_branch
          %361 = sbr.rel (%p359) target = $region24
        $region23: #{tpu_custom_call.1} parent=11 // pred_region
          %p362 = scmp.lt.s32.totalorder %s38, 0
          %s363 = scalar_select %p362, %s38, 0
          %s364 = smul.addr %s363, 8
          %s365 = scalar_lea.vmem %s4, %s364
        $region24: #{tpu_custom_call.1} parent=11 // pred_fallthru
          _
        // Predicated region
        $region25: #{tpu_custom_call.1} parent=11 // pred_check
          %p366 = pneg %p196
        $region26: #{tpu_custom_call.1} parent=11 // pred_check_branch
          %368 = sbr.rel (%p366) target = $region28
        $region27: #{tpu_custom_call.1} parent=11 // pred_region
          %s370 = ssub.s32 128, 128
          %371 = vsyncadd [#allocation13], %s370
          %s372 = smul.addr %s38, 128
          %s373 = scalar_lea.hbm %s5, %s372
          %s375 = sshll.u32 [#allocation14], 4
          %s376 = int_to_ptr.vmem [resolvable:$true] %s375
          %378 = dma.hbm_to_vmem [thread:$0]  %s373, 128, %s376, [#allocation13]
        $region28: #{tpu_custom_call.1} parent=11 // pred_fallthru
          _
        // Predicated region
        $region29: #{tpu_custom_call.1} parent=11 // pred_check
          %p379 = pneg %p222
        $region30: #{tpu_custom_call.1} parent=11 // pred_check_branch
          %381 = sbr.rel (%p379) target = $region32
        $region31: #{tpu_custom_call.1} parent=11 // pred_region
          %s383 = ssub.s32 128, 128
          %384 = vsyncadd [#allocation16], %s383
          %s385 = smul.addr %s39, 128
          %s386 = scalar_lea.hbm %s6, %s385
          %s388 = sshll.u32 [#allocation15], 4
          %s389 = int_to_ptr.vmem [resolvable:$true] %s388
          %391 = dma.hbm_to_vmem [thread:$0]  %s386, 128, %s389, [#allocation16]
        $region32: #{tpu_custom_call.1} parent=11 // pred_fallthru
          _
        // Predicated region
        $region33: #{tpu_custom_call.1} parent=11 // pred_check
          %p392 = pneg %p248
        $region34: #{tpu_custom_call.1} parent=11 // pred_check_branch
          %394 = sbr.rel (%p392) target = $region36
        $region35: #{tpu_custom_call.1} parent=11 // pred_region
          %s396 = ssub.s32 128, 128
          %397 = vsyncadd [#allocation16], %s396
          %s398 = smul.addr %s39, 128
          %s399 = scalar_lea.hbm %s7, %s398
          %s401 = sshll.u32 [#allocation17], 4
          %s402 = int_to_ptr.vmem [resolvable:$true] %s401
          %404 = dma.hbm_to_vmem [thread:$0]  %s399, 128, %s402, [#allocation16]
        $region36: #{tpu_custom_call.1} parent=11 // pred_fallthru
          _
        // Predicated region
        $region37: #{tpu_custom_call.1} parent=11 // pred_check
          %p405 = pneg %p269
        $region38: #{tpu_custom_call.1} parent=11 // pred_check_branch
          %407 = sbr.rel (%p405) target = $region40
        $region39: #{tpu_custom_call.1} parent=11 // pred_region
          _
        $region40: #{tpu_custom_call.1} parent=11 // pred_fallthru
          _
        // Predicated region
        $region41: #{tpu_custom_call.1} parent=11 // pred_check
          %p408 = pneg %p290
        $region42: #{tpu_custom_call.1} parent=11 // pred_check_branch
          %410 = sbr.rel (%p408) target = $region44
        $region43: #{tpu_custom_call.1} parent=11 // pred_region
          _
        $region44: #{tpu_custom_call.1} parent=11 // pred_fallthru
          _
      $region12: #{tpu_custom_call.1} parent=5 // pred_fallthru
        _
      %p411 = scmp.lt.s32.totalorder %s27, 2
      // Predicated region
      $region45: #{tpu_custom_call.1} parent=5 // pred_check
        %p412 = pneg %p411
      $region46: #{tpu_custom_call.1} parent=5 // pred_check_branch
        %414 = sbr.rel (%p412) target = $region48
      $region47: #{tpu_custom_call.1} parent=5 // pred_region
        // Predicated region
        $region49: #{tpu_custom_call.1} parent=47 // pred_check
          %p415 = pneg %p68
        $region50: #{tpu_custom_call.1} parent=47 // pred_check_branch
          %417 = sbr.rel (%p415) target = $region52
        $region51: #{tpu_custom_call.1} parent=47 // pred_region
          %s418 = sand.u32 %s58, 1
          %s419 = scalar_lea.sflag [#allocation7], %s418
          %s420 = sand.u32 %s58, 1
          %s421 = smul.addr %s420, 4
          %s422 = scalar_lea.vmem [#allocation6], %s421
          %s424 = ssub.s32 64, 64
          %425 = vsyncadd %s419, %s424
          %s426 = sadd.s32 %s35, %s34
          %s427 = smul.addr %s426, 64
          %s428 = scalar_lea.hbm %s0, %s427
          %s430 = sshll.u32 %s422, 4
          %s431 = int_to_ptr.vmem [resolvable:$true] %s430
          %433 = dma.hbm_to_vmem [thread:$0]  %s428, 64, %s431, %s419
        $region52: #{tpu_custom_call.1} parent=47 // pred_fallthru
          _
        // Predicated region
        $region53: #{tpu_custom_call.1} parent=47 // pred_check
          %p434 = pneg %p96
        $region54: #{tpu_custom_call.1} parent=47 // pred_check_branch
          %436 = sbr.rel (%p434) target = $region56
        $region55: #{tpu_custom_call.1} parent=47 // pred_region
          %s437 = sand.u32 %s27, 1
          %s438 = scalar_lea.sflag [#allocation10], %s437
          %s439 = sand.u32 %s86, 1
          %s440 = smul.addr %s439, 4
          %s441 = scalar_lea.vmem [#allocation9], %s440
          %s443 = ssub.s32 64, 64
          %444 = vsyncadd %s438, %s443
          %s445 = sadd.s32 %s36, %s34
          %s446 = smul.addr %s445, 64
          %s447 = scalar_lea.hbm %s1, %s446
          %s449 = sshll.u32 %s441, 4
          %s450 = int_to_ptr.vmem [resolvable:$true] %s449
          %452 = dma.hbm_to_vmem [thread:$0]  %s447, 64, %s450, %s438
        $region56: #{tpu_custom_call.1} parent=47 // pred_fallthru
          _
      $region48: #{tpu_custom_call.1} parent=5 // pred_fallthru
        _
      %p453 = scmp.le.s32.totalorder 1, %s27
      %p454 = scmp.lt.s32.totalorder %s27, 3
      %p455 = pnand %p453, %p454
      %p456 = pneg %p455
      // Predicated region
      $region57: #{tpu_custom_call.1} parent=5 // pred_check
        _
      $region58: #{tpu_custom_call.1} parent=5 // pred_check_branch
        %458 = sbr.rel (%p455) target = $region60
      $region59: #{tpu_custom_call.1} parent=5 // pred_region
        %s459 = ssub.s32 %s27, 1
        %s460 = sand.u32 %s61, 1
        %s461 = scalar_lea.sflag [#allocation7], %s460
        %s462 = sand.u32 %s61, 1
        %s463 = smul.addr %s462, 4
        %s464 = scalar_lea.vmem [#allocation6], %s463
        // Predicated region
        $region61: #{tpu_custom_call.1} parent=59 // pred_check
          %p465 = pneg %p74
        $region62: #{tpu_custom_call.1} parent=59 // pred_check_branch
          %467 = sbr.rel (%p465) target = $region64
        $region63: #{tpu_custom_call.1} parent=59 // pred_region
          %468 = dma.done %s461, 64
        $region64: #{tpu_custom_call.1} parent=59 // pred_fallthru
          _
        %s469 = sand.u32 %s32, 1
        %s470 = scalar_lea.sflag [#allocation10], %s469
        %s471 = sand.u32 %s89, 1
        %s472 = smul.addr %s471, 4
        %s473 = scalar_lea.vmem [#allocation9], %s472
        // Predicated region
        $region65: #{tpu_custom_call.1} parent=59 // pred_check
          %p474 = pneg %p102
        $region66: #{tpu_custom_call.1} parent=59 // pred_check_branch
          %476 = sbr.rel (%p474) target = $region68
        $region67: #{tpu_custom_call.1} parent=59 // pred_region
          %477 = dma.done %s470, 64
        $region68: #{tpu_custom_call.1} parent=59 // pred_fallthru
          _
        // Predicated region
        $region69: #{tpu_custom_call.1} parent=59 // pred_check
          %p478 = pneg %p123
        $region70: #{tpu_custom_call.1} parent=59 // pred_check_branch
          %480 = sbr.rel (%p478) target = $region72
        $region71: #{tpu_custom_call.1} parent=59 // pred_region
          %481 = dma.done [#allocation10], 256
        $region72: #{tpu_custom_call.1} parent=59 // pred_fallthru
          _
        // Predicated region
        $region73: #{tpu_custom_call.1} parent=59 // pred_check
          %p482 = pneg %p144
        $region74: #{tpu_custom_call.1} parent=59 // pred_check_branch
          %484 = sbr.rel (%p482) target = $region76
        $region75: #{tpu_custom_call.1} parent=59 // pred_region
          %485 = dma.done [#allocation13], 256
        $region76: #{tpu_custom_call.1} parent=59 // pred_fallthru
          _
        // Predicated region
        $region77: #{tpu_custom_call.1} parent=59 // pred_check
          %p486 = pneg %p196
        $region78: #{tpu_custom_call.1} parent=59 // pred_check_branch
          %488 = sbr.rel (%p486) target = $region80
        $region79: #{tpu_custom_call.1} parent=59 // pred_region
          %489 = dma.done [#allocation13], 128
        $region80: #{tpu_custom_call.1} parent=59 // pred_fallthru
          _
        // Predicated region
        $region81: #{tpu_custom_call.1} parent=59 // pred_check
          %p490 = pneg %p222
        $region82: #{tpu_custom_call.1} parent=59 // pred_check_branch
          %492 = sbr.rel (%p490) target = $region84
        $region83: #{tpu_custom_call.1} parent=59 // pred_region
          %493 = dma.done [#allocation16], 128
        $region84: #{tpu_custom_call.1} parent=59 // pred_fallthru
          _
        // Predicated region
        $region85: #{tpu_custom_call.1} parent=59 // pred_check
          %p494 = pneg %p248
        $region86: #{tpu_custom_call.1} parent=59 // pred_check_branch
          %496 = sbr.rel (%p494) target = $region88
        $region87: #{tpu_custom_call.1} parent=59 // pred_region
          %497 = dma.done [#allocation16], 128
        $region88: #{tpu_custom_call.1} parent=59 // pred_fallthru
          _
        %s498 = sand.u32 %s61, 1
        %s499 = scalar_lea.sflag [#allocation7], %s498
        %s500 = sand.u32 %s61, 1
        %s501 = smul.addr %s500, 4
        %s502 = scalar_lea.vmem [#allocation6], %s501
        %p503 = pneg %p74
        %p504 = pneg %p71
        %s505 = sand.u32 %s32, 1
        %s506 = scalar_lea.sflag [#allocation10], %s505
        %s507 = sand.u32 %s89, 1
        %s508 = smul.addr %s507, 4
        %s509 = scalar_lea.vmem [#allocation9], %s508
        %p510 = pneg %p102
        %p511 = pneg %p99
        %p512 = pneg %p123
        %p513 = pneg %p120
        %p514 = pneg %p144
        %p515 = pneg %p141
        %p516 = scmp.lt.s32.totalorder %s38, 0
        %s517 = scalar_select %p516, %s38, 0
        %s518 = smul.addr %s517, 8
        %s519 = scalar_lea.vmem %s4, %s518
        %p520 = pneg %p170
        %p521 = pneg %p167
        %p522 = pneg %p196
        %p523 = pneg %p193
        %p524 = pneg %p222
        %p525 = pneg %p219
        %p526 = pneg %p248
        %p527 = pneg %p245
        %p528 = pneg %p269
        %p529 = pneg %p266
        %p530 = pneg %p290
        %p531 = pneg %p287
        %p532 = pneg %p318
        %p533 = pneg %p315
        %s534 = sand.u32 %s305, 1
        %s535 = scalar_lea.sflag [#allocation8], %s534
        %s536 = sand.u32 %s305, 1
        %s537 = smul.addr %s536, 4
        %s538 = scalar_lea.vmem [#allocation18], %s537
        %p539 = scmp.lt.s32.totalorder %s38, 0
        %s540 = scalar_select %p539, %s38, 0
        %s541 = smul.addr %s540, 8
        %s542 = scalar_lea.vmem %s4, %s541
        %p544 = scmp.eq.s32.totalorder %s39, 0
        // Predicated region
        $region89: #{tpu_custom_call.1} parent=59 // pred_check
          %p545 = pneg %p544
        $region90: #{tpu_custom_call.1} parent=59 // pred_check_branch
          %547 = sbr.rel (%p545) target = $region92
        $region91: #{tpu_custom_call.1} parent=59 // pred_region
          %v548 = vld [vmem:[%s464] sm:$0xf]
          %v549 = vld [vmem:[#allocation11] sm:$0xf]
          %v550 = vld [vmem:[#allocation11 + $0x4] sm:$0xf]
          %v551 = vld [vmem:[#allocation11 + $0x8] sm:$0xf]
          %v552 = vld [vmem:[#allocation11 + $0xc] sm:$0xf]
          %v557 = vunpack.c.l.b16 %v549
          %v558 = vunpack.c.l.b16 %v550
          %v559 = vunpack.c.l.b16 %v551
          %v560 = vunpack.c.l.b16 %v552
          %v561 = vpack.c.b16 %v558, %v557
          %v562 = vpack.c.b16 %v560, %v559
          %vm565 = vcmask 261120
          %v567 = vsel %vm565, %v548, 0
          %569 = vmatprep.subr.bf16.mxu0 0
          %570 = vmatpush1.bf16.msra.mxu0 %v561
          %571 = vmatprep.subr.bf16.mxu0 0
          %572 = vmatpush1.bf16.msra.mxu0 %v562
          %573 = vmatprep.subr.bf16.mxu0 0
          %574 = vmatpush1.bf16.msra.mxu0 0
          %575 = vmatprep.subr.bf16.mxu0 0
          %576 = vmatpush1.bf16.msra.mxu0 0
          %577 = vmatprep.subr.bf16.mxu0 0
          %578 = vmatpush1.bf16.msra.mxu0 0
          %579 = vmatprep.subr.bf16.mxu0 0
          %580 = vmatpush1.bf16.msra.mxu0 0
          %581 = vmatprep.subr.bf16.mxu0 0
          %582 = vmatpush1.bf16.msra.mxu0 0
          %583 = vmatprep.subr.bf16.mxu0 0
          %584 = vmatpush1.bf16.msra.mxu0 0
          %585 = vmatprep.subr.bf16.mxu0 0
          %586 = vmatpush1.bf16.msra.mxu0 0
          %587 = vmatprep.subr.bf16.mxu0 0
          %588 = vmatpush1.bf16.msra.mxu0 0
          %589 = vmatprep.subr.bf16.mxu0 0
          %590 = vmatpush1.bf16.msra.mxu0 0
          %591 = vmatprep.subr.bf16.mxu0 0
          %592 = vmatpush1.bf16.msra.mxu0 0
          %593 = vmatprep.subr.bf16.mxu0 0
          %594 = vmatpush1.bf16.msra.mxu0 0
          %595 = vmatprep.subr.bf16.mxu0 0
          %596 = vmatpush1.bf16.msra.mxu0 0
          %597 = vmatprep.subr.bf16.mxu0 0
          %598 = vmatpush1.bf16.msra.mxu0 0
          %599 = vmatprep.subr.bf16.mxu0 0
          %600 = vmatpush1.bf16.msra.mxu0 0
          %601 = vmatprep.mubr.bf16.mxu0 0
          %602 = vmatmul.mubr.bf16.gmra.mrb[0].mxu0 %v567
          %v603 = vpop.f32.mrb[0].mxu0
          %v604 = vadd.f32 0.0, %v603
          %v605 = vpop.f32.mrb[0].mxu0
          %v606 = vpop.f32.mrb[0].mxu0
          %v607 = vpop.f32.mrb[0].mxu0
          %608 = vdwg.mxu0
          %v609 = vld [vmem:[%s542] sm:$0xff]
          %v610 = vld [vmem:[#allocation14] sm:$0xff]
          %v611 = vmul.f32 %v604, %v609
          %613 = vrot.lane.b32.xlu0 %v610, 16
          %v614 = vpop.permute.xlu0 %613
          %v616 = vmul.f32 %v604, %v614
          %618 = vrot.lane.b32.xlu0 %v616, 112
          %v619 = vpop.permute.xlu0 %618
          %v621 = vsub.f32 %v611, %v619
          %v622 = vpack.c.bf16 %v621, %v621
          %vm623 = vcmask 125952
          %624 = vst.msk [vmem:[#allocation2] sm:$0xf] %vm623, %v622
          %v625 = vmul.f32 %v604, %v610
          %627 = vrot.lane.b32.xlu0 %v609, 16
          %v628 = vpop.permute.xlu0 %627
          %v630 = vmul.f32 %v604, %v628
          %632 = vrot.lane.b32.xlu0 %v630, 112
          %v633 = vpop.permute.xlu0 %632
          %v635 = vadd.f32 %v625, %v633
          %v636 = vpack.c.bf16 %v635, %v635
          %v638 = vunpack.c.l.b16 %v636
          %v639 = vpack.c.b16 %v638, %v638
          %640 = vrot.lane.b32.xlu0 %v639, 16
          %v641 = vpop.permute.xlu0 %640
          %vm643 = vcmask 257152
          %644 = vst.msk [vmem:[#allocation2] sm:$0xf] %vm643, %v641
          %vm645 = vcmask 7168
          %646 = vst.msk [vmem:[#allocation3] sm:$0xff] %vm645, -inf
          %647 = vst.msk [vmem:[#allocation3 + $0x8] sm:$0xff] %vm645, -inf
          %648 = vst.msk [vmem:[#allocation3 + $0x10] sm:$0xff] %vm645, -inf
          %649 = vst.msk [vmem:[#allocation3 + $0x18] sm:$0xff] %vm645, -inf
          %650 = vst.msk [vmem:[#allocation4] sm:$0xff] %vm645, 0.0
          %651 = vst.msk [vmem:[#allocation4 + $0x8] sm:$0xff] %vm645, 0.0
          %652 = vst.msk [vmem:[#allocation4 + $0x10] sm:$0xff] %vm645, 0.0
          %653 = vst.msk [vmem:[#allocation4 + $0x18] sm:$0xff] %vm645, 0.0
          %654 = vst.msk [vmem:[#allocation5] sm:$0xff] %vm565, 0.0
        $region92: #{tpu_custom_call.1} parent=59 // pred_fallthru
          _
        %p655 = scmp.le.s32.totalorder %s39, %s38
        // Predicated region
        $region93: #{tpu_custom_call.1} parent=59 // pred_check
          %p656 = pneg %p655
        $region94: #{tpu_custom_call.1} parent=59 // pred_check_branch
          %658 = sbr.rel (%p656) target = $region96
        $region95: #{tpu_custom_call.1} parent=59 // pred_region
          %v659 = vld [vmem:[%s473] sm:$0xf]
          %v660 = vld [vmem:[#allocation12] sm:$0xf]
          %v661 = vld [vmem:[#allocation12 + $0x4] sm:$0xf]
          %v662 = vld [vmem:[#allocation12 + $0x8] sm:$0xf]
          %v663 = vld [vmem:[#allocation12 + $0xc] sm:$0xf]
          %v668 = vunpack.c.l.b16 %v660
          %v669 = vunpack.c.l.b16 %v661
          %v670 = vunpack.c.l.b16 %v662
          %v671 = vunpack.c.l.b16 %v663
          %v672 = vpack.c.b16 %v669, %v668
          %v673 = vpack.c.b16 %v671, %v670
          %vm676 = vcmask 261120
          %v678 = vsel %vm676, %v659, 0
          %680 = vmatprep.subr.bf16.mxu0 0
          %681 = vmatpush1.bf16.msra.mxu0 %v672
          %682 = vmatprep.subr.bf16.mxu0 0
          %683 = vmatpush1.bf16.msra.mxu0 %v673
          %684 = vmatprep.subr.bf16.mxu0 0
          %685 = vmatpush1.bf16.msra.mxu0 0
          %686 = vmatprep.subr.bf16.mxu0 0
          %687 = vmatpush1.bf16.msra.mxu0 0
          %688 = vmatprep.subr.bf16.mxu0 0
          %689 = vmatpush1.bf16.msra.mxu0 0
          %690 = vmatprep.subr.bf16.mxu0 0
          %691 = vmatpush1.bf16.msra.mxu0 0
          %692 = vmatprep.subr.bf16.mxu0 0
          %693 = vmatpush1.bf16.msra.mxu0 0
          %694 = vmatprep.subr.bf16.mxu0 0
          %695 = vmatpush1.bf16.msra.mxu0 0
          %696 = vmatprep.subr.bf16.mxu0 0
          %697 = vmatpush1.bf16.msra.mxu0 0
          %698 = vmatprep.subr.bf16.mxu0 0
          %699 = vmatpush1.bf16.msra.mxu0 0
          %700 = vmatprep.subr.bf16.mxu0 0
          %701 = vmatpush1.bf16.msra.mxu0 0
          %702 = vmatprep.subr.bf16.mxu0 0
          %703 = vmatpush1.bf16.msra.mxu0 0
          %704 = vmatprep.subr.bf16.mxu0 0
          %705 = vmatpush1.bf16.msra.mxu0 0
          %706 = vmatprep.subr.bf16.mxu0 0
          %707 = vmatpush1.bf16.msra.mxu0 0
          %708 = vmatprep.subr.bf16.mxu0 0
          %709 = vmatpush1.bf16.msra.mxu0 0
          %710 = vmatprep.subr.bf16.mxu0 0
          %711 = vmatpush1.bf16.msra.mxu0 0
          %712 = vmatprep.mubr.bf16.mxu0 0
          %713 = vmatmul.mubr.bf16.gmra.mrb[0].mxu0 %v678
          %v714 = vpop.f32.mrb[0].mxu0
          %v715 = vadd.f32 0.0, %v714
          %v716 = vpop.f32.mrb[0].mxu0
          %v717 = vpop.f32.mrb[0].mxu0
          %v718 = vpop.f32.mrb[0].mxu0
          %719 = vdwg.mxu0
          %v720 = vld [vmem:[#allocation15] sm:$0xff]
          %v721 = vld [vmem:[#allocation17] sm:$0xff]
          %v722 = vpack.c.bf16 %v715, %v715
          %v723 = vmul.f32 %v715, %v720
          %725 = vrot.lane.b32.xlu0 %v721, 16
          %v726 = vpop.permute.xlu0 %725
          %v728 = vmul.f32 %v715, %v726
          %730 = vrot.lane.b32.xlu0 %v728, 112
          %v731 = vpop.permute.xlu0 %730
          %v733 = vsub.f32 %v723, %v731
          %v734 = vpack.c.bf16 %v733, %v733
          %v735 = vmul.f32 %v715, %v721
          %737 = vrot.lane.b32.xlu0 %v720, 16
          %v738 = vpop.permute.xlu0 %737
          %v740 = vmul.f32 %v715, %v738
          %742 = vrot.lane.b32.xlu0 %v740, 112
          %v743 = vpop.permute.xlu0 %742
          %v745 = vadd.f32 %v735, %v743
          %v746 = vpack.c.bf16 %v745, %v745
          %s747 = smul.u32 %s38, 8
          %v748 = vlaneseq
          %v749 = vshrl.u32 %v748, 7
          %v750 = vstv %s747
          %v751 = vadd.s32 %v750, %v749
          %s752 = smul.u32 %s39, 8
          %v753 = vlaneseq
          %v754 = vand.u32 %v753, 127
          %v755 = vstv %s752
          %v756 = vadd.s32 %v755, %v754
          %vm757 = vcmp.le.s32.totalorder %v756, %v751
          %v758 = vld [vmem:[#allocation2] sm:$0xf]
          %v760 = vunpack.c.l.b16 %v758
          %v761 = vpack.c.b16 %v760, %v760
          %762 = vrot.lane.b32.xlu0 %v761, 112
          %v763 = vpop.permute.xlu0 %762
          %vm764 = vcmask 31744
          %v766 = vsel %vm764, %v763, 0
          %v769 = vsel %vm764, %v746, 0
          %771 = vmatprep.subr.bf16.mxu0 0
          %772 = vmatpush1.bf16.xpose.msra.mxu0 %v769
          %773 = vmatprep.subr.bf16.mxu0 0
          %774 = vmatpush1.bf16.xpose.msra.mxu0 0
          %775 = vmatprep.subr.bf16.mxu0 0
          %776 = vmatpush1.bf16.xpose.msra.mxu0 0
          %777 = vmatprep.subr.bf16.mxu0 0
          %778 = vmatpush1.bf16.xpose.msra.mxu0 0
          %779 = vmatprep.subr.bf16.mxu0 0
          %780 = vmatpush1.bf16.xpose.msra.mxu0 0
          %781 = vmatprep.subr.bf16.mxu0 0
          %782 = vmatpush1.bf16.xpose.msra.mxu0 0
          %783 = vmatprep.subr.bf16.mxu0 0
          %784 = vmatpush1.bf16.xpose.msra.mxu0 0
          %785 = vmatprep.subr.bf16.mxu0 0
          %786 = vmatpush1.bf16.xpose.msra.mxu0 0
          %787 = vmatprep.subr.bf16.mxu0 0
          %788 = vmatpush1.bf16.xpose.msra.mxu0 0
          %789 = vmatprep.subr.bf16.mxu0 0
          %790 = vmatpush1.bf16.xpose.msra.mxu0 0
          %791 = vmatprep.subr.bf16.mxu0 0
          %792 = vmatpush1.bf16.xpose.msra.mxu0 0
          %793 = vmatprep.subr.bf16.mxu0 0
          %794 = vmatpush1.bf16.xpose.msra.mxu0 0
          %795 = vmatprep.subr.bf16.mxu0 0
          %796 = vmatpush1.bf16.xpose.msra.mxu0 0
          %797 = vmatprep.subr.bf16.mxu0 0
          %798 = vmatpush1.bf16.xpose.msra.mxu0 0
          %799 = vmatprep.subr.bf16.mxu0 0
          %800 = vmatpush1.bf16.xpose.msra.mxu0 0
          %801 = vmatprep.subr.bf16.mxu0 0
          %802 = vmatpush1.bf16.xpose.msra.mxu0 0
          %803 = vmatprep.mubr.bf16.mxu0 0
          %804 = vmatmul.mubr.bf16.gmra.mrb[0].mxu0 %v766
          %v805 = vpop.f32.mrb[0].mxu0
          %v806 = vadd.f32 0.0, %v805
          %v807 = vpop.f32.mrb[0].mxu0
          %v808 = vpop.f32.mrb[0].mxu0
          %v809 = vpop.f32.mrb[0].mxu0
          %810 = vdwg.mxu0
          %v812 = vsel %vm764, %v758, 0
          %v815 = vsel %vm764, %v734, 0
          %817 = vmatprep.subr.bf16.mxu0 0
          %818 = vmatpush1.bf16.xpose.msra.mxu0 %v815
          %819 = vmatprep.subr.bf16.mxu0 0
          %820 = vmatpush1.bf16.xpose.msra.mxu0 0
          %821 = vmatprep.subr.bf16.mxu0 0
          %822 = vmatpush1.bf16.xpose.msra.mxu0 0
          %823 = vmatprep.subr.bf16.mxu0 0
          %824 = vmatpush1.bf16.xpose.msra.mxu0 0
          %825 = vmatprep.subr.bf16.mxu0 0
          %826 = vmatpush1.bf16.xpose.msra.mxu0 0
          %827 = vmatprep.subr.bf16.mxu0 0
          %828 = vmatpush1.bf16.xpose.msra.mxu0 0
          %829 = vmatprep.subr.bf16.mxu0 0
          %830 = vmatpush1.bf16.xpose.msra.mxu0 0
          %831 = vmatprep.subr.bf16.mxu0 0
          %832 = vmatpush1.bf16.xpose.msra.mxu0 0
          %833 = vmatprep.subr.bf16.mxu0 0
          %834 = vmatpush1.bf16.xpose.msra.mxu0 0
          %835 = vmatprep.subr.bf16.mxu0 0
          %836 = vmatpush1.bf16.xpose.msra.mxu0 0
          %837 = vmatprep.subr.bf16.mxu0 0
          %838 = vmatpush1.bf16.xpose.msra.mxu0 0
          %839 = vmatprep.subr.bf16.mxu0 0
          %840 = vmatpush1.bf16.xpose.msra.mxu0 0
          %841 = vmatprep.subr.bf16.mxu0 0
          %842 = vmatpush1.bf16.xpose.msra.mxu0 0
          %843 = vmatprep.subr.bf16.mxu0 0
          %844 = vmatpush1.bf16.xpose.msra.mxu0 0
          %845 = vmatprep.subr.bf16.mxu0 0
          %846 = vmatpush1.bf16.xpose.msra.mxu0 0
          %847 = vmatprep.subr.bf16.mxu0 0
          %848 = vmatpush1.bf16.xpose.msra.mxu0 0
          %849 = vmatprep.mubr.bf16.mxu0 0
          %850 = vmatmul.mubr.bf16.gmra.mrb[0].mxu0 %v812
          %v851 = vpop.f32.mrb[0].mxu0
          %v852 = vadd.f32 %v806, %v851
          %v853 = vpop.f32.mrb[0].mxu0
          %v854 = vpop.f32.mrb[0].mxu0
          %v855 = vpop.f32.mrb[0].mxu0
          %856 = vdwg.mxu0
          %v857 = vsel %vm757, %v852, -inf
          %v858 = vld [vmem:[#allocation3] sm:$0xff]
          %v859 = vld [vmem:[#allocation4] sm:$0xff]
          %vm860 = vcmask 64512
          %v861 = vsel %vm860, %v857, -inf
          %862 = vmax.xlane.f32.xlu0 %v861
          %v863 = vpop.xlane.xlu0 %862
          %v864 = vmax.f32 %v858, %v863
          %v865 = vsub.f32 %v858, %v864
          %v866 = vmul.f32 %v865, 1.442695
          %v867 = vpow.pop %v866
          %869 = vset.pattern.permute.xlu0 0
          %870 = vperm.xlu0 %869, %v864
          %v871 = vpop.permute.xlu0 %870
          %v873 = vsub.f32 %v857, %v871
          %v874 = vmul.f32 %v873, 1.442695
          %v875 = vpow.pop %v874
          %v876 = vmul.f32 %v867, %v859
          %v877 = vsel %vm860, %v875, 0.0
          %878 = vadd.xlane.f32.xlu0 %v877
          %v879 = vpop.xlane.xlu0 %878
          %v880 = vadd.f32 %v876, %v879
          %vm881 = vcmask 7168
          %882 = vst.msk [vmem:[#allocation4] sm:$0xff] %vm881, %v880
          %883 = vst.msk [vmem:[#allocation3] sm:$0xff] %vm881, %v864
          %v884 = vpack.c.bf16 %v875, %v875
          %886 = vrot.lane.b32.xlu0 %v722, 96
          %v887 = vpop.permute.xlu0 %886
          %v889 = vsel %vm860, %v884, 0
          %vm891 = vcmask 1043456
          %v893 = vsel %vm891, %v887, 0
          %895 = vmatprep.subr.bf16.mxu0 0
          %896 = vmatpush1.bf16.msra.mxu0 %v893
          %897 = vmatprep.subr.bf16.mxu0 0
          %898 = vmatpush1.bf16.msra.mxu0 0
          %899 = vmatprep.subr.bf16.mxu0 0
          %900 = vmatpush1.bf16.msra.mxu0 0
          %901 = vmatprep.subr.bf16.mxu0 0
          %902 = vmatpush1.bf16.msra.mxu0 0
          %903 = vmatprep.subr.bf16.mxu0 0
          %904 = vmatpush1.bf16.msra.mxu0 0
          %905 = vmatprep.subr.bf16.mxu0 0
          %906 = vmatpush1.bf16.msra.mxu0 0
          %907 = vmatprep.subr.bf16.mxu0 0
          %908 = vmatpush1.bf16.msra.mxu0 0
          %909 = vmatprep.subr.bf16.mxu0 0
          %910 = vmatpush1.bf16.msra.mxu0 0
          %911 = vmatprep.subr.bf16.mxu0 0
          %912 = vmatpush1.bf16.msra.mxu0 0
          %913 = vmatprep.subr.bf16.mxu0 0
          %914 = vmatpush1.bf16.msra.mxu0 0
          %915 = vmatprep.subr.bf16.mxu0 0
          %916 = vmatpush1.bf16.msra.mxu0 0
          %917 = vmatprep.subr.bf16.mxu0 0
          %918 = vmatpush1.bf16.msra.mxu0 0
          %919 = vmatprep.subr.bf16.mxu0 0
          %920 = vmatpush1.bf16.msra.mxu0 0
          %921 = vmatprep.subr.bf16.mxu0 0
          %922 = vmatpush1.bf16.msra.mxu0 0
          %923 = vmatprep.subr.bf16.mxu0 0
          %924 = vmatpush1.bf16.msra.mxu0 0
          %925 = vmatprep.subr.bf16.mxu0 0
          %926 = vmatpush1.bf16.msra.mxu0 0
          %927 = vmatprep.mubr.bf16.mxu0 0
          %928 = vmatmul.mubr.bf16.gmra.mrb[0].mxu0 %v889
          %v929 = vpop.f32.mrb[0].mxu0
          %v930 = vadd.f32 0.0, %v929
          %v931 = vpop.f32.mrb[0].mxu0
          %v932 = vpop.f32.mrb[0].mxu0
          %v933 = vpop.f32.mrb[0].mxu0
          %934 = vdwg.mxu0
          %v935 = vld [vmem:[#allocation5] sm:$0xff]
          %937 = vset.pattern.permute.xlu0 0
          %938 = vperm.xlu0 %937, %v867
          %v939 = vpop.permute.xlu0 %938
          %v941 = vmul.f32 %v939, %v935
          %v942 = vadd.f32 %v941, %v930
          %943 = vst.msk [vmem:[#allocation5] sm:$0xff] %vm860, %v942
          %v944 = vld [vmem:[#allocation2] sm:$0xf]
          %v946 = vunpack.c.l.b16 %v944
          %v947 = vpack.c.b16 %v946, %v946
          %948 = vrot.lane.b32.xlu0 %v947, 108
          %v949 = vpop.permute.xlu0 %948
          %951 = vrot.lane.b32.xlu0 %v746, 124
          %v952 = vpop.permute.xlu0 %951
          %v954 = vsel %vm764, %v949, 0
          %v957 = vsel %vm764, %v952, 0
          %959 = vmatprep.subr.bf16.mxu0 0
          %960 = vmatpush1.bf16.xpose.msra.mxu0 %v957
          %961 = vmatprep.subr.bf16.mxu0 0
          %962 = vmatpush1.bf16.xpose.msra.mxu0 0
          %963 = vmatprep.subr.bf16.mxu0 0
          %964 = vmatpush1.bf16.xpose.msra.mxu0 0
          %965 = vmatprep.subr.bf16.mxu0 0
          %966 = vmatpush1.bf16.xpose.msra.mxu0 0
          %967 = vmatprep.subr.bf16.mxu0 0
          %968 = vmatpush1.bf16.xpose.msra.mxu0 0
          %969 = vmatprep.subr.bf16.mxu0 0
          %970 = vmatpush1.bf16.xpose.msra.mxu0 0
          %971 = vmatprep.subr.bf16.mxu0 0
          %972 = vmatpush1.bf16.xpose.msra.mxu0 0
          %973 = vmatprep.subr.bf16.mxu0 0
          %974 = vmatpush1.bf16.xpose.msra.mxu0 0
          %975 = vmatprep.subr.bf16.mxu0 0
          %976 = vmatpush1.bf16.xpose.msra.mxu0 0
          %977 = vmatprep.subr.bf16.mxu0 0
          %978 = vmatpush1.bf16.xpose.msra.mxu0 0
          %979 = vmatprep.subr.bf16.mxu0 0
          %980 = vmatpush1.bf16.xpose.msra.mxu0 0
          %981 = vmatprep.subr.bf16.mxu0 0
          %982 = vmatpush1.bf16.xpose.msra.mxu0 0
          %983 = vmatprep.subr.bf16.mxu0 0
          %984 = vmatpush1.bf16.xpose.msra.mxu0 0
          %985 = vmatprep.subr.bf16.mxu0 0
          %986 = vmatpush1.bf16.xpose.msra.mxu0 0
          %987 = vmatprep.subr.bf16.mxu0 0
          %988 = vmatpush1.bf16.xpose.msra.mxu0 0
          %989 = vmatprep.subr.bf16.mxu0 0
          %990 = vmatpush1.bf16.xpose.msra.mxu0 0
          %991 = vmatprep.mubr.bf16.mxu0 0
          %992 = vmatmul.mubr.bf16.gmra.mrb[0].mxu0 %v954
          %v993 = vpop.f32.mrb[0].mxu0
          %v994 = vadd.f32 0.0, %v993
          %v995 = vpop.f32.mrb[0].mxu0
          %v996 = vpop.f32.mrb[0].mxu0
          %v997 = vpop.f32.mrb[0].mxu0
          %998 = vdwg.mxu0
          %999 = vrot.lane.b32.xlu0 %v947, 124
          %v1000 = vpop.permute.xlu0 %999
          %1002 = vrot.lane.b32.xlu0 %v734, 124
          %v1003 = vpop.permute.xlu0 %1002
          %v1005 = vsel %vm764, %v1000, 0
          %v1008 = vsel %vm764, %v1003, 0
          %1010 = vmatprep.subr.bf16.mxu0 0
          %1011 = vmatpush1.bf16.xpose.msra.mxu0 %v1008
          %1012 = vmatprep.subr.bf16.mxu0 0
          %1013 = vmatpush1.bf16.xpose.msra.mxu0 0
          %1014 = vmatprep.subr.bf16.mxu0 0
          %1015 = vmatpush1.bf16.xpose.msra.mxu0 0
          %1016 = vmatprep.subr.bf16.mxu0 0
          %1017 = vmatpush1.bf16.xpose.msra.mxu0 0
          %1018 = vmatprep.subr.bf16.mxu0 0
          %1019 = vmatpush1.bf16.xpose.msra.mxu0 0
          %1020 = vmatprep.subr.bf16.mxu0 0
          %1021 = vmatpush1.bf16.xpose.msra.mxu0 0
          %1022 = vmatprep.subr.bf16.mxu0 0
          %1023 = vmatpush1.bf16.xpose.msra.mxu0 0
          %1024 = vmatprep.subr.bf16.mxu0 0
          %1025 = vmatpush1.bf16.xpose.msra.mxu0 0
          %1026 = vmatprep.subr.bf16.mxu0 0
          %1027 = vmatpush1.bf16.xpose.msra.mxu0 0
          %1028 = vmatprep.subr.bf16.mxu0 0
          %1029 = vmatpush1.bf16.xpose.msra.mxu0 0
          %1030 = vmatprep.subr.bf16.mxu0 0
          %1031 = vmatpush1.bf16.xpose.msra.mxu0 0
          %1032 = vmatprep.subr.bf16.mxu0 0
          %1033 = vmatpush1.bf16.xpose.msra.mxu0 0
          %1034 = vmatprep.subr.bf16.mxu0 0
          %1035 = vmatpush1.bf16.xpose.msra.mxu0 0
          %1036 = vmatprep.subr.bf16.mxu0 0
          %1037 = vmatpush1.bf16.xpose.msra.mxu0 0
          %1038 = vmatprep.subr.bf16.mxu0 0
          %1039 = vmatpush1.bf16.xpose.msra.mxu0 0
          %1040 = vmatprep.subr.bf16.mxu0 0
          %1041 = vmatpush1.bf16.xpose.msra.mxu0 0
          %1042 = vmatprep.mubr.bf16.mxu0 0
          %1043 = vmatmul.mubr.bf16.gmra.mrb[0].mxu0 %v1005
          %v1044 = vpop.f32.mrb[0].mxu0
          %v1045 = vadd.f32 %v994, %v1044
          %v1046 = vpop.f32.mrb[0].mxu0
          %v1047 = vpop.f32.mrb[0].mxu0
          %v1048 = vpop.f32.mrb[0].mxu0
          %1049 = vdwg.mxu0
          %v1050 = vsel %vm757, %v1045, -inf
          %s1051 = scalar_lea.vmem [#allocation3], 8
          %v1052 = vld [vmem:[%s1051] sm:$0xff]
          %s1053 = scalar_lea.vmem [#allocation4], 8
          %v1054 = vld [vmem:[%s1053] sm:$0xff]
          %v1055 = vsel %vm860, %v1050, -inf
          %1056 = vmax.xlane.f32.xlu0 %v1055
          %v1057 = vpop.xlane.xlu0 %1056
          %v1058 = vmax.f32 %v1052, %v1057
          %v1059 = vsub.f32 %v1052, %v1058
          %v1060 = vmul.f32 %v1059, 1.442695
          %v1061 = vpow.pop %v1060
          %1063 = vset.pattern.permute.xlu0 0
          %1064 = vperm.xlu0 %1063, %v1058
          %v1065 = vpop.permute.xlu0 %1064
          %v1067 = vsub.f32 %v1050, %v1065
          %v1068 = vmul.f32 %v1067, 1.442695
          %v1069 = vpow.pop %v1068
          %v1070 = vmul.f32 %v1061, %v1054
          %v1071 = vsel %vm860, %v1069, 0.0
          %1072 = vadd.xlane.f32.xlu0 %v1071
          %v1073 = vpop.xlane.xlu0 %1072
          %v1074 = vadd.f32 %v1070, %v1073
          %1075 = vst.msk [vmem:[%s1053] sm:$0xff] %vm881, %v1074
          %1076 = vst.msk [vmem:[%s1051] sm:$0xff] %vm881, %v1058
          %v1077 = vpack.c.bf16 %v1069, %v1069
          %1078 = vrot.lane.b32.xlu0 %v722, 88
          %v1079 = vpop.permute.xlu0 %1078
          %v1081 = vsel %vm860, %v1077, 0
          %v1084 = vsel %vm891, %v1079, 0
          %1086 = vmatprep.subr.bf16.mxu0 0
          %1087 = vmatpush1.bf16.msra.mxu0 %v1084
          %1088 = vmatprep.subr.bf16.mxu0 0
          %1089 = vmatpush1.bf16.msra.mxu0 0
          %1090 = vmatprep.subr.bf16.mxu0 0
          %1091 = vmatpush1.bf16.msra.mxu0 0
          %1092 = vmatprep.subr.bf16.mxu0 0
          %1093 = vmatpush1.bf16.msra.mxu0 0
          %1094 = vmatprep.subr.bf16.mxu0 0
          %1095 = vmatpush1.bf16.msra.mxu0 0
          %1096 = vmatprep.subr.bf16.mxu0 0
          %1097 = vmatpush1.bf16.msra.mxu0 0
          %1098 = vmatprep.subr.bf16.mxu0 0
          %1099 = vmatpush1.bf16.msra.mxu0 0
          %1100 = vmatprep.subr.bf16.mxu0 0
          %1101 = vmatpush1.bf16.msra.mxu0 0
          %1102 = vmatprep.subr.bf16.mxu0 0
          %1103 = vmatpush1.bf16.msra.mxu0 0
          %1104 = vmatprep.subr.bf16.mxu0 0
          %1105 = vmatpush1.bf16.msra.mxu0 0
          %1106 = vmatprep.subr.bf16.mxu0 0
          %1107 = vmatpush1.bf16.msra.mxu0 0
          %1108 = vmatprep.subr.bf16.mxu0 0
          %1109 = vmatpush1.bf16.msra.mxu0 0
          %1110 = vmatprep.subr.bf16.mxu0 0
          %1111 = vmatpush1.bf16.msra.mxu0 0
          %1112 = vmatprep.subr.bf16.mxu0 0
          %1113 = vmatpush1.bf16.msra.mxu0 0
          %1114 = vmatprep.subr.bf16.mxu0 0
          %1115 = vmatpush1.bf16.msra.mxu0 0
          %1116 = vmatprep.subr.bf16.mxu0 0
          %1117 = vmatpush1.bf16.msra.mxu0 0
          %1118 = vmatprep.mubr.bf16.mxu0 0
          %1119 = vmatmul.mubr.bf16.gmra.mrb[0].mxu0 %v1081
          %v1120 = vpop.f32.mrb[0].mxu0
          %v1121 = vadd.f32 0.0, %v1120
          %v1122 = vpop.f32.mrb[0].mxu0
          %v1123 = vpop.f32.mrb[0].mxu0
          %v1124 = vpop.f32.mrb[0].mxu0
          %1125 = vdwg.mxu0
          %v1126 = vld [vmem:[#allocation5] sm:$0xff]
          %1128 = vset.pattern.permute.xlu0 0
          %1129 = vperm.xlu0 %1128, %v1061
          %v1130 = vpop.permute.xlu0 %1129
          %v1132 = vmul.f32 %v1130, %v1126
          %1134 = vrot.lane.b32.xlu0 %v1121, 8
          %v1135 = vpop.permute.xlu0 %1134
          %v1137 = vadd.f32 %v1132, %v1135
          %vm1138 = vcmask 130112
          %1139 = vst.msk [vmem:[#allocation5] sm:$0xff] %vm1138, %v1137
          %v1140 = vld [vmem:[#allocation2] sm:$0xf]
          %v1142 = vunpack.c.l.b16 %v1140
          %v1143 = vpack.c.b16 %v1142, %v1142
          %1144 = vrot.lane.b32.xlu0 %v1143, 104
          %v1145 = vpop.permute.xlu0 %1144
          %1146 = vrot.lane.b32.xlu0 %v746, 120
          %v1147 = vpop.permute.xlu0 %1146
          %v1149 = vsel %vm764, %v1145, 0
          %v1152 = vsel %vm764, %v1147, 0
          %1154 = vmatprep.subr.bf16.mxu0 0
          %1155 = vmatpush1.bf16.xpose.msra.mxu0 %v1152
          %1156 = vmatprep.subr.bf16.mxu0 0
          %1157 = vmatpush1.bf16.xpose.msra.mxu0 0
          %1158 = vmatprep.subr.bf16.mxu0 0
          %1159 = vmatpush1.bf16.xpose.msra.mxu0 0
          %1160 = vmatprep.subr.bf16.mxu0 0
          %1161 = vmatpush1.bf16.xpose.msra.mxu0 0
          %1162 = vmatprep.subr.bf16.mxu0 0
          %1163 = vmatpush1.bf16.xpose.msra.mxu0 0
          %1164 = vmatprep.subr.bf16.mxu0 0
          %1165 = vmatpush1.bf16.xpose.msra.mxu0 0
          %1166 = vmatprep.subr.bf16.mxu0 0
          %1167 = vmatpush1.bf16.xpose.msra.mxu0 0
          %1168 = vmatprep.subr.bf16.mxu0 0
          %1169 = vmatpush1.bf16.xpose.msra.mxu0 0
          %1170 = vmatprep.subr.bf16.mxu0 0
          %1171 = vmatpush1.bf16.xpose.msra.mxu0 0
          %1172 = vmatprep.subr.bf16.mxu0 0
          %1173 = vmatpush1.bf16.xpose.msra.mxu0 0
          %1174 = vmatprep.subr.bf16.mxu0 0
          %1175 = vmatpush1.bf16.xpose.msra.mxu0 0
          %1176 = vmatprep.subr.bf16.mxu0 0
          %1177 = vmatpush1.bf16.xpose.msra.mxu0 0
          %1178 = vmatprep.subr.bf16.mxu0 0
          %1179 = vmatpush1.bf16.xpose.msra.mxu0 0
          %1180 = vmatprep.subr.bf16.mxu0 0
          %1181 = vmatpush1.bf16.xpose.msra.mxu0 0
          %1182 = vmatprep.subr.bf16.mxu0 0
          %1183 = vmatpush1.bf16.xpose.msra.mxu0 0
          %1184 = vmatprep.subr.bf16.mxu0 0
          %1185 = vmatpush1.bf16.xpose.msra.mxu0 0
          %1186 = vmatprep.mubr.bf16.mxu0 0
          %1187 = vmatmul.mubr.bf16.gmra.mrb[0].mxu0 %v1149
          %v1188 = vpop.f32.mrb[0].mxu0
          %v1189 = vadd.f32 0.0, %v1188
          %v1190 = vpop.f32.mrb[0].mxu0
          %v1191 = vpop.f32.mrb[0].mxu0
          %v1192 = vpop.f32.mrb[0].mxu0
          %1193 = vdwg.mxu0
          %1194 = vrot.lane.b32.xlu0 %v1143, 120
          %v1195 = vpop.permute.xlu0 %1194
          %1196 = vrot.lane.b32.xlu0 %v734, 120
          %v1197 = vpop.permute.xlu0 %1196
          %v1199 = vsel %vm764, %v1195, 0
          %v1202 = vsel %vm764, %v1197, 0
          %1204 = vmatprep.subr.bf16.mxu0 0
          %1205 = vmatpush1.bf16.xpose.msra.mxu0 %v1202
          %1206 = vmatprep.subr.bf16.mxu0 0
          %1207 = vmatpush1.bf16.xpose.msra.mxu0 0
          %1208 = vmatprep.subr.bf16.mxu0 0
          %1209 = vmatpush1.bf16.xpose.msra.mxu0 0
          %1210 = vmatprep.subr.bf16.mxu0 0
          %1211 = vmatpush1.bf16.xpose.msra.mxu0 0
          %1212 = vmatprep.subr.bf16.mxu0 0
          %1213 = vmatpush1.bf16.xpose.msra.mxu0 0
          %1214 = vmatprep.subr.bf16.mxu0 0
          %1215 = vmatpush1.bf16.xpose.msra.mxu0 0
          %1216 = vmatprep.subr.bf16.mxu0 0
          %1217 = vmatpush1.bf16.xpose.msra.mxu0 0
          %1218 = vmatprep.subr.bf16.mxu0 0
          %1219 = vmatpush1.bf16.xpose.msra.mxu0 0
          %1220 = vmatprep.subr.bf16.mxu0 0
          %1221 = vmatpush1.bf16.xpose.msra.mxu0 0
          %1222 = vmatprep.subr.bf16.mxu0 0
          %1223 = vmatpush1.bf16.xpose.msra.mxu0 0
          %1224 = vmatprep.subr.bf16.mxu0 0
          %1225 = vmatpush1.bf16.xpose.msra.mxu0 0
          %1226 = vmatprep.subr.bf16.mxu0 0
          %1227 = vmatpush1.bf16.xpose.msra.mxu0 0
          %1228 = vmatprep.subr.bf16.mxu0 0
          %1229 = vmatpush1.bf16.xpose.msra.mxu0 0
          %1230 = vmatprep.subr.bf16.mxu0 0
          %1231 = vmatpush1.bf16.xpose.msra.mxu0 0
          %1232 = vmatprep.subr.bf16.mxu0 0
          %1233 = vmatpush1.bf16.xpose.msra.mxu0 0
          %1234 = vmatprep.subr.bf16.mxu0 0
          %1235 = vmatpush1.bf16.xpose.msra.mxu0 0
          %1236 = vmatprep.mubr.bf16.mxu0 0
          %1237 = vmatmul.mubr.bf16.gmra.mrb[0].mxu0 %v1199
          %v1238 = vpop.f32.mrb[0].mxu0
          %v1239 = vadd.f32 %v1189, %v1238
          %v1240 = vpop.f32.mrb[0].mxu0
          %v1241 = vpop.f32.mrb[0].mxu0
          %v1242 = vpop.f32.mrb[0].mxu0
          %1243 = vdwg.mxu0
          %v1244 = vsel %vm757, %v1239, -inf
          %s1245 = scalar_lea.vmem [#allocation3], 16
          %v1246 = vld [vmem:[%s1245] sm:$0xff]
          %s1247 = scalar_lea.vmem [#allocation4], 16
          %v1248 = vld [vmem:[%s1247] sm:$0xff]
          %v1249 = vsel %vm860, %v1244, -inf
          %1250 = vmax.xlane.f32.xlu0 %v1249
          %v1251 = vpop.xlane.xlu0 %1250
          %v1252 = vmax.f32 %v1246, %v1251
          %v1253 = vsub.f32 %v1246, %v1252
          %v1254 = vmul.f32 %v1253, 1.442695
          %v1255 = vpow.pop %v1254
          %1257 = vset.pattern.permute.xlu0 0
          %1258 = vperm.xlu0 %1257, %v1252
          %v1259 = vpop.permute.xlu0 %1258
          %v1261 = vsub.f32 %v1244, %v1259
          %v1262 = vmul.f32 %v1261, 1.442695
          %v1263 = vpow.pop %v1262
          %v1264 = vmul.f32 %v1255, %v1248
          %v1265 = vsel %vm860, %v1263, 0.0
          %1266 = vadd.xlane.f32.xlu0 %v1265
          %v1267 = vpop.xlane.xlu0 %1266
          %v1268 = vadd.f32 %v1264, %v1267
          %1269 = vst.msk [vmem:[%s1247] sm:$0xff] %vm881, %v1268
          %1270 = vst.msk [vmem:[%s1245] sm:$0xff] %vm881, %v1252
          %v1271 = vpack.c.bf16 %v1263, %v1263
          %1272 = vrot.lane.b32.xlu0 %v722, 80
          %v1273 = vpop.permute.xlu0 %1272
          %v1275 = vsel %vm860, %v1271, 0
          %v1278 = vsel %vm891, %v1273, 0
          %1280 = vmatprep.subr.bf16.mxu0 0
          %1281 = vmatpush1.bf16.msra.mxu0 %v1278
          %1282 = vmatprep.subr.bf16.mxu0 0
          %1283 = vmatpush1.bf16.msra.mxu0 0
          %1284 = vmatprep.subr.bf16.mxu0 0
          %1285 = vmatpush1.bf16.msra.mxu0 0
          %1286 = vmatprep.subr.bf16.mxu0 0
          %1287 = vmatpush1.bf16.msra.mxu0 0
          %1288 = vmatprep.subr.bf16.mxu0 0
          %1289 = vmatpush1.bf16.msra.mxu0 0
          %1290 = vmatprep.subr.bf16.mxu0 0
          %1291 = vmatpush1.bf16.msra.mxu0 0
          %1292 = vmatprep.subr.bf16.mxu0 0
          %1293 = vmatpush1.bf16.msra.mxu0 0
          %1294 = vmatprep.subr.bf16.mxu0 0
          %1295 = vmatpush1.bf16.msra.mxu0 0
          %1296 = vmatprep.subr.bf16.mxu0 0
          %1297 = vmatpush1.bf16.msra.mxu0 0
          %1298 = vmatprep.subr.bf16.mxu0 0
          %1299 = vmatpush1.bf16.msra.mxu0 0
          %1300 = vmatprep.subr.bf16.mxu0 0
          %1301 = vmatpush1.bf16.msra.mxu0 0
          %1302 = vmatprep.subr.bf16.mxu0 0
          %1303 = vmatpush1.bf16.msra.mxu0 0
          %1304 = vmatprep.subr.bf16.mxu0 0
          %1305 = vmatpush1.bf16.msra.mxu0 0
          %1306 = vmatprep.subr.bf16.mxu0 0
          %1307 = vmatpush1.bf16.msra.mxu0 0
          %1308 = vmatprep.subr.bf16.mxu0 0
          %1309 = vmatpush1.bf16.msra.mxu0 0
          %1310 = vmatprep.subr.bf16.mxu0 0
          %1311 = vmatpush1.bf16.msra.mxu0 0
          %1312 = vmatprep.mubr.bf16.mxu0 0
          %1313 = vmatmul.mubr.bf16.gmra.mrb[0].mxu0 %v1275
          %v1314 = vpop.f32.mrb[0].mxu0
          %v1315 = vadd.f32 0.0, %v1314
          %v1316 = vpop.f32.mrb[0].mxu0
          %v1317 = vpop.f32.mrb[0].mxu0
          %v1318 = vpop.f32.mrb[0].mxu0
          %1319 = vdwg.mxu0
          %v1320 = vld [vmem:[#allocation5] sm:$0xff]
          %1322 = vset.pattern.permute.xlu0 0
          %1323 = vperm.xlu0 %1322, %v1255
          %v1324 = vpop.permute.xlu0 %1323
          %v1326 = vmul.f32 %v1324, %v1320
          %1328 = vrot.lane.b32.xlu0 %v1315, 16
          %v1329 = vpop.permute.xlu0 %1328
          %v1331 = vadd.f32 %v1326, %v1329
          %vm1332 = vcmask 195712
          %1333 = vst.msk [vmem:[#allocation5] sm:$0xff] %vm1332, %v1331
          %v1334 = vld [vmem:[#allocation2] sm:$0xf]
          %v1336 = vunpack.c.l.b16 %v1334
          %v1337 = vpack.c.b16 %v1336, %v1336
          %1338 = vrot.lane.b32.xlu0 %v1337, 100
          %v1339 = vpop.permute.xlu0 %1338
          %1340 = vrot.lane.b32.xlu0 %v746, 116
          %v1341 = vpop.permute.xlu0 %1340
          %v1343 = vsel %vm764, %v1339, 0
          %v1346 = vsel %vm764, %v1341, 0
          %1348 = vmatprep.subr.bf16.mxu0 0
          %1349 = vmatpush1.bf16.xpose.msra.mxu0 %v1346
          %1350 = vmatprep.subr.bf16.mxu0 0
          %1351 = vmatpush1.bf16.xpose.msra.mxu0 0
          %1352 = vmatprep.subr.bf16.mxu0 0
          %1353 = vmatpush1.bf16.xpose.msra.mxu0 0
          %1354 = vmatprep.subr.bf16.mxu0 0
          %1355 = vmatpush1.bf16.xpose.msra.mxu0 0
          %1356 = vmatprep.subr.bf16.mxu0 0
          %1357 = vmatpush1.bf16.xpose.msra.mxu0 0
          %1358 = vmatprep.subr.bf16.mxu0 0
          %1359 = vmatpush1.bf16.xpose.msra.mxu0 0
          %1360 = vmatprep.subr.bf16.mxu0 0
          %1361 = vmatpush1.bf16.xpose.msra.mxu0 0
          %1362 = vmatprep.subr.bf16.mxu0 0
          %1363 = vmatpush1.bf16.xpose.msra.mxu0 0
          %1364 = vmatprep.subr.bf16.mxu0 0
          %1365 = vmatpush1.bf16.xpose.msra.mxu0 0
          %1366 = vmatprep.subr.bf16.mxu0 0
          %1367 = vmatpush1.bf16.xpose.msra.mxu0 0
          %1368 = vmatprep.subr.bf16.mxu0 0
          %1369 = vmatpush1.bf16.xpose.msra.mxu0 0
          %1370 = vmatprep.subr.bf16.mxu0 0
          %1371 = vmatpush1.bf16.xpose.msra.mxu0 0
          %1372 = vmatprep.subr.bf16.mxu0 0
          %1373 = vmatpush1.bf16.xpose.msra.mxu0 0
          %1374 = vmatprep.subr.bf16.mxu0 0
          %1375 = vmatpush1.bf16.xpose.msra.mxu0 0
          %1376 = vmatprep.subr.bf16.mxu0 0
          %1377 = vmatpush1.bf16.xpose.msra.mxu0 0
          %1378 = vmatprep.subr.bf16.mxu0 0
          %1379 = vmatpush1.bf16.xpose.msra.mxu0 0
          %1380 = vmatprep.mubr.bf16.mxu0 0
          %1381 = vmatmul.mubr.bf16.gmra.mrb[0].mxu0 %v1343
          %v1382 = vpop.f32.mrb[0].mxu0
          %v1383 = vadd.f32 0.0, %v1382
          %v1384 = vpop.f32.mrb[0].mxu0
          %v1385 = vpop.f32.mrb[0].mxu0
          %v1386 = vpop.f32.mrb[0].mxu0
          %1387 = vdwg.mxu0
          %1388 = vrot.lane.b32.xlu0 %v1337, 116
          %v1389 = vpop.permute.xlu0 %1388
          %1390 = vrot.lane.b32.xlu0 %v734, 116
          %v1391 = vpop.permute.xlu0 %1390
          %v1393 = vsel %vm764, %v1389, 0
          %v1396 = vsel %vm764, %v1391, 0
          %1398 = vmatprep.subr.bf16.mxu0 0
          %1399 = vmatpush1.bf16.xpose.msra.mxu0 %v1396
          %1400 = vmatprep.subr.bf16.mxu0 0
          %1401 = vmatpush1.bf16.xpose.msra.mxu0 0
          %1402 = vmatprep.subr.bf16.mxu0 0
          %1403 = vmatpush1.bf16.xpose.msra.mxu0 0
          %1404 = vmatprep.subr.bf16.mxu0 0
          %1405 = vmatpush1.bf16.xpose.msra.mxu0 0
          %1406 = vmatprep.subr.bf16.mxu0 0
          %1407 = vmatpush1.bf16.xpose.msra.mxu0 0
          %1408 = vmatprep.subr.bf16.mxu0 0
          %1409 = vmatpush1.bf16.xpose.msra.mxu0 0
          %1410 = vmatprep.subr.bf16.mxu0 0
          %1411 = vmatpush1.bf16.xpose.msra.mxu0 0
          %1412 = vmatprep.subr.bf16.mxu0 0
          %1413 = vmatpush1.bf16.xpose.msra.mxu0 0
          %1414 = vmatprep.subr.bf16.mxu0 0
          %1415 = vmatpush1.bf16.xpose.msra.mxu0 0
          %1416 = vmatprep.subr.bf16.mxu0 0
          %1417 = vmatpush1.bf16.xpose.msra.mxu0 0
          %1418 = vmatprep.subr.bf16.mxu0 0
          %1419 = vmatpush1.bf16.xpose.msra.mxu0 0
          %1420 = vmatprep.subr.bf16.mxu0 0
          %1421 = vmatpush1.bf16.xpose.msra.mxu0 0
          %1422 = vmatprep.subr.bf16.mxu0 0
          %1423 = vmatpush1.bf16.xpose.msra.mxu0 0
          %1424 = vmatprep.subr.bf16.mxu0 0
          %1425 = vmatpush1.bf16.xpose.msra.mxu0 0
          %1426 = vmatprep.subr.bf16.mxu0 0
          %1427 = vmatpush1.bf16.xpose.msra.mxu0 0
          %1428 = vmatprep.subr.bf16.mxu0 0
          %1429 = vmatpush1.bf16.xpose.msra.mxu0 0
          %1430 = vmatprep.mubr.bf16.mxu0 0
          %1431 = vmatmul.mubr.bf16.gmra.mrb[0].mxu0 %v1393
          %v1432 = vpop.f32.mrb[0].mxu0
          %v1433 = vadd.f32 %v1383, %v1432
          %v1434 = vpop.f32.mrb[0].mxu0
          %v1435 = vpop.f32.mrb[0].mxu0
          %v1436 = vpop.f32.mrb[0].mxu0
          %1437 = vdwg.mxu0
          %v1438 = vsel %vm757, %v1433, -inf
          %s1439 = scalar_lea.vmem [#allocation3], 24
          %v1440 = vld [vmem:[%s1439] sm:$0xff]
          %s1441 = scalar_lea.vmem [#allocation4], 24
          %v1442 = vld [vmem:[%s1441] sm:$0xff]
          %v1443 = vsel %vm860, %v1438, -inf
          %1444 = vmax.xlane.f32.xlu0 %v1443
          %v1445 = vpop.xlane.xlu0 %1444
          %v1446 = vmax.f32 %v1440, %v1445
          %v1447 = vsub.f32 %v1440, %v1446
          %v1448 = vmul.f32 %v1447, 1.442695
          %v1449 = vpow.pop %v1448
          %1451 = vset.pattern.permute.xlu0 0
          %1452 = vperm.xlu0 %1451, %v1446
          %v1453 = vpop.permute.xlu0 %1452
          %v1455 = vsub.f32 %v1438, %v1453
          %v1456 = vmul.f32 %v1455, 1.442695
          %v1457 = vpow.pop %v1456
          %v1458 = vmul.f32 %v1449, %v1442
          %v1459 = vsel %vm860, %v1457, 0.0
          %1460 = vadd.xlane.f32.xlu0 %v1459
          %v1461 = vpop.xlane.xlu0 %1460
          %v1462 = vadd.f32 %v1458, %v1461
          %1463 = vst.msk [vmem:[%s1441] sm:$0xff] %vm881, %v1462
          %1464 = vst.msk [vmem:[%s1439] sm:$0xff] %vm881, %v1446
          %v1465 = vpack.c.bf16 %v1457, %v1457
          %1466 = vrot.lane.b32.xlu0 %v722, 72
          %v1467 = vpop.permute.xlu0 %1466
          %v1469 = vsel %vm860, %v1465, 0
          %v1472 = vsel %vm891, %v1467, 0
          %1474 = vmatprep.subr.bf16.mxu0 0
          %1475 = vmatpush1.bf16.msra.mxu0 %v1472
          %1476 = vmatprep.subr.bf16.mxu0 0
          %1477 = vmatpush1.bf16.msra.mxu0 0
          %1478 = vmatprep.subr.bf16.mxu0 0
          %1479 = vmatpush1.bf16.msra.mxu0 0
          %1480 = vmatprep.subr.bf16.mxu0 0
          %1481 = vmatpush1.bf16.msra.mxu0 0
          %1482 = vmatprep.subr.bf16.mxu0 0
          %1483 = vmatpush1.bf16.msra.mxu0 0
          %1484 = vmatprep.subr.bf16.mxu0 0
          %1485 = vmatpush1.bf16.msra.mxu0 0
          %1486 = vmatprep.subr.bf16.mxu0 0
          %1487 = vmatpush1.bf16.msra.mxu0 0
          %1488 = vmatprep.subr.bf16.mxu0 0
          %1489 = vmatpush1.bf16.msra.mxu0 0
          %1490 = vmatprep.subr.bf16.mxu0 0
          %1491 = vmatpush1.bf16.msra.mxu0 0
          %1492 = vmatprep.subr.bf16.mxu0 0
          %1493 = vmatpush1.bf16.msra.mxu0 0
          %1494 = vmatprep.subr.bf16.mxu0 0
          %1495 = vmatpush1.bf16.msra.mxu0 0
          %1496 = vmatprep.subr.bf16.mxu0 0
          %1497 = vmatpush1.bf16.msra.mxu0 0
          %1498 = vmatprep.subr.bf16.mxu0 0
          %1499 = vmatpush1.bf16.msra.mxu0 0
          %1500 = vmatprep.subr.bf16.mxu0 0
          %1501 = vmatpush1.bf16.msra.mxu0 0
          %1502 = vmatprep.subr.bf16.mxu0 0
          %1503 = vmatpush1.bf16.msra.mxu0 0
          %1504 = vmatprep.subr.bf16.mxu0 0
          %1505 = vmatpush1.bf16.msra.mxu0 0
          %1506 = vmatprep.mubr.bf16.mxu0 0
          %1507 = vmatmul.mubr.bf16.gmra.mrb[0].mxu0 %v1469
          %v1508 = vpop.f32.mrb[0].mxu0
          %v1509 = vadd.f32 0.0, %v1508
          %v1510 = vpop.f32.mrb[0].mxu0
          %v1511 = vpop.f32.mrb[0].mxu0
          %v1512 = vpop.f32.mrb[0].mxu0
          %1513 = vdwg.mxu0
          %v1514 = vld [vmem:[#allocation5] sm:$0xff]
          %1516 = vset.pattern.permute.xlu0 0
          %1517 = vperm.xlu0 %1516, %v1449
          %v1518 = vpop.permute.xlu0 %1517
          %v1520 = vmul.f32 %v1518, %v1514
          %1522 = vrot.lane.b32.xlu0 %v1509, 24
          %v1523 = vpop.permute.xlu0 %1522
          %v1525 = vadd.f32 %v1520, %v1523
          %vm1526 = vcmask 261312
          %1527 = vst.msk [vmem:[#allocation5] sm:$0xff] %vm1526, %v1525
        $region96: #{tpu_custom_call.1} parent=59 // pred_fallthru
          _
        // Predicated region
        $region97: #{tpu_custom_call.1} parent=59 // pred_check
          %p1528 = pneg %p544
        $region98: #{tpu_custom_call.1} parent=59 // pred_check_branch
          %1530 = sbr.rel (%p1528) target = $region100
        $region99: #{tpu_custom_call.1} parent=59 // pred_region
          %v1531 = vld [vmem:[#allocation4] sm:$0xff]
          %v1532 = vrcp.pop %v1531
          %v1533 = vld [vmem:[#allocation5] sm:$0xff]
          %1535 = vset.pattern.permute.xlu0 0
          %1536 = vperm.xlu0 %1535, %v1532
          %v1537 = vpop.permute.xlu0 %1536
          %v1539 = vmul.f32 %v1533, %v1537
          %v1540 = vpack.c.bf16 %v1539, %v1539
          %vm1541 = vcmask 60416
          %1542 = vst.msk [vmem:[#allocation2] sm:$0xf] %vm1541, %v1540
          %s1543 = scalar_lea.vmem [#allocation4], 8
          %v1544 = vld [vmem:[%s1543] sm:$0xff]
          %v1545 = vrcp.pop %v1544
          %v1546 = vld [vmem:[#allocation5] sm:$0xff]
          %1548 = vset.pattern.permute.xlu0 0
          %1549 = vperm.xlu0 %1548, %v1545
          %v1550 = vpop.permute.xlu0 %1549
          %v1552 = vmul.f32 %v1546, %v1550
          %v1553 = vpack.c.bf16 %v1552, %v1552
          %vm1554 = vcmask 126016
          %1555 = vst.msk [vmem:[#allocation2] sm:$0xf] %vm1554, %v1553
          %s1556 = scalar_lea.vmem [#allocation4], 16
          %v1557 = vld [vmem:[%s1556] sm:$0xff]
          %v1558 = vrcp.pop %v1557
          %v1559 = vld [vmem:[#allocation5] sm:$0xff]
          %1561 = vset.pattern.permute.xlu0 0
          %1562 = vperm.xlu0 %1561, %v1558
          %v1563 = vpop.permute.xlu0 %1562
          %v1565 = vmul.f32 %v1559, %v1563
          %v1566 = vpack.c.bf16 %v1565, %v1565
          %vm1567 = vcmask 191616
          %1568 = vst.msk [vmem:[#allocation2] sm:$0xf] %vm1567, %v1566
          %s1569 = scalar_lea.vmem [#allocation4], 24
          %v1570 = vld [vmem:[%s1569] sm:$0xff]
          %v1571 = vrcp.pop %v1570
          %v1572 = vld [vmem:[#allocation5] sm:$0xff]
          %1574 = vset.pattern.permute.xlu0 0
          %1575 = vperm.xlu0 %1574, %v1571
          %v1576 = vpop.permute.xlu0 %1575
          %v1578 = vmul.f32 %v1572, %v1576
          %v1579 = vpack.c.bf16 %v1578, %v1578
          %vm1580 = vcmask 257216
          %1581 = vst.msk [vmem:[#allocation2] sm:$0xf] %vm1580, %v1579
          %v1582 = vld [vmem:[#allocation2] sm:$0xf]
          %v1583 = vld [vmem:[%s8] sm:$0xf]
          %v1584 = vld [vmem:[%s8 + $0x4] sm:$0xf]
          %v1585 = vld [vmem:[%s8 + $0x8] sm:$0xf]
          %v1586 = vld [vmem:[%s8 + $0xc] sm:$0xf]
          %v1587 = vld [vmem:[%s9] sm:$0x1]
          %v1589 = vlaneseq
          %v1590 = vshrl.u32 %v1589, 7
          %v1591 = vsub.s32 0, %v1590
          %v1592 = vrot.slane %v1587, %v1591
          %v1598 = vunpack.c.l.b16 %v1583
          %v1599 = vunpack.c.l.b16 %v1584
          %v1600 = vunpack.c.l.b16 %v1585
          %v1601 = vunpack.c.l.b16 %v1586
          %v1602 = vpack.c.b16 %v1599, %v1598
          %v1603 = vpack.c.b16 %v1601, %v1600
          %vm1606 = vcmask 261120
          %v1608 = vsel %vm1606, %v1582, 0
          %1610 = vmatprep.subr.bf16.mxu0 0
          %1611 = vmatpush1.bf16.msra.mxu0 %v1602
          %1612 = vmatprep.subr.bf16.mxu0 0
          %1613 = vmatpush1.bf16.msra.mxu0 %v1603
          %1614 = vmatprep.subr.bf16.mxu0 0
          %1615 = vmatpush1.bf16.msra.mxu0 0
          %1616 = vmatprep.subr.bf16.mxu0 0
          %1617 = vmatpush1.bf16.msra.mxu0 0
          %1618 = vmatprep.subr.bf16.mxu0 0
          %1619 = vmatpush1.bf16.msra.mxu0 0
          %1620 = vmatprep.subr.bf16.mxu0 0
          %1621 = vmatpush1.bf16.msra.mxu0 0
          %1622 = vmatprep.subr.bf16.mxu0 0
          %1623 = vmatpush1.bf16.msra.mxu0 0
          %1624 = vmatprep.subr.bf16.mxu0 0
          %1625 = vmatpush1.bf16.msra.mxu0 0
          %1626 = vmatprep.subr.bf16.mxu0 0
          %1627 = vmatpush1.bf16.msra.mxu0 0
          %1628 = vmatprep.subr.bf16.mxu0 0
          %1629 = vmatpush1.bf16.msra.mxu0 0
          %1630 = vmatprep.subr.bf16.mxu0 0
          %1631 = vmatpush1.bf16.msra.mxu0 0
          %1632 = vmatprep.subr.bf16.mxu0 0
          %1633 = vmatpush1.bf16.msra.mxu0 0
          %1634 = vmatprep.subr.bf16.mxu0 0
          %1635 = vmatpush1.bf16.msra.mxu0 0
          %1636 = vmatprep.subr.bf16.mxu0 0
          %1637 = vmatpush1.bf16.msra.mxu0 0
          %1638 = vmatprep.subr.bf16.mxu0 0
          %1639 = vmatpush1.bf16.msra.mxu0 0
          %1640 = vmatprep.subr.bf16.mxu0 0
          %1641 = vmatpush1.bf16.msra.mxu0 0
          %1642 = vmatprep.mubr.bf16.mxu0 0
          %1643 = vmatmul.mubr.bf16.gmra.mrb[0].mxu0 %v1608
          %v1644 = vpop.f32.mrb[0].mxu0
          %v1645 = vadd.f32 %v1592, %v1644
          %v1646 = vpop.f32.mrb[0].mxu0
          %v1647 = vpop.f32.mrb[0].mxu0
          %v1648 = vpop.f32.mrb[0].mxu0
          %1649 = vdwg.mxu0
          %v1650 = vpack.c.bf16 %v1645, %v1645
          %vm1651 = vcmask 257024
          %1652 = vst.msk [vmem:[%s538] sm:$0xf] %vm1651, %v1650
        $region100: #{tpu_custom_call.1} parent=59 // pred_fallthru
          _
        %s1653 = sand.u32 %s305, 1
        %s1654 = scalar_lea.sflag [#allocation8], %s1653
        %s1655 = sand.u32 %s305, 1
        %s1656 = smul.addr %s1655, 4
        %s1657 = scalar_lea.vmem [#allocation18], %s1656
        // Predicated region
        $region101: #{tpu_custom_call.1} parent=59 // pred_check
          %p1658 = pneg %p315
        $region102: #{tpu_custom_call.1} parent=59 // pred_check_branch
          %1660 = sbr.rel (%p1658) target = $region104
        $region103: #{tpu_custom_call.1} parent=59 // pred_region
          %s1662 = ssub.s32 64, 64
          %1663 = vsyncadd %s1654, %s1662
          %s1664 = sadd.s32 %s38, %s37
          %s1665 = smul.addr %s1664, 64
          %s1666 = scalar_lea.hbm %s10, %s1665
          %s1668 = sshll.u32 %s1657, 4
          %s1669 = int_to_ptr.vmem [resolvable:$true] %s1668
          %1671 = dma.vmem_to_hbm [thread:$0]  %s1669, 64, %s1666, %s1654
        $region104: #{tpu_custom_call.1} parent=59 // pred_fallthru
          _
      $region60: #{tpu_custom_call.1} parent=5 // pred_fallthru
        _
      %p1672 = scmp.le.s32.totalorder 2, %s27
      // Predicated region
      $region105: #{tpu_custom_call.1} parent=5 // pred_check
        %p1673 = pneg %p1672
      $region106: #{tpu_custom_call.1} parent=5 // pred_check_branch
        %1675 = sbr.rel (%p1673) target = $region108
      $region107: #{tpu_custom_call.1} parent=5 // pred_region
        %s1676 = ssub.s32 %s27, 2
        // Predicated region
        $region109: #{tpu_custom_call.1} parent=107 // pred_check
          %p1677 = pneg %p321
        $region110: #{tpu_custom_call.1} parent=107 // pred_check_branch
          %1679 = sbr.rel (%p1677) target = $region112
        $region111: #{tpu_custom_call.1} parent=107 // pred_region
          %s1680 = sand.u32 %s306, 1
          %s1681 = scalar_lea.sflag [#allocation8], %s1680
          %s1682 = sand.u32 %s306, 1
          %s1683 = smul.addr %s1682, 4
          %s1684 = scalar_lea.vmem [#allocation18], %s1683
          %1685 = dma.done %s1681, 64
        $region112: #{tpu_custom_call.1} parent=107 // pred_fallthru
          _
      $region108: #{tpu_custom_call.1} parent=5 // pred_fallthru
        _
    $region6: #{tpu_custom_call.1} parent=1 // loop_footer
      %s31 = sadd.s32 1, %s27
    $region7: #{tpu_custom_call.1} parent=1 // loop_footer_branch
      %26 = sbr.rel target = $region3
    $region8: #{tpu_custom_call.1} parent=1 // loop_exit
      _
    %1686 = vsyncpa [#allocation7], 1
    %s1687 = scalar_lea.sflag [#allocation7], 1
    %1688 = vsyncpa %s1687, 1
    %1689 = vsyncpa [#allocation10], 1
    %s1690 = scalar_lea.sflag [#allocation10], 1
    %1691 = vsyncpa %s1690, 1
    %1692 = vsyncpa [#allocation13], 1
    %1693 = vsyncpa [#allocation16], 1
    %1694 = vsyncpa [#allocation8], 1
    %s1695 = scalar_lea.sflag [#allocation8], 1
    %1696 = vsyncpa %s1695, 1

</llo_original>
